<compile_context>
chip_gen: v5e
topology: v5e:2x2
jax: 0.10.0
libtpu: 0.0.40
codegen_flags: <defaults>
</compile_context>

<pallas_src>
import functools
import math

import jax
import jax.numpy as jnp
from jax import lax
from jax.experimental import pallas as pl
from jax.experimental.pallas import tpu as pltpu

NEG_INF = -1e9

# ---------------- model dims (small, synthetic) ----------------
BATCH = 2
SRC_LEN = 16        # ink sequence length
INPUT_DIM = 8       # ink feature dim (x, y, pen, ...)
TGT_LEN = 8         # target token length
D_MODEL = 32
NHEAD = 4
D_HEAD = D_MODEL // NHEAD
FFN_DIM = 64
VOCAB = 64
VOCAB_PAD = 128     # pad vocab projection to a full 128-lane store; sliced back in wrapper


# ---------------- the single fused Pallas kernel ----------------
def _hmer_kernel(
    # SMEM scalars
    tlen_ref, slen_ref,
    # activations
    xdec_ref, src_ref,
    # encoder MLP
    enc_w1_ref, enc_b1_ref, enc_w2_ref, enc_b2_ref,
    # self-attention (fused QKV) + LN1
    sa_wqkv_ref, sa_bqkv_ref, sa_wo_ref, sa_bo_ref, ln1_g_ref, ln1_b_ref,
    # cross-attention (fused KV) + LN2
    ca_wq_ref, ca_bq_ref, ca_wkv_ref, ca_bkv_ref, ca_wo_ref, ca_bo_ref,
    ln2_g_ref, ln2_b_ref,
    # feed-forward + LN3
    ff_w1_ref, ff_b1_ref, ff_w2_ref, ff_b2_ref, ln3_g_ref, ln3_b_ref,
    # lane-padded vocab projection
    out_w_ref, out_b_ref,
    # output
    o_ref,
    # scratch
    attn_buf,
    *, batch, src_len, tgt_len, d_model, nhead, d_head,
):
    f32 = jnp.float32
    scale = 1.0 / math.sqrt(d_head)

    def matmul(a, b):
        return jnp.dot(a, b, preferred_element_type=f32)

    def layernorm(y, g_ref, b_ref):
        mu = jnp.mean(y, axis=-1, keepdims=True)
        var = jnp.mean((y - mu) ** 2, axis=-1, keepdims=True)
        return (y - mu) * lax.rsqrt(var + 1e-5) * g_ref[...] + b_ref[...]

    def softmax_rows(s):
        s = s - jnp.max(s, axis=-1, keepdims=True)
        p = jnp.exp(s)
        return p * pl.reciprocal(jnp.sum(p, axis=-1, keepdims=True), approx=True)

    # ----- encoder: pointwise MLP over ink features -> memory [B*S, D] -----
    h_enc = jnp.maximum(matmul(src_ref[...], enc_w1_ref[...]) + enc_b1_ref[...], 0.0)
    mem = matmul(h_enc, enc_w2_ref[...]) + enc_b2_ref[...]

    x = xdec_ref[...]                                           # [B*T, D]

    # ----- masked self-attention (causal + tgt key-padding from target_lengths) -----
    qkv = matmul(x, sa_wqkv_ref[...]) + sa_bqkv_ref[...]        # [B*T, 3D]
    wo = sa_wo_ref[...]
    row_t = lax.broadcasted_iota(jnp.int32, (tgt_len, tgt_len), 0)
    col_t = lax.broadcasted_iota(jnp.int32, (tgt_len, tgt_len), 1)
    causal = col_t > row_t
    for b in range(batch):
        tl = tlen_ref[b]
        bias = jnp.where(causal | (col_t >= tl), NEG_INF, 0.0)  # [T, T]
        r0 = b * tgt_len
        acc = jnp.zeros((tgt_len, d_model), f32)
        for hh in range(nhead):
            c0 = hh * d_head
            qh = qkv[r0:r0 + tgt_len, c0:c0 + d_head]
            kh = qkv[r0:r0 + tgt_len, d_model + c0:d_model + c0 + d_head]
            vh = qkv[r0:r0 + tgt_len, 2 * d_model + c0:2 * d_model + c0 + d_head]
            p = softmax_rows(matmul(qh, kh.T) * scale + bias)
            # head-merge folded into the output projection: sum_h (p @ v_h) @ Wo[h]
            acc = acc + matmul(matmul(p, vh), wo[c0:c0 + d_head, :])
        attn_buf[r0:r0 + tgt_len, :] = acc
    x = layernorm(x + attn_buf[...] + sa_bo_ref[...], ln1_g_ref, ln1_b_ref)

    # ----- cross-attention over encoder memory (memory_key_padding from input_lengths) -----
    q = matmul(x, ca_wq_ref[...]) + ca_bq_ref[...]              # [B*T, D]
    kv = matmul(mem, ca_wkv_ref[...]) + ca_bkv_ref[...]         # [B*S, 2D]
    wo = ca_wo_ref[...]
    col_s = lax.broadcasted_iota(jnp.int32, (tgt_len, src_len), 1)
    for b in range(batch):
        sl = slen_ref[b]
        bias = jnp.where(col_s >= sl, NEG_INF, 0.0)             # [T, S]
        r0 = b * tgt_len
        s0 = b * src_len
        acc = jnp.zeros((tgt_len, d_model), f32)
        for hh in range(nhead):
            c0 = hh * d_head
            qh = q[r0:r0 + tgt_len, c0:c0 + d_head]
            kh = kv[s0:s0 + src_len, c0:c0 + d_head]
            vh = kv[s0:s0 + src_len, d_model + c0:d_model + c0 + d_head]
            p = softmax_rows(matmul(qh, kh.T) * scale + bias)
            acc = acc + matmul(matmul(p, vh), wo[c0:c0 + d_head, :])
        attn_buf[r0:r0 + tgt_len, :] = acc
    x = layernorm(x + attn_buf[...] + ca_bo_ref[...], ln2_g_ref, ln2_b_ref)

    # ----- feed-forward -----
    hdn = jnp.maximum(matmul(x, ff_w1_ref[...]) + ff_b1_ref[...], 0.0)
    x = layernorm(x + matmul(hdn, ff_w2_ref[...]) + ff_b2_ref[...], ln3_g_ref, ln3_b_ref)

    # ----- vocab projection (lane-padded to 128 -> unmasked stores) -----
    o_ref[...] = (matmul(x, out_w_ref[...]) + out_b_ref[...]).astype(o_ref.dtype)


# ---------------- BlockSpec helpers (no grid -> full-array blocks) ----------------
def _vmem_spec(shape):
    return pl.BlockSpec(shape, lambda *args, n=len(shape): (0,) * n)


def _smem_spec(shape):
    return pl.BlockSpec(shape, lambda *args, n=len(shape): (0,) * n,
                        memory_space=pltpu.MemorySpace.SMEM)


# ---------------- plain-JAX glue ----------------
def sinusoidal_pos(length, dim):
    pos = jnp.arange(length, dtype=jnp.float32)[:, None]
    i = jnp.arange(dim // 2, dtype=jnp.float32)[None, :]
    angle = pos / jnp.power(10000.0, 2.0 * i / dim)
    pe = jnp.zeros((length, dim), jnp.float32)
    pe = pe.at[:, 0::2].set(jnp.sin(angle))
    pe = pe.at[:, 1::2].set(jnp.cos(angle))
    return pe


# ---------------- HMERModel.forward ----------------
def hmer_forward(packed, input_seq, target_seq, input_lengths, target_lengths):
    """
    input_seq:  [B, S, INPUT_DIM] float32 ink features
    target_seq: [B, T] int32 token ids
    returns logits [B, T, VOCAB]
    """
    B, S, _ = input_seq.shape
    T = target_seq.shape[1]
    D = D_MODEL

    # TODO(synk): token-embedding lookup is a gather; done with jnp.take in the wrapper
    # (not in-kernel). Positional encoding add is fused into the same XLA op chain.
    xdec = jnp.take(packed["embed"], target_seq, axis=0) * math.sqrt(D)
    xdec = (xdec + sinusoidal_pos(T, D)[None, :, :]).reshape(B * T, D)
    src2 = input_seq.reshape(B * S, INPUT_DIM)

    tlen = target_lengths.astype(jnp.int32)
    slen = input_lengths.astype(jnp.int32)

    vmem_ops = [
        xdec, src2,
        packed["enc_w1"], packed["enc_b1"], packed["enc_w2"], packed["enc_b2"],
        packed["sa_wqkv"], packed["sa_bqkv"], packed["sa_wo"], packed["sa_bo"],
        packed["ln1_g"], packed["ln1_b"],
        packed["ca_wq"], packed["ca_bq"], packed["ca_wkv"], packed["ca_bkv"],
        packed["ca_wo"], packed["ca_bo"], packed["ln2_g"], packed["ln2_b"],
        packed["ff_w1"], packed["ff_b1"], packed["ff_w2"], packed["ff_b2"],
        packed["ln3_g"], packed["ln3_b"],
        packed["out_w"], packed["out_b"],
    ]
    in_specs = [_smem_spec((B,)), _smem_spec((B,))] + [_vmem_spec(a.shape) for a in vmem_ops]

    kern = functools.partial(
        _hmer_kernel,
        batch=B, src_len=S, tgt_len=T,
        d_model=D, nhead=NHEAD, d_head=D_HEAD,
    )

    logits_pad = pl.pallas_call(
        kern,
        out_shape=jax.ShapeDtypeStruct((B * T, VOCAB_PAD), jnp.float32),
        in_specs=in_specs,
        out_specs=_vmem_spec((B * T, VOCAB_PAD)),
        scratch_shapes=[pltpu.VMEM((B * T, D), jnp.float32)],
    )(tlen, slen, *vmem_ops)

    return logits_pad[:, :VOCAB].reshape(B, T, VOCAB)


# ---------------- parameter init (same layout as the original module) ----------------
def init_params(key):
    def dense(k, din, dout, scale=0.02):
        kw, _ = jax.random.split(k)
        return (scale * jax.random.normal(kw, (din, dout), jnp.float32),
                jnp.zeros((dout,), jnp.float32))

    keys = jax.random.split(key, 16)
    p = {}
    p["enc_w1"], p["enc_b1"] = dense(keys[0], INPUT_DIM, D_MODEL)
    p["enc_w2"], p["enc_b2"] = dense(keys[1], D_MODEL, D_MODEL)
    p["embed"] = 0.02 * jax.random.normal(keys[2], (VOCAB, D_MODEL), jnp.float32)
    p["sa_wq"], p["sa_bq"] = dense(keys[3], D_MODEL, D_MODEL)
    p["sa_wk"], p["sa_bk"] = dense(keys[4], D_MODEL, D_MODEL)
    p["sa_wv"], p["sa_bv"] = dense(keys[5], D_MODEL, D_MODEL)
    p["sa_wo"], p["sa_bo"] = dense(keys[6], D_MODEL, D_MODEL)
    p["ca_wq"], p["ca_bq"] = dense(keys[7], D_MODEL, D_MODEL)
    p["ca_wk"], p["ca_bk"] = dense(keys[8], D_MODEL, D_MODEL)
    p["ca_wv"], p["ca_bv"] = dense(keys[9], D_MODEL, D_MODEL)
    p["ca_wo"], p["ca_bo"] = dense(keys[10], D_MODEL, D_MODEL)
    p["ff_w1"], p["ff_b1"] = dense(keys[11], D_MODEL, FFN_DIM)
    p["ff_w2"], p["ff_b2"] = dense(keys[12], FFN_DIM, D_MODEL)
    p["out_w"], p["out_b"] = dense(keys[13], D_MODEL, VOCAB)
    for n in ["ln1", "ln2", "ln3"]:
        p[f"{n}_g"] = jnp.ones((D_MODEL,), jnp.float32)
        p[f"{n}_b"] = jnp.zeros((D_MODEL,), jnp.float32)
    return p


def pack_params(p):
    """Pack/concat weights for the fused kernel (done once, outside jit)."""
    def row(b):
        return b.reshape(1, -1)

    return {
        "embed": p["embed"],
        "enc_w1": p["enc_w1"], "enc_b1": row(p["enc_b1"]),
        "enc_w2": p["enc_w2"], "enc_b2": row(p["enc_b2"]),
        "sa_wqkv": jnp.concatenate([p["sa_wq"], p["sa_wk"], p["sa_wv"]], axis=1),
        "sa_bqkv": row(jnp.concatenate([p["sa_bq"], p["sa_bk"], p["sa_bv"]])),
        "sa_wo": p["sa_wo"], "sa_bo": row(p["sa_bo"]),
        "ln1_g": row(p["ln1_g"]), "ln1_b": row(p["ln1_b"]),
        "ca_wq": p["ca_wq"], "ca_bq": row(p["ca_bq"]),
        "ca_wkv": jnp.concatenate([p["ca_wk"], p["ca_wv"]], axis=1),
        "ca_bkv": row(jnp.concatenate([p["ca_bk"], p["ca_bv"]])),
        "ca_wo": p["ca_wo"], "ca_bo": row(p["ca_bo"]),
        "ln2_g": row(p["ln2_g"]), "ln2_b": row(p["ln2_b"]),
        "ff_w1": p["ff_w1"], "ff_b1": row(p["ff_b1"]),
        "ff_w2": p["ff_w2"], "ff_b2": row(p["ff_b2"]),
        "ln3_g": row(p["ln3_g"]), "ln3_b": row(p["ln3_b"]),
        "out_w": jnp.pad(p["out_w"], ((0, 0), (0, VOCAB_PAD - VOCAB))),
        "out_b": row(jnp.pad(p["out_b"], (0, VOCAB_PAD - VOCAB))),
    }


if __name__ == "__main__":
    key = jax.random.PRNGKey(0)
    k_in, k_tgt, k_par = jax.random.split(key, 3)

    input_seq = jax.random.normal(k_in, (BATCH, SRC_LEN, INPUT_DIM), jnp.float32)
    target_seq = jax.random.randint(k_tgt, (BATCH, TGT_LEN), 0, VOCAB, jnp.int32)
    target_seq = target_seq.at[:, 0].set(1)  # SOS token id = 1
    input_lengths = jnp.array([SRC_LEN, 12], jnp.int32)
    target_lengths = jnp.array([TGT_LEN, 6], jnp.int32)

    params = init_params(k_par)
    packed = pack_params(params)

    logits = jax.jit(hmer_forward)(
        packed, input_seq, target_seq, input_lengths, target_lengths
    )
    jax.block_until_ready(logits)
    assert logits.shape == (BATCH, TGT_LEN, VOCAB)
    assert bool(jnp.all(jnp.isfinite(logits)))
    print("KERNEL_OK")
</pallas_src>

<mosaic_0001>
module attributes {stable_mosaic.version = 11 : i64} {
  func.func @_hmer_kernel(%arg0: memref<2xi32, #tpu.memory_space<smem>>, %arg1: memref<2xi32, #tpu.memory_space<smem>>, %arg2: memref<16x32xf32, #tpu.memory_space<vmem>>, %arg3: memref<32x8xf32, #tpu.memory_space<vmem>>, %arg4: memref<8x32xf32, #tpu.memory_space<vmem>>, %arg5: memref<1x32xf32, #tpu.memory_space<vmem>>, %arg6: memref<32x32xf32, #tpu.memory_space<vmem>>, %arg7: memref<1x32xf32, #tpu.memory_space<vmem>>, %arg8: memref<32x96xf32, #tpu.memory_space<vmem>>, %arg9: memref<1x96xf32, #tpu.memory_space<vmem>>, %arg10: memref<32x32xf32, #tpu.memory_space<vmem>>, %arg11: memref<1x32xf32, #tpu.memory_space<vmem>>, %arg12: memref<1x32xf32, #tpu.memory_space<vmem>>, %arg13: memref<1x32xf32, #tpu.memory_space<vmem>>, %arg14: memref<32x32xf32, #tpu.memory_space<vmem>>, %arg15: memref<1x32xf32, #tpu.memory_space<vmem>>, %arg16: memref<32x64xf32, #tpu.memory_space<vmem>>, %arg17: memref<1x64xf32, #tpu.memory_space<vmem>>, %arg18: memref<32x32xf32, #tpu.memory_space<vmem>>, %arg19: memref<1x32xf32, #tpu.memory_space<vmem>>, %arg20: memref<1x32xf32, #tpu.memory_space<vmem>>, %arg21: memref<1x32xf32, #tpu.memory_space<vmem>>, %arg22: memref<32x64xf32, #tpu.memory_space<vmem>>, %arg23: memref<1x64xf32, #tpu.memory_space<vmem>>, %arg24: memref<64x32xf32, #tpu.memory_space<vmem>>, %arg25: memref<1x32xf32, #tpu.memory_space<vmem>>, %arg26: memref<1x32xf32, #tpu.memory_space<vmem>>, %arg27: memref<1x32xf32, #tpu.memory_space<vmem>>, %arg28: memref<32x128xf32, #tpu.memory_space<vmem>>, %arg29: memref<1x128xf32, #tpu.memory_space<vmem>>, %arg30: memref<16x128xf32, #tpu.memory_space<vmem>>, %arg31: memref<16x32xf32, #tpu.memory_space<vmem>>) attributes {dimension_semantics = [], scalar_prefetch = 0 : i64, scratch_operands = 1 : i64, tpu.core_type = #tpu.core_type<tc>} {
    %c0 = arith.constant 0 : index
    %c0_0 = arith.constant 0 : index
    %0 = vector.load %arg3[%c0, %c0_0] : memref<32x8xf32, #tpu.memory_space<vmem>>, vector<32x8xf32>
    %c0_1 = arith.constant 0 : index
    %c0_2 = arith.constant 0 : index
    %1 = vector.load %arg4[%c0_1, %c0_2] : memref<8x32xf32, #tpu.memory_space<vmem>>, vector<8x32xf32>
    %cst = arith.constant dense<0.000000e+00> : vector<32x32xf32>
    %2 = tpu.matmul %0, %1, %cst {dimension_numbers = #tpu.dot_dimension_numbers<[1], [0], [0], [1], [0, 0, 1, 1], [], []>} : vector<32x8xf32>, vector<8x32xf32>, vector<32x32xf32> -> vector<32x32xf32>
    %c0_3 = arith.constant 0 : index
    %c0_4 = arith.constant 0 : index
    %3 = vector.load %arg5[%c0_3, %c0_4] : memref<1x32xf32, #tpu.memory_space<vmem>>, vector<1x32xf32>
    %4 = vector.broadcast %3 : vector<1x32xf32> to vector<32x32xf32>
    %5 = arith.addf %2, %4 : vector<32x32xf32>
    %cst_5 = arith.constant 0.000000e+00 : f32
    %6 = vector.broadcast %cst_5 : f32 to vector<32x32xf32>
    %7 = arith.maximumf %5, %6 : vector<32x32xf32>
    %c0_6 = arith.constant 0 : index
    %c0_7 = arith.constant 0 : index
    %8 = vector.load %arg6[%c0_6, %c0_7] : memref<32x32xf32, #tpu.memory_space<vmem>>, vector<32x32xf32>
    %cst_8 = arith.constant dense<0.000000e+00> : vector<32x32xf32>
    %9 = tpu.matmul %7, %8, %cst_8 {dimension_numbers = #tpu.dot_dimension_numbers<[1], [0], [0], [1], [0, 0, 1, 1], [], []>} : vector<32x32xf32>, vector<32x32xf32>, vector<32x32xf32> -> vector<32x32xf32>
    %c0_9 = arith.constant 0 : index
    %c0_10 = arith.constant 0 : index
    %10 = vector.load %arg7[%c0_9, %c0_10] : memref<1x32xf32, #tpu.memory_space<vmem>>, vector<1x32xf32>
    %11 = vector.broadcast %10 : vector<1x32xf32> to vector<32x32xf32>
    %12 = arith.addf %9, %11 : vector<32x32xf32>
    %c0_11 = arith.constant 0 : index
    %c0_12 = arith.constant 0 : index
    %13 = vector.load %arg2[%c0_11, %c0_12] : memref<16x32xf32, #tpu.memory_space<vmem>>, vector<16x32xf32>
    %c0_13 = arith.constant 0 : index
    %c0_14 = arith.constant 0 : index
    %14 = vector.load %arg8[%c0_13, %c0_14] : memref<32x96xf32, #tpu.memory_space<vmem>>, vector<32x96xf32>
    %cst_15 = arith.constant dense<0.000000e+00> : vector<16x96xf32>
    %15 = tpu.matmul %13, %14, %cst_15 {dimension_numbers = #tpu.dot_dimension_numbers<[1], [0], [0], [1], [0, 0, 1, 1], [], []>} : vector<16x32xf32>, vector<32x96xf32>, vector<16x96xf32> -> vector<16x96xf32>
    %c0_16 = arith.constant 0 : index
    %c0_17 = arith.constant 0 : index
    %16 = vector.load %arg9[%c0_16, %c0_17] : memref<1x96xf32, #tpu.memory_space<vmem>>, vector<1x96xf32>
    %17 = vector.broadcast %16 : vector<1x96xf32> to vector<16x96xf32>
    %18 = arith.addf %15, %17 : vector<16x96xf32>
    %c0_18 = arith.constant 0 : index
    %c0_19 = arith.constant 0 : index
    %19 = vector.load %arg10[%c0_18, %c0_19] : memref<32x32xf32, #tpu.memory_space<vmem>>, vector<32x32xf32>
    %20 = tpu.iota {dimensions = array<i32: 0>} : vector<8x8xi32>
    %21 = tpu.iota {dimensions = array<i32: 1>} : vector<8x8xi32>
    %22 = arith.cmpi sgt, %21, %20 : vector<8x8xi32>
    %c0_20 = arith.constant 0 : index
    %23 = memref.load %arg0[%c0_20] : memref<2xi32, #tpu.memory_space<smem>>
    %24 = vector.broadcast %23 : i32 to vector<8x8xi32>
    %25 = arith.cmpi sge, %21, %24 : vector<8x8xi32>
    %26 = arith.ori %22, %25 : vector<8x8xi1>
    %cst_21 = arith.constant -1.000000e+09 : f32
    %cst_22 = arith.constant 0.000000e+00 : f32
    %27 = vector.broadcast %cst_21 : f32 to vector<8x8xf32>
    %28 = vector.broadcast %cst_22 : f32 to vector<8x8xf32>
    %29 = arith.select %26, %27, %28 : vector<8x8xi1>, vector<8x8xf32>
    %cst_23 = arith.constant 0.000000e+00 : f32
    %30 = vector.broadcast %cst_23 : f32 to vector<8x32xf32>
    %31 = vector.extract_strided_slice %18 {offsets = [0, 0], sizes = [8, 8], strides = [1, 1]} : vector<16x96xf32> to vector<8x8xf32>
    %32 = vector.extract_strided_slice %18 {offsets = [0, 32], sizes = [8, 8], strides = [1, 1]} : vector<16x96xf32> to vector<8x8xf32>
    %33 = vector.extract_strided_slice %18 {offsets = [0, 64], sizes = [8, 8], strides = [1, 1]} : vector<16x96xf32> to vector<8x8xf32>
    %34 = tpu.transpose %32, [1, 0] : vector<8x8xf32> -> vector<8x8xf32>
    %cst_24 = arith.constant dense<0.000000e+00> : vector<8x8xf32>
    %35 = tpu.matmul %31, %34, %cst_24 {dimension_numbers = #tpu.dot_dimension_numbers<[1], [0], [0], [1], [0, 0, 1, 1], [], []>} : vector<8x8xf32>, vector<8x8xf32>, vector<8x8xf32> -> vector<8x8xf32>
    %cst_25 = arith.constant 0.353553385 : f32
    %36 = vector.broadcast %cst_25 : f32 to vector<8x8xf32>
    %37 = arith.mulf %35, %36 : vector<8x8xf32>
    %38 = arith.addf %37, %29 : vector<8x8xf32>
    %cst_26 = arith.constant dense<0xFF800000> : vector<8xf32>
    %39 = vector.multi_reduction <maximumf>, %38, %cst_26 [1] : vector<8x8xf32> to vector<8xf32>
    %40 = vector.shape_cast %39 : vector<8xf32> to vector<8x1xf32>
    %41 = vector.broadcast %40 : vector<8x1xf32> to vector<8x8xf32>
    %42 = arith.subf %38, %41 : vector<8x8xf32>
    %43 = math.exp %42 : vector<8x8xf32>
    %cst_27 = arith.constant dense<0.000000e+00> : vector<8xf32>
    %44 = vector.multi_reduction <add>, %43, %cst_27 [1] : vector<8x8xf32> to vector<8xf32>
    %45 = vector.shape_cast %44 : vector<8xf32> to vector<8x1xf32>
    %46 = tpu.reciprocal %45 {approx = true} : vector<8x1xf32> -> vector<8x1xf32>
    %47 = vector.broadcast %46 : vector<8x1xf32> to vector<8x8xf32>
    %48 = arith.mulf %43, %47 : vector<8x8xf32>
    %cst_28 = arith.constant dense<0.000000e+00> : vector<8x8xf32>
    %49 = tpu.matmul %48, %33, %cst_28 {dimension_numbers = #tpu.dot_dimension_numbers<[1], [0], [0], [1], [0, 0, 1, 1], [], []>} : vector<8x8xf32>, vector<8x8xf32>, vector<8x8xf32> -> vector<8x8xf32>
    %50 = vector.extract_strided_slice %19 {offsets = [0, 0], sizes = [8, 32], strides = [1, 1]} : vector<32x32xf32> to vector<8x32xf32>
    %cst_29 = arith.constant dense<0.000000e+00> : vector<8x32xf32>
    %51 = tpu.matmul %49, %50, %cst_29 {dimension_numbers = #tpu.dot_dimension_numbers<[1], [0], [0], [1], [0, 0, 1, 1], [], []>} : vector<8x8xf32>, vector<8x32xf32>, vector<8x32xf32> -> vector<8x32xf32>
    %52 = arith.addf %30, %51 : vector<8x32xf32>
    %53 = vector.extract_strided_slice %18 {offsets = [0, 8], sizes = [8, 8], strides = [1, 1]} : vector<16x96xf32> to vector<8x8xf32>
    %54 = vector.extract_strided_slice %18 {offsets = [0, 40], sizes = [8, 8], strides = [1, 1]} : vector<16x96xf32> to vector<8x8xf32>
    %55 = vector.extract_strided_slice %18 {offsets = [0, 72], sizes = [8, 8], strides = [1, 1]} : vector<16x96xf32> to vector<8x8xf32>
    %56 = tpu.transpose %54, [1, 0] : vector<8x8xf32> -> vector<8x8xf32>
    %cst_30 = arith.constant dense<0.000000e+00> : vector<8x8xf32>
    %57 = tpu.matmul %53, %56, %cst_30 {dimension_numbers = #tpu.dot_dimension_numbers<[1], [0], [0], [1], [0, 0, 1, 1], [], []>} : vector<8x8xf32>, vector<8x8xf32>, vector<8x8xf32> -> vector<8x8xf32>
    %cst_31 = arith.constant 0.353553385 : f32
    %58 = vector.broadcast %cst_31 : f32 to vector<8x8xf32>
    %59 = arith.mulf %57, %58 : vector<8x8xf32>
    %60 = arith.addf %59, %29 : vector<8x8xf32>
    %cst_32 = arith.constant dense<0xFF800000> : vector<8xf32>
    %61 = vector.multi_reduction <maximumf>, %60, %cst_32 [1] : vector<8x8xf32> to vector<8xf32>
    %62 = vector.shape_cast %61 : vector<8xf32> to vector<8x1xf32>
    %63 = vector.broadcast %62 : vector<8x1xf32> to vector<8x8xf32>
    %64 = arith.subf %60, %63 : vector<8x8xf32>
    %65 = math.exp %64 : vector<8x8xf32>
    %cst_33 = arith.constant dense<0.000000e+00> : vector<8xf32>
    %66 = vector.multi_reduction <add>, %65, %cst_33 [1] : vector<8x8xf32> to vector<8xf32>
    %67 = vector.shape_cast %66 : vector<8xf32> to vector<8x1xf32>
    %68 = tpu.reciprocal %67 {approx = true} : vector<8x1xf32> -> vector<8x1xf32>
    %69 = vector.broadcast %68 : vector<8x1xf32> to vector<8x8xf32>
    %70 = arith.mulf %65, %69 : vector<8x8xf32>
    %cst_34 = arith.constant dense<0.000000e+00> : vector<8x8xf32>
    %71 = tpu.matmul %70, %55, %cst_34 {dimension_numbers = #tpu.dot_dimension_numbers<[1], [0], [0], [1], [0, 0, 1, 1], [], []>} : vector<8x8xf32>, vector<8x8xf32>, vector<8x8xf32> -> vector<8x8xf32>
    %72 = vector.extract_strided_slice %19 {offsets = [8, 0], sizes = [8, 32], strides = [1, 1]} : vector<32x32xf32> to vector<8x32xf32>
    %cst_35 = arith.constant dense<0.000000e+00> : vector<8x32xf32>
    %73 = tpu.matmul %71, %72, %cst_35 {dimension_numbers = #tpu.dot_dimension_numbers<[1], [0], [0], [1], [0, 0, 1, 1], [], []>} : vector<8x8xf32>, vector<8x32xf32>, vector<8x32xf32> -> vector<8x32xf32>
    %74 = arith.addf %52, %73 : vector<8x32xf32>
    %75 = vector.extract_strided_slice %18 {offsets = [0, 16], sizes = [8, 8], strides = [1, 1]} : vector<16x96xf32> to vector<8x8xf32>
    %76 = vector.extract_strided_slice %18 {offsets = [0, 48], sizes = [8, 8], strides = [1, 1]} : vector<16x96xf32> to vector<8x8xf32>
    %77 = vector.extract_strided_slice %18 {offsets = [0, 80], sizes = [8, 8], strides = [1, 1]} : vector<16x96xf32> to vector<8x8xf32>
    %78 = tpu.transpose %76, [1, 0] : vector<8x8xf32> -> vector<8x8xf32>
    %cst_36 = arith.constant dense<0.000000e+00> : vector<8x8xf32>
    %79 = tpu.matmul %75, %78, %cst_36 {dimension_numbers = #tpu.dot_dimension_numbers<[1], [0], [0], [1], [0, 0, 1, 1], [], []>} : vector<8x8xf32>, vector<8x8xf32>, vector<8x8xf32> -> vector<8x8xf32>
    %cst_37 = arith.constant 0.353553385 : f32
    %80 = vector.broadcast %cst_37 : f32 to vector<8x8xf32>
    %81 = arith.mulf %79, %80 : vector<8x8xf32>
    %82 = arith.addf %81, %29 : vector<8x8xf32>
    %cst_38 = arith.constant dense<0xFF800000> : vector<8xf32>
    %83 = vector.multi_reduction <maximumf>, %82, %cst_38 [1] : vector<8x8xf32> to vector<8xf32>
    %84 = vector.shape_cast %83 : vector<8xf32> to vector<8x1xf32>
    %85 = vector.broadcast %84 : vector<8x1xf32> to vector<8x8xf32>
    %86 = arith.subf %82, %85 : vector<8x8xf32>
    %87 = math.exp %86 : vector<8x8xf32>
    %cst_39 = arith.constant dense<0.000000e+00> : vector<8xf32>
    %88 = vector.multi_reduction <add>, %87, %cst_39 [1] : vector<8x8xf32> to vector<8xf32>
    %89 = vector.shape_cast %88 : vector<8xf32> to vector<8x1xf32>
    %90 = tpu.reciprocal %89 {approx = true} : vector<8x1xf32> -> vector<8x1xf32>
    %91 = vector.broadcast %90 : vector<8x1xf32> to vector<8x8xf32>
    %92 = arith.mulf %87, %91 : vector<8x8xf32>
    %cst_40 = arith.constant dense<0.000000e+00> : vector<8x8xf32>
    %93 = tpu.matmul %92, %77, %cst_40 {dimension_numbers = #tpu.dot_dimension_numbers<[1], [0], [0], [1], [0, 0, 1, 1], [], []>} : vector<8x8xf32>, vector<8x8xf32>, vector<8x8xf32> -> vector<8x8xf32>
    %94 = vector.extract_strided_slice %19 {offsets = [16, 0], sizes = [8, 32], strides = [1, 1]} : vector<32x32xf32> to vector<8x32xf32>
    %cst_41 = arith.constant dense<0.000000e+00> : vector<8x32xf32>
    %95 = tpu.matmul %93, %94, %cst_41 {dimension_numbers = #tpu.dot_dimension_numbers<[1], [0], [0], [1], [0, 0, 1, 1], [], []>} : vector<8x8xf32>, vector<8x32xf32>, vector<8x32xf32> -> vector<8x32xf32>
    %96 = arith.addf %74, %95 : vector<8x32xf32>
    %97 = vector.extract_strided_slice %18 {offsets = [0, 24], sizes = [8, 8], strides = [1, 1]} : vector<16x96xf32> to vector<8x8xf32>
    %98 = vector.extract_strided_slice %18 {offsets = [0, 56], sizes = [8, 8], strides = [1, 1]} : vector<16x96xf32> to vector<8x8xf32>
    %99 = vector.extract_strided_slice %18 {offsets = [0, 88], sizes = [8, 8], strides = [1, 1]} : vector<16x96xf32> to vector<8x8xf32>
    %100 = tpu.transpose %98, [1, 0] : vector<8x8xf32> -> vector<8x8xf32>
    %cst_42 = arith.constant dense<0.000000e+00> : vector<8x8xf32>
    %101 = tpu.matmul %97, %100, %cst_42 {dimension_numbers = #tpu.dot_dimension_numbers<[1], [0], [0], [1], [0, 0, 1, 1], [], []>} : vector<8x8xf32>, vector<8x8xf32>, vector<8x8xf32> -> vector<8x8xf32>
    %cst_43 = arith.constant 0.353553385 : f32
    %102 = vector.broadcast %cst_43 : f32 to vector<8x8xf32>
    %103 = arith.mulf %101, %102 : vector<8x8xf32>
    %104 = arith.addf %103, %29 : vector<8x8xf32>
    %cst_44 = arith.constant dense<0xFF800000> : vector<8xf32>
    %105 = vector.multi_reduction <maximumf>, %104, %cst_44 [1] : vector<8x8xf32> to vector<8xf32>
    %106 = vector.shape_cast %105 : vector<8xf32> to vector<8x1xf32>
    %107 = vector.broadcast %106 : vector<8x1xf32> to vector<8x8xf32>
    %108 = arith.subf %104, %107 : vector<8x8xf32>
    %109 = math.exp %108 : vector<8x8xf32>
    %cst_45 = arith.constant dense<0.000000e+00> : vector<8xf32>
    %110 = vector.multi_reduction <add>, %109, %cst_45 [1] : vector<8x8xf32> to vector<8xf32>
    %111 = vector.shape_cast %110 : vector<8xf32> to vector<8x1xf32>
    %112 = tpu.reciprocal %111 {approx = true} : vector<8x1xf32> -> vector<8x1xf32>
    %113 = vector.broadcast %112 : vector<8x1xf32> to vector<8x8xf32>
    %114 = arith.mulf %109, %113 : vector<8x8xf32>
    %cst_46 = arith.constant dense<0.000000e+00> : vector<8x8xf32>
    %115 = tpu.matmul %114, %99, %cst_46 {dimension_numbers = #tpu.dot_dimension_numbers<[1], [0], [0], [1], [0, 0, 1, 1], [], []>} : vector<8x8xf32>, vector<8x8xf32>, vector<8x8xf32> -> vector<8x8xf32>
    %116 = vector.extract_strided_slice %19 {offsets = [24, 0], sizes = [8, 32], strides = [1, 1]} : vector<32x32xf32> to vector<8x32xf32>
    %cst_47 = arith.constant dense<0.000000e+00> : vector<8x32xf32>
    %117 = tpu.matmul %115, %116, %cst_47 {dimension_numbers = #tpu.dot_dimension_numbers<[1], [0], [0], [1], [0, 0, 1, 1], [], []>} : vector<8x8xf32>, vector<8x32xf32>, vector<8x32xf32> -> vector<8x32xf32>
    %118 = arith.addf %96, %117 : vector<8x32xf32>
    %c0_48 = arith.constant 0 : index
    %c0_49 = arith.constant 0 : index
    %119 = vector.load %arg31[%c0_48, %c0_49] : memref<16x32xf32, #tpu.memory_space<vmem>>, vector<8x32xf32>
    tpu.vector_store %arg31[%c0_48, %c0_49], %118 {strides = array<i32>} : memref<16x32xf32, #tpu.memory_space<vmem>>, vector<8x32xf32>,
    %c1 = arith.constant 1 : index
    %120 = memref.load %arg0[%c1] : memref<2xi32, #tpu.memory_space<smem>>
    %121 = vector.broadcast %120 : i32 to vector<8x8xi32>
    %122 = arith.cmpi sge, %21, %121 : vector<8x8xi32>
    %123 = arith.ori %22, %122 : vector<8x8xi1>
    %cst_50 = arith.constant -1.000000e+09 : f32
    %cst_51 = arith.constant 0.000000e+00 : f32
    %124 = vector.broadcast %cst_50 : f32 to vector<8x8xf32>
    %125 = vector.broadcast %cst_51 : f32 to vector<8x8xf32>
    %126 = arith.select %123, %124, %125 : vector<8x8xi1>, vector<8x8xf32>
    %cst_52 = arith.constant 0.000000e+00 : f32
    %127 = vector.broadcast %cst_52 : f32 to vector<8x32xf32>
    %128 = vector.extract_strided_slice %18 {offsets = [8, 0], sizes = [8, 8], strides = [1, 1]} : vector<16x96xf32> to vector<8x8xf32>
    %129 = vector.extract_strided_slice %18 {offsets = [8, 32], sizes = [8, 8], strides = [1, 1]} : vector<16x96xf32> to vector<8x8xf32>
    %130 = vector.extract_strided_slice %18 {offsets = [8, 64], sizes = [8, 8], strides = [1, 1]} : vector<16x96xf32> to vector<8x8xf32>
    %131 = tpu.transpose %129, [1, 0] : vector<8x8xf32> -> vector<8x8xf32>
    %cst_53 = arith.constant dense<0.000000e+00> : vector<8x8xf32>
    %132 = tpu.matmul %128, %131, %cst_53 {dimension_numbers = #tpu.dot_dimension_numbers<[1], [0], [0], [1], [0, 0, 1, 1], [], []>} : vector<8x8xf32>, vector<8x8xf32>, vector<8x8xf32> -> vector<8x8xf32>
    %cst_54 = arith.constant 0.353553385 : f32
    %133 = vector.broadcast %cst_54 : f32 to vector<8x8xf32>
    %134 = arith.mulf %132, %133 : vector<8x8xf32>
    %135 = arith.addf %134, %126 : vector<8x8xf32>
    %cst_55 = arith.constant dense<0xFF800000> : vector<8xf32>
    %136 = vector.multi_reduction <maximumf>, %135, %cst_55 [1] : vector<8x8xf32> to vector<8xf32>
    %137 = vector.shape_cast %136 : vector<8xf32> to vector<8x1xf32>
    %138 = vector.broadcast %137 : vector<8x1xf32> to vector<8x8xf32>
    %139 = arith.subf %135, %138 : vector<8x8xf32>
    %140 = math.exp %139 : vector<8x8xf32>
    %cst_56 = arith.constant dense<0.000000e+00> : vector<8xf32>
    %141 = vector.multi_reduction <add>, %140, %cst_56 [1] : vector<8x8xf32> to vector<8xf32>
    %142 = vector.shape_cast %141 : vector<8xf32> to vector<8x1xf32>
    %143 = tpu.reciprocal %142 {approx = true} : vector<8x1xf32> -> vector<8x1xf32>
    %144 = vector.broadcast %143 : vector<8x1xf32> to vector<8x8xf32>
    %145 = arith.mulf %140, %144 : vector<8x8xf32>
    %cst_57 = arith.constant dense<0.000000e+00> : vector<8x8xf32>
    %146 = tpu.matmul %145, %130, %cst_57 {dimension_numbers = #tpu.dot_dimension_numbers<[1], [0], [0], [1], [0, 0, 1, 1], [], []>} : vector<8x8xf32>, vector<8x8xf32>, vector<8x8xf32> -> vector<8x8xf32>
    %147 = vector.extract_strided_slice %19 {offsets = [0, 0], sizes = [8, 32], strides = [1, 1]} : vector<32x32xf32> to vector<8x32xf32>
    %cst_58 = arith.constant dense<0.000000e+00> : vector<8x32xf32>
    %148 = tpu.matmul %146, %147, %cst_58 {dimension_numbers = #tpu.dot_dimension_numbers<[1], [0], [0], [1], [0, 0, 1, 1], [], []>} : vector<8x8xf32>, vector<8x32xf32>, vector<8x32xf32> -> vector<8x32xf32>
    %149 = arith.addf %127, %148 : vector<8x32xf32>
    %150 = vector.extract_strided_slice %18 {offsets = [8, 8], sizes = [8, 8], strides = [1, 1]} : vector<16x96xf32> to vector<8x8xf32>
    %151 = vector.extract_strided_slice %18 {offsets = [8, 40], sizes = [8, 8], strides = [1, 1]} : vector<16x96xf32> to vector<8x8xf32>
    %152 = vector.extract_strided_slice %18 {offsets = [8, 72], sizes = [8, 8], strides = [1, 1]} : vector<16x96xf32> to vector<8x8xf32>
    %153 = tpu.transpose %151, [1, 0] : vector<8x8xf32> -> vector<8x8xf32>
    %cst_59 = arith.constant dense<0.000000e+00> : vector<8x8xf32>
    %154 = tpu.matmul %150, %153, %cst_59 {dimension_numbers = #tpu.dot_dimension_numbers<[1], [0], [0], [1], [0, 0, 1, 1], [], []>} : vector<8x8xf32>, vector<8x8xf32>, vector<8x8xf32> -> vector<8x8xf32>
    %cst_60 = arith.constant 0.353553385 : f32
    %155 = vector.broadcast %cst_60 : f32 to vector<8x8xf32>
    %156 = arith.mulf %154, %155 : vector<8x8xf32>
    %157 = arith.addf %156, %126 : vector<8x8xf32>
    %cst_61 = arith.constant dense<0xFF800000> : vector<8xf32>
    %158 = vector.multi_reduction <maximumf>, %157, %cst_61 [1] : vector<8x8xf32> to vector<8xf32>
    %159 = vector.shape_cast %158 : vector<8xf32> to vector<8x1xf32>
    %160 = vector.broadcast %159 : vector<8x1xf32> to vector<8x8xf32>
    %161 = arith.subf %157, %160 : vector<8x8xf32>
    %162 = math.exp %161 : vector<8x8xf32>
    %cst_62 = arith.constant dense<0.000000e+00> : vector<8xf32>
    %163 = vector.multi_reduction <add>, %162, %cst_62 [1] : vector<8x8xf32> to vector<8xf32>
    %164 = vector.shape_cast %163 : vector<8xf32> to vector<8x1xf32>
    %165 = tpu.reciprocal %164 {approx = true} : vector<8x1xf32> -> vector<8x1xf32>
    %166 = vector.broadcast %165 : vector<8x1xf32> to vector<8x8xf32>
    %167 = arith.mulf %162, %166 : vector<8x8xf32>
    %cst_63 = arith.constant dense<0.000000e+00> : vector<8x8xf32>
    %168 = tpu.matmul %167, %152, %cst_63 {dimension_numbers = #tpu.dot_dimension_numbers<[1], [0], [0], [1], [0, 0, 1, 1], [], []>} : vector<8x8xf32>, vector<8x8xf32>, vector<8x8xf32> -> vector<8x8xf32>
    %169 = vector.extract_strided_slice %19 {offsets = [8, 0], sizes = [8, 32], strides = [1, 1]} : vector<32x32xf32> to vector<8x32xf32>
    %cst_64 = arith.constant dense<0.000000e+00> : vector<8x32xf32>
    %170 = tpu.matmul %168, %169, %cst_64 {dimension_numbers = #tpu.dot_dimension_numbers<[1], [0], [0], [1], [0, 0, 1, 1], [], []>} : vector<8x8xf32>, vector<8x32xf32>, vector<8x32xf32> -> vector<8x32xf32>
    %171 = arith.addf %149, %170 : vector<8x32xf32>
    %172 = vector.extract_strided_slice %18 {offsets = [8, 16], sizes = [8, 8], strides = [1, 1]} : vector<16x96xf32> to vector<8x8xf32>
    %173 = vector.extract_strided_slice %18 {offsets = [8, 48], sizes = [8, 8], strides = [1, 1]} : vector<16x96xf32> to vector<8x8xf32>
    %174 = vector.extract_strided_slice %18 {offsets = [8, 80], sizes = [8, 8], strides = [1, 1]} : vector<16x96xf32> to vector<8x8xf32>
    %175 = tpu.transpose %173, [1, 0] : vector<8x8xf32> -> vector<8x8xf32>
    %cst_65 = arith.constant dense<0.000000e+00> : vector<8x8xf32>
    %176 = tpu.matmul %172, %175, %cst_65 {dimension_numbers = #tpu.dot_dimension_numbers<[1], [0], [0], [1], [0, 0, 1, 1], [], []>} : vector<8x8xf32>, vector<8x8xf32>, vector<8x8xf32> -> vector<8x8xf32>
    %cst_66 = arith.constant 0.353553385 : f32
    %177 = vector.broadcast %cst_66 : f32 to vector<8x8xf32>
    %178 = arith.mulf %176, %177 : vector<8x8xf32>
    %179 = arith.addf %178, %126 : vector<8x8xf32>
    %cst_67 = arith.constant dense<0xFF800000> : vector<8xf32>
    %180 = vector.multi_reduction <maximumf>, %179, %cst_67 [1] : vector<8x8xf32> to vector<8xf32>
    %181 = vector.shape_cast %180 : vector<8xf32> to vector<8x1xf32>
    %182 = vector.broadcast %181 : vector<8x1xf32> to vector<8x8xf32>
    %183 = arith.subf %179, %182 : vector<8x8xf32>
    %184 = math.exp %183 : vector<8x8xf32>
    %cst_68 = arith.constant dense<0.000000e+00> : vector<8xf32>
    %185 = vector.multi_reduction <add>, %184, %cst_68 [1] : vector<8x8xf32> to vector<8xf32>
    %186 = vector.shape_cast %185 : vector<8xf32> to vector<8x1xf32>
    %187 = tpu.reciprocal %186 {approx = true} : vector<8x1xf32> -> vector<8x1xf32>
    %188 = vector.broadcast %187 : vector<8x1xf32> to vector<8x8xf32>
    %189 = arith.mulf %184, %188 : vector<8x8xf32>
    %cst_69 = arith.constant dense<0.000000e+00> : vector<8x8xf32>
    %190 = tpu.matmul %189, %174, %cst_69 {dimension_numbers = #tpu.dot_dimension_numbers<[1], [0], [0], [1], [0, 0, 1, 1], [], []>} : vector<8x8xf32>, vector<8x8xf32>, vector<8x8xf32> -> vector<8x8xf32>
    %191 = vector.extract_strided_slice %19 {offsets = [16, 0], sizes = [8, 32], strides = [1, 1]} : vector<32x32xf32> to vector<8x32xf32>
    %cst_70 = arith.constant dense<0.000000e+00> : vector<8x32xf32>
    %192 = tpu.matmul %190, %191, %cst_70 {dimension_numbers = #tpu.dot_dimension_numbers<[1], [0], [0], [1], [0, 0, 1, 1], [], []>} : vector<8x8xf32>, vector<8x32xf32>, vector<8x32xf32> -> vector<8x32xf32>
    %193 = arith.addf %171, %192 : vector<8x32xf32>
    %194 = vector.extract_strided_slice %18 {offsets = [8, 24], sizes = [8, 8], strides = [1, 1]} : vector<16x96xf32> to vector<8x8xf32>
    %195 = vector.extract_strided_slice %18 {offsets = [8, 56], sizes = [8, 8], strides = [1, 1]} : vector<16x96xf32> to vector<8x8xf32>
    %196 = vector.extract_strided_slice %18 {offsets = [8, 88], sizes = [8, 8], strides = [1, 1]} : vector<16x96xf32> to vector<8x8xf32>
    %197 = tpu.transpose %195, [1, 0] : vector<8x8xf32> -> vector<8x8xf32>
    %cst_71 = arith.constant dense<0.000000e+00> : vector<8x8xf32>
    %198 = tpu.matmul %194, %197, %cst_71 {dimension_numbers = #tpu.dot_dimension_numbers<[1], [0], [0], [1], [0, 0, 1, 1], [], []>} : vector<8x8xf32>, vector<8x8xf32>, vector<8x8xf32> -> vector<8x8xf32>
    %cst_72 = arith.constant 0.353553385 : f32
    %199 = vector.broadcast %cst_72 : f32 to vector<8x8xf32>
    %200 = arith.mulf %198, %199 : vector<8x8xf32>
    %201 = arith.addf %200, %126 : vector<8x8xf32>
    %cst_73 = arith.constant dense<0xFF800000> : vector<8xf32>
    %202 = vector.multi_reduction <maximumf>, %201, %cst_73 [1] : vector<8x8xf32> to vector<8xf32>
    %203 = vector.shape_cast %202 : vector<8xf32> to vector<8x1xf32>
    %204 = vector.broadcast %203 : vector<8x1xf32> to vector<8x8xf32>
    %205 = arith.subf %201, %204 : vector<8x8xf32>
    %206 = math.exp %205 : vector<8x8xf32>
    %cst_74 = arith.constant dense<0.000000e+00> : vector<8xf32>
    %207 = vector.multi_reduction <add>, %206, %cst_74 [1] : vector<8x8xf32> to vector<8xf32>
    %208 = vector.shape_cast %207 : vector<8xf32> to vector<8x1xf32>
    %209 = tpu.reciprocal %208 {approx = true} : vector<8x1xf32> -> vector<8x1xf32>
    %210 = vector.broadcast %209 : vector<8x1xf32> to vector<8x8xf32>
    %211 = arith.mulf %206, %210 : vector<8x8xf32>
    %cst_75 = arith.constant dense<0.000000e+00> : vector<8x8xf32>
    %212 = tpu.matmul %211, %196, %cst_75 {dimension_numbers = #tpu.dot_dimension_numbers<[1], [0], [0], [1], [0, 0, 1, 1], [], []>} : vector<8x8xf32>, vector<8x8xf32>, vector<8x8xf32> -> vector<8x8xf32>
    %213 = vector.extract_strided_slice %19 {offsets = [24, 0], sizes = [8, 32], strides = [1, 1]} : vector<32x32xf32> to vector<8x32xf32>
    %cst_76 = arith.constant dense<0.000000e+00> : vector<8x32xf32>
    %214 = tpu.matmul %212, %213, %cst_76 {dimension_numbers = #tpu.dot_dimension_numbers<[1], [0], [0], [1], [0, 0, 1, 1], [], []>} : vector<8x8xf32>, vector<8x32xf32>, vector<8x32xf32> -> vector<8x32xf32>
    %215 = arith.addf %193, %214 : vector<8x32xf32>
    %c8 = arith.constant 8 : index
    %c0_77 = arith.constant 0 : index
    %216 = vector.load %arg31[%c8, %c0_77] : memref<16x32xf32, #tpu.memory_space<vmem>>, vector<8x32xf32>
    tpu.vector_store %arg31[%c8, %c0_77], %215 {strides = array<i32>} : memref<16x32xf32, #tpu.memory_space<vmem>>, vector<8x32xf32>,
    %c0_78 = arith.constant 0 : index
    %c0_79 = arith.constant 0 : index
    %217 = vector.load %arg31[%c0_78, %c0_79] : memref<16x32xf32, #tpu.memory_space<vmem>>, vector<16x32xf32>
    %218 = arith.addf %13, %217 : vector<16x32xf32>
    %c0_80 = arith.constant 0 : index
    %c0_81 = arith.constant 0 : index
    %219 = vector.load %arg11[%c0_80, %c0_81] : memref<1x32xf32, #tpu.memory_space<vmem>>, vector<1x32xf32>
    %220 = vector.broadcast %219 : vector<1x32xf32> to vector<16x32xf32>
    %221 = arith.addf %218, %220 : vector<16x32xf32>
    %cst_82 = arith.constant dense<0.000000e+00> : vector<16xf32>
    %222 = vector.multi_reduction <add>, %221, %cst_82 [1] : vector<16x32xf32> to vector<16xf32>
    %223 = vector.shape_cast %222 : vector<16xf32> to vector<16x1xf32>
    %cst_83 = arith.constant 3.200000e+01 : f32
    %224 = vector.broadcast %cst_83 : f32 to vector<16x1xf32>
    %225 = arith.divf %223, %224 : vector<16x1xf32>
    %226 = vector.broadcast %225 : vector<16x1xf32> to vector<16x32xf32>
    %227 = arith.subf %221, %226 : vector<16x32xf32>
    %228 = arith.mulf %227, %227 : vector<16x32xf32>
    %cst_84 = arith.constant dense<0.000000e+00> : vector<16xf32>
    %229 = vector.multi_reduction <add>, %228, %cst_84 [1] : vector<16x32xf32> to vector<16xf32>
    %230 = vector.shape_cast %229 : vector<16xf32> to vector<16x1xf32>
    %cst_85 = arith.constant 3.200000e+01 : f32
    %231 = vector.broadcast %cst_85 : f32 to vector<16x1xf32>
    %232 = arith.divf %230, %231 : vector<16x1xf32>
    %233 = vector.broadcast %225 : vector<16x1xf32> to vector<16x32xf32>
    %234 = arith.subf %221, %233 : vector<16x32xf32>
    %cst_86 = arith.constant 9.99999974E-6 : f32
    %235 = vector.broadcast %cst_86 : f32 to vector<16x1xf32>
    %236 = arith.addf %232, %235 : vector<16x1xf32>
    %237 = math.rsqrt %236 : vector<16x1xf32>
    %238 = vector.broadcast %237 : vector<16x1xf32> to vector<16x32xf32>
    %239 = arith.mulf %234, %238 : vector<16x32xf32>
    %c0_87 = arith.constant 0 : index
    %c0_88 = arith.constant 0 : index
    %240 = vector.load %arg12[%c0_87, %c0_88] : memref<1x32xf32, #tpu.memory_space<vmem>>, vector<1x32xf32>
    %241 = vector.broadcast %240 : vector<1x32xf32> to vector<16x32xf32>
    %242 = arith.mulf %239, %241 : vector<16x32xf32>
    %c0_89 = arith.constant 0 : index
    %c0_90 = arith.constant 0 : index
    %243 = vector.load %arg13[%c0_89, %c0_90] : memref<1x32xf32, #tpu.memory_space<vmem>>, vector<1x32xf32>
    %244 = vector.broadcast %243 : vector<1x32xf32> to vector<16x32xf32>
    %245 = arith.addf %242, %244 : vector<16x32xf32>
    %c0_91 = arith.constant 0 : index
    %c0_92 = arith.constant 0 : index
    %246 = vector.load %arg14[%c0_91, %c0_92] : memref<32x32xf32, #tpu.memory_space<vmem>>, vector<32x32xf32>
    %cst_93 = arith.constant dense<0.000000e+00> : vector<16x32xf32>
    %247 = tpu.matmul %245, %246, %cst_93 {dimension_numbers = #tpu.dot_dimension_numbers<[1], [0], [0], [1], [0, 0, 1, 1], [], []>} : vector<16x32xf32>, vector<32x32xf32>, vector<16x32xf32> -> vector<16x32xf32>
    %c0_94 = arith.constant 0 : index
    %c0_95 = arith.constant 0 : index
    %248 = vector.load %arg15[%c0_94, %c0_95] : memref<1x32xf32, #tpu.memory_space<vmem>>, vector<1x32xf32>
    %249 = vector.broadcast %248 : vector<1x32xf32> to vector<16x32xf32>
    %250 = arith.addf %247, %249 : vector<16x32xf32>
    %c0_96 = arith.constant 0 : index
    %c0_97 = arith.constant 0 : index
    %251 = vector.load %arg16[%c0_96, %c0_97] : memref<32x64xf32, #tpu.memory_space<vmem>>, vector<32x64xf32>
    %cst_98 = arith.constant dense<0.000000e+00> : vector<32x64xf32>
    %252 = tpu.matmul %12, %251, %cst_98 {dimension_numbers = #tpu.dot_dimension_numbers<[1], [0], [0], [1], [0, 0, 1, 1], [], []>} : vector<32x32xf32>, vector<32x64xf32>, vector<32x64xf32> -> vector<32x64xf32>
    %c0_99 = arith.constant 0 : index
    %c0_100 = arith.constant 0 : index
    %253 = vector.load %arg17[%c0_99, %c0_100] : memref<1x64xf32, #tpu.memory_space<vmem>>, vector<1x64xf32>
    %254 = vector.broadcast %253 : vector<1x64xf32> to vector<32x64xf32>
    %255 = arith.addf %252, %254 : vector<32x64xf32>
    %c0_101 = arith.constant 0 : index
    %c0_102 = arith.constant 0 : index
    %256 = vector.load %arg18[%c0_101, %c0_102] : memref<32x32xf32, #tpu.memory_space<vmem>>, vector<32x32xf32>
    %257 = tpu.iota {dimensions = array<i32: 1>} : vector<8x16xi32>
    %c0_103 = arith.constant 0 : index
    %258 = memref.load %arg1[%c0_103] : memref<2xi32, #tpu.memory_space<smem>>
    %259 = vector.broadcast %258 : i32 to vector<8x16xi32>
    %260 = arith.cmpi sge, %257, %259 : vector<8x16xi32>
    %cst_104 = arith.constant -1.000000e+09 : f32
    %cst_105 = arith.constant 0.000000e+00 : f32
    %261 = vector.broadcast %cst_104 : f32 to vector<8x16xf32>
    %262 = vector.broadcast %cst_105 : f32 to vector<8x16xf32>
    %263 = arith.select %260, %261, %262 : vector<8x16xi1>, vector<8x16xf32>
    %cst_106 = arith.constant 0.000000e+00 : f32
    %264 = vector.broadcast %cst_106 : f32 to vector<8x32xf32>
    %265 = vector.extract_strided_slice %250 {offsets = [0, 0], sizes = [8, 8], strides = [1, 1]} : vector<16x32xf32> to vector<8x8xf32>
    %266 = vector.extract_strided_slice %255 {offsets = [0, 0], sizes = [16, 8], strides = [1, 1]} : vector<32x64xf32> to vector<16x8xf32>
    %267 = vector.extract_strided_slice %255 {offsets = [0, 32], sizes = [16, 8], strides = [1, 1]} : vector<32x64xf32> to vector<16x8xf32>
    %268 = tpu.transpose %266, [1, 0] : vector<16x8xf32> -> vector<8x16xf32>
    %cst_107 = arith.constant dense<0.000000e+00> : vector<8x16xf32>
    %269 = tpu.matmul %265, %268, %cst_107 {dimension_numbers = #tpu.dot_dimension_numbers<[1], [0], [0], [1], [0, 0, 1, 1], [], []>} : vector<8x8xf32>, vector<8x16xf32>, vector<8x16xf32> -> vector<8x16xf32>
    %cst_108 = arith.constant 0.353553385 : f32
    %270 = vector.broadcast %cst_108 : f32 to vector<8x16xf32>
    %271 = arith.mulf %269, %270 : vector<8x16xf32>
    %272 = arith.addf %271, %263 : vector<8x16xf32>
    %cst_109 = arith.constant dense<0xFF800000> : vector<8xf32>
    %273 = vector.multi_reduction <maximumf>, %272, %cst_109 [1] : vector<8x16xf32> to vector<8xf32>
    %274 = vector.shape_cast %273 : vector<8xf32> to vector<8x1xf32>
    %275 = vector.broadcast %274 : vector<8x1xf32> to vector<8x16xf32>
    %276 = arith.subf %272, %275 : vector<8x16xf32>
    %277 = math.exp %276 : vector<8x16xf32>
    %cst_110 = arith.constant dense<0.000000e+00> : vector<8xf32>
    %278 = vector.multi_reduction <add>, %277, %cst_110 [1] : vector<8x16xf32> to vector<8xf32>
    %279 = vector.shape_cast %278 : vector<8xf32> to vector<8x1xf32>
    %280 = tpu.reciprocal %279 {approx = true} : vector<8x1xf32> -> vector<8x1xf32>
    %281 = vector.broadcast %280 : vector<8x1xf32> to vector<8x16xf32>
    %282 = arith.mulf %277, %281 : vector<8x16xf32>
    %cst_111 = arith.constant dense<0.000000e+00> : vector<8x8xf32>
    %283 = tpu.matmul %282, %267, %cst_111 {dimension_numbers = #tpu.dot_dimension_numbers<[1], [0], [0], [1], [0, 0, 1, 1], [], []>} : vector<8x16xf32>, vector<16x8xf32>, vector<8x8xf32> -> vector<8x8xf32>
    %284 = vector.extract_strided_slice %256 {offsets = [0, 0], sizes = [8, 32], strides = [1, 1]} : vector<32x32xf32> to vector<8x32xf32>
    %cst_112 = arith.constant dense<0.000000e+00> : vector<8x32xf32>
    %285 = tpu.matmul %283, %284, %cst_112 {dimension_numbers = #tpu.dot_dimension_numbers<[1], [0], [0], [1], [0, 0, 1, 1], [], []>} : vector<8x8xf32>, vector<8x32xf32>, vector<8x32xf32> -> vector<8x32xf32>
    %286 = arith.addf %264, %285 : vector<8x32xf32>
    %287 = vector.extract_strided_slice %250 {offsets = [0, 8], sizes = [8, 8], strides = [1, 1]} : vector<16x32xf32> to vector<8x8xf32>
    %288 = vector.extract_strided_slice %255 {offsets = [0, 8], sizes = [16, 8], strides = [1, 1]} : vector<32x64xf32> to vector<16x8xf32>
    %289 = vector.extract_strided_slice %255 {offsets = [0, 40], sizes = [16, 8], strides = [1, 1]} : vector<32x64xf32> to vector<16x8xf32>
    %290 = tpu.transpose %288, [1, 0] : vector<16x8xf32> -> vector<8x16xf32>
    %cst_113 = arith.constant dense<0.000000e+00> : vector<8x16xf32>
    %291 = tpu.matmul %287, %290, %cst_113 {dimension_numbers = #tpu.dot_dimension_numbers<[1], [0], [0], [1], [0, 0, 1, 1], [], []>} : vector<8x8xf32>, vector<8x16xf32>, vector<8x16xf32> -> vector<8x16xf32>
    %cst_114 = arith.constant 0.353553385 : f32
    %292 = vector.broadcast %cst_114 : f32 to vector<8x16xf32>
    %293 = arith.mulf %291, %292 : vector<8x16xf32>
    %294 = arith.addf %293, %263 : vector<8x16xf32>
    %cst_115 = arith.constant dense<0xFF800000> : vector<8xf32>
    %295 = vector.multi_reduction <maximumf>, %294, %cst_115 [1] : vector<8x16xf32> to vector<8xf32>
    %296 = vector.shape_cast %295 : vector<8xf32> to vector<8x1xf32>
    %297 = vector.broadcast %296 : vector<8x1xf32> to vector<8x16xf32>
    %298 = arith.subf %294, %297 : vector<8x16xf32>
    %299 = math.exp %298 : vector<8x16xf32>
    %cst_116 = arith.constant dense<0.000000e+00> : vector<8xf32>
    %300 = vector.multi_reduction <add>, %299, %cst_116 [1] : vector<8x16xf32> to vector<8xf32>
    %301 = vector.shape_cast %300 : vector<8xf32> to vector<8x1xf32>
    %302 = tpu.reciprocal %301 {approx = true} : vector<8x1xf32> -> vector<8x1xf32>
    %303 = vector.broadcast %302 : vector<8x1xf32> to vector<8x16xf32>
    %304 = arith.mulf %299, %303 : vector<8x16xf32>
    %cst_117 = arith.constant dense<0.000000e+00> : vector<8x8xf32>
    %305 = tpu.matmul %304, %289, %cst_117 {dimension_numbers = #tpu.dot_dimension_numbers<[1], [0], [0], [1], [0, 0, 1, 1], [], []>} : vector<8x16xf32>, vector<16x8xf32>, vector<8x8xf32> -> vector<8x8xf32>
    %306 = vector.extract_strided_slice %256 {offsets = [8, 0], sizes = [8, 32], strides = [1, 1]} : vector<32x32xf32> to vector<8x32xf32>
    %cst_118 = arith.constant dense<0.000000e+00> : vector<8x32xf32>
    %307 = tpu.matmul %305, %306, %cst_118 {dimension_numbers = #tpu.dot_dimension_numbers<[1], [0], [0], [1], [0, 0, 1, 1], [], []>} : vector<8x8xf32>, vector<8x32xf32>, vector<8x32xf32> -> vector<8x32xf32>
    %308 = arith.addf %286, %307 : vector<8x32xf32>
    %309 = vector.extract_strided_slice %250 {offsets = [0, 16], sizes = [8, 8], strides = [1, 1]} : vector<16x32xf32> to vector<8x8xf32>
    %310 = vector.extract_strided_slice %255 {offsets = [0, 16], sizes = [16, 8], strides = [1, 1]} : vector<32x64xf32> to vector<16x8xf32>
    %311 = vector.extract_strided_slice %255 {offsets = [0, 48], sizes = [16, 8], strides = [1, 1]} : vector<32x64xf32> to vector<16x8xf32>
    %312 = tpu.transpose %310, [1, 0] : vector<16x8xf32> -> vector<8x16xf32>
    %cst_119 = arith.constant dense<0.000000e+00> : vector<8x16xf32>
    %313 = tpu.matmul %309, %312, %cst_119 {dimension_numbers = #tpu.dot_dimension_numbers<[1], [0], [0], [1], [0, 0, 1, 1], [], []>} : vector<8x8xf32>, vector<8x16xf32>, vector<8x16xf32> -> vector<8x16xf32>
    %cst_120 = arith.constant 0.353553385 : f32
    %314 = vector.broadcast %cst_120 : f32 to vector<8x16xf32>
    %315 = arith.mulf %313, %314 : vector<8x16xf32>
    %316 = arith.addf %315, %263 : vector<8x16xf32>
    %cst_121 = arith.constant dense<0xFF800000> : vector<8xf32>
    %317 = vector.multi_reduction <maximumf>, %316, %cst_121 [1] : vector<8x16xf32> to vector<8xf32>
    %318 = vector.shape_cast %317 : vector<8xf32> to vector<8x1xf32>
    %319 = vector.broadcast %318 : vector<8x1xf32> to vector<8x16xf32>
    %320 = arith.subf %316, %319 : vector<8x16xf32>
    %321 = math.exp %320 : vector<8x16xf32>
    %cst_122 = arith.constant dense<0.000000e+00> : vector<8xf32>
    %322 = vector.multi_reduction <add>, %321, %cst_122 [1] : vector<8x16xf32> to vector<8xf32>
    %323 = vector.shape_cast %322 : vector<8xf32> to vector<8x1xf32>
    %324 = tpu.reciprocal %323 {approx = true} : vector<8x1xf32> -> vector<8x1xf32>
    %325 = vector.broadcast %324 : vector<8x1xf32> to vector<8x16xf32>
    %326 = arith.mulf %321, %325 : vector<8x16xf32>
    %cst_123 = arith.constant dense<0.000000e+00> : vector<8x8xf32>
    %327 = tpu.matmul %326, %311, %cst_123 {dimension_numbers = #tpu.dot_dimension_numbers<[1], [0], [0], [1], [0, 0, 1, 1], [], []>} : vector<8x16xf32>, vector<16x8xf32>, vector<8x8xf32> -> vector<8x8xf32>
    %328 = vector.extract_strided_slice %256 {offsets = [16, 0], sizes = [8, 32], strides = [1, 1]} : vector<32x32xf32> to vector<8x32xf32>
    %cst_124 = arith.constant dense<0.000000e+00> : vector<8x32xf32>
    %329 = tpu.matmul %327, %328, %cst_124 {dimension_numbers = #tpu.dot_dimension_numbers<[1], [0], [0], [1], [0, 0, 1, 1], [], []>} : vector<8x8xf32>, vector<8x32xf32>, vector<8x32xf32> -> vector<8x32xf32>
    %330 = arith.addf %308, %329 : vector<8x32xf32>
    %331 = vector.extract_strided_slice %250 {offsets = [0, 24], sizes = [8, 8], strides = [1, 1]} : vector<16x32xf32> to vector<8x8xf32>
    %332 = vector.extract_strided_slice %255 {offsets = [0, 24], sizes = [16, 8], strides = [1, 1]} : vector<32x64xf32> to vector<16x8xf32>
    %333 = vector.extract_strided_slice %255 {offsets = [0, 56], sizes = [16, 8], strides = [1, 1]} : vector<32x64xf32> to vector<16x8xf32>
    %334 = tpu.transpose %332, [1, 0] : vector<16x8xf32> -> vector<8x16xf32>
    %cst_125 = arith.constant dense<0.000000e+00> : vector<8x16xf32>
    %335 = tpu.matmul %331, %334, %cst_125 {dimension_numbers = #tpu.dot_dimension_numbers<[1], [0], [0], [1], [0, 0, 1, 1], [], []>} : vector<8x8xf32>, vector<8x16xf32>, vector<8x16xf32> -> vector<8x16xf32>
    %cst_126 = arith.constant 0.353553385 : f32
    %336 = vector.broadcast %cst_126 : f32 to vector<8x16xf32>
    %337 = arith.mulf %335, %336 : vector<8x16xf32>
    %338 = arith.addf %337, %263 : vector<8x16xf32>
    %cst_127 = arith.constant dense<0xFF800000> : vector<8xf32>
    %339 = vector.multi_reduction <maximumf>, %338, %cst_127 [1] : vector<8x16xf32> to vector<8xf32>
    %340 = vector.shape_cast %339 : vector<8xf32> to vector<8x1xf32>
    %341 = vector.broadcast %340 : vector<8x1xf32> to vector<8x16xf32>
    %342 = arith.subf %338, %341 : vector<8x16xf32>
    %343 = math.exp %342 : vector<8x16xf32>
    %cst_128 = arith.constant dense<0.000000e+00> : vector<8xf32>
    %344 = vector.multi_reduction <add>, %343, %cst_128 [1] : vector<8x16xf32> to vector<8xf32>
    %345 = vector.shape_cast %344 : vector<8xf32> to vector<8x1xf32>
    %346 = tpu.reciprocal %345 {approx = true} : vector<8x1xf32> -> vector<8x1xf32>
    %347 = vector.broadcast %346 : vector<8x1xf32> to vector<8x16xf32>
    %348 = arith.mulf %343, %347 : vector<8x16xf32>
    %cst_129 = arith.constant dense<0.000000e+00> : vector<8x8xf32>
    %349 = tpu.matmul %348, %333, %cst_129 {dimension_numbers = #tpu.dot_dimension_numbers<[1], [0], [0], [1], [0, 0, 1, 1], [], []>} : vector<8x16xf32>, vector<16x8xf32>, vector<8x8xf32> -> vector<8x8xf32>
    %350 = vector.extract_strided_slice %256 {offsets = [24, 0], sizes = [8, 32], strides = [1, 1]} : vector<32x32xf32> to vector<8x32xf32>
    %cst_130 = arith.constant dense<0.000000e+00> : vector<8x32xf32>
    %351 = tpu.matmul %349, %350, %cst_130 {dimension_numbers = #tpu.dot_dimension_numbers<[1], [0], [0], [1], [0, 0, 1, 1], [], []>} : vector<8x8xf32>, vector<8x32xf32>, vector<8x32xf32> -> vector<8x32xf32>
    %352 = arith.addf %330, %351 : vector<8x32xf32>
    %c0_131 = arith.constant 0 : index
    %c0_132 = arith.constant 0 : index
    %353 = vector.load %arg31[%c0_131, %c0_132] : memref<16x32xf32, #tpu.memory_space<vmem>>, vector<8x32xf32>
    tpu.vector_store %arg31[%c0_131, %c0_132], %352 {strides = array<i32>} : memref<16x32xf32, #tpu.memory_space<vmem>>, vector<8x32xf32>,
    %c1_133 = arith.constant 1 : index
    %354 = memref.load %arg1[%c1_133] : memref<2xi32, #tpu.memory_space<smem>>
    %355 = vector.broadcast %354 : i32 to vector<8x16xi32>
    %356 = arith.cmpi sge, %257, %355 : vector<8x16xi32>
    %cst_134 = arith.constant -1.000000e+09 : f32
    %cst_135 = arith.constant 0.000000e+00 : f32
    %357 = vector.broadcast %cst_134 : f32 to vector<8x16xf32>
    %358 = vector.broadcast %cst_135 : f32 to vector<8x16xf32>
    %359 = arith.select %356, %357, %358 : vector<8x16xi1>, vector<8x16xf32>
    %cst_136 = arith.constant 0.000000e+00 : f32
    %360 = vector.broadcast %cst_136 : f32 to vector<8x32xf32>
    %361 = vector.extract_strided_slice %250 {offsets = [8, 0], sizes = [8, 8], strides = [1, 1]} : vector<16x32xf32> to vector<8x8xf32>
    %362 = vector.extract_strided_slice %255 {offsets = [16, 0], sizes = [16, 8], strides = [1, 1]} : vector<32x64xf32> to vector<16x8xf32>
    %363 = vector.extract_strided_slice %255 {offsets = [16, 32], sizes = [16, 8], strides = [1, 1]} : vector<32x64xf32> to vector<16x8xf32>
    %364 = tpu.transpose %362, [1, 0] : vector<16x8xf32> -> vector<8x16xf32>
    %cst_137 = arith.constant dense<0.000000e+00> : vector<8x16xf32>
    %365 = tpu.matmul %361, %364, %cst_137 {dimension_numbers = #tpu.dot_dimension_numbers<[1], [0], [0], [1], [0, 0, 1, 1], [], []>} : vector<8x8xf32>, vector<8x16xf32>, vector<8x16xf32> -> vector<8x16xf32>
    %cst_138 = arith.constant 0.353553385 : f32
    %366 = vector.broadcast %cst_138 : f32 to vector<8x16xf32>
    %367 = arith.mulf %365, %366 : vector<8x16xf32>
    %368 = arith.addf %367, %359 : vector<8x16xf32>
    %cst_139 = arith.constant dense<0xFF800000> : vector<8xf32>
    %369 = vector.multi_reduction <maximumf>, %368, %cst_139 [1] : vector<8x16xf32> to vector<8xf32>
    %370 = vector.shape_cast %369 : vector<8xf32> to vector<8x1xf32>
    %371 = vector.broadcast %370 : vector<8x1xf32> to vector<8x16xf32>
    %372 = arith.subf %368, %371 : vector<8x16xf32>
    %373 = math.exp %372 : vector<8x16xf32>
    %cst_140 = arith.constant dense<0.000000e+00> : vector<8xf32>
    %374 = vector.multi_reduction <add>, %373, %cst_140 [1] : vector<8x16xf32> to vector<8xf32>
    %375 = vector.shape_cast %374 : vector<8xf32> to vector<8x1xf32>
    %376 = tpu.reciprocal %375 {approx = true} : vector<8x1xf32> -> vector<8x1xf32>
    %377 = vector.broadcast %376 : vector<8x1xf32> to vector<8x16xf32>
    %378 = arith.mulf %373, %377 : vector<8x16xf32>
    %cst_141 = arith.constant dense<0.000000e+00> : vector<8x8xf32>
    %379 = tpu.matmul %378, %363, %cst_141 {dimension_numbers = #tpu.dot_dimension_numbers<[1], [0], [0], [1], [0, 0, 1, 1], [], []>} : vector<8x16xf32>, vector<16x8xf32>, vector<8x8xf32> -> vector<8x8xf32>
    %380 = vector.extract_strided_slice %256 {offsets = [0, 0], sizes = [8, 32], strides = [1, 1]} : vector<32x32xf32> to vector<8x32xf32>
    %cst_142 = arith.constant dense<0.000000e+00> : vector<8x32xf32>
    %381 = tpu.matmul %379, %380, %cst_142 {dimension_numbers = #tpu.dot_dimension_numbers<[1], [0], [0], [1], [0, 0, 1, 1], [], []>} : vector<8x8xf32>, vector<8x32xf32>, vector<8x32xf32> -> vector<8x32xf32>
    %382 = arith.addf %360, %381 : vector<8x32xf32>
    %383 = vector.extract_strided_slice %250 {offsets = [8, 8], sizes = [8, 8], strides = [1, 1]} : vector<16x32xf32> to vector<8x8xf32>
    %384 = vector.extract_strided_slice %255 {offsets = [16, 8], sizes = [16, 8], strides = [1, 1]} : vector<32x64xf32> to vector<16x8xf32>
    %385 = vector.extract_strided_slice %255 {offsets = [16, 40], sizes = [16, 8], strides = [1, 1]} : vector<32x64xf32> to vector<16x8xf32>
    %386 = tpu.transpose %384, [1, 0] : vector<16x8xf32> -> vector<8x16xf32>
    %cst_143 = arith.constant dense<0.000000e+00> : vector<8x16xf32>
    %387 = tpu.matmul %383, %386, %cst_143 {dimension_numbers = #tpu.dot_dimension_numbers<[1], [0], [0], [1], [0, 0, 1, 1], [], []>} : vector<8x8xf32>, vector<8x16xf32>, vector<8x16xf32> -> vector<8x16xf32>
    %cst_144 = arith.constant 0.353553385 : f32
    %388 = vector.broadcast %cst_144 : f32 to vector<8x16xf32>
    %389 = arith.mulf %387, %388 : vector<8x16xf32>
    %390 = arith.addf %389, %359 : vector<8x16xf32>
    %cst_145 = arith.constant dense<0xFF800000> : vector<8xf32>
    %391 = vector.multi_reduction <maximumf>, %390, %cst_145 [1] : vector<8x16xf32> to vector<8xf32>
    %392 = vector.shape_cast %391 : vector<8xf32> to vector<8x1xf32>
    %393 = vector.broadcast %392 : vector<8x1xf32> to vector<8x16xf32>
    %394 = arith.subf %390, %393 : vector<8x16xf32>
    %395 = math.exp %394 : vector<8x16xf32>
    %cst_146 = arith.constant dense<0.000000e+00> : vector<8xf32>
    %396 = vector.multi_reduction <add>, %395, %cst_146 [1] : vector<8x16xf32> to vector<8xf32>
    %397 = vector.shape_cast %396 : vector<8xf32> to vector<8x1xf32>
    %398 = tpu.reciprocal %397 {approx = true} : vector<8x1xf32> -> vector<8x1xf32>
    %399 = vector.broadcast %398 : vector<8x1xf32> to vector<8x16xf32>
    %400 = arith.mulf %395, %399 : vector<8x16xf32>
    %cst_147 = arith.constant dense<0.000000e+00> : vector<8x8xf32>
    %401 = tpu.matmul %400, %385, %cst_147 {dimension_numbers = #tpu.dot_dimension_numbers<[1], [0], [0], [1], [0, 0, 1, 1], [], []>} : vector<8x16xf32>, vector<16x8xf32>, vector<8x8xf32> -> vector<8x8xf32>
    %402 = vector.extract_strided_slice %256 {offsets = [8, 0], sizes = [8, 32], strides = [1, 1]} : vector<32x32xf32> to vector<8x32xf32>
    %cst_148 = arith.constant dense<0.000000e+00> : vector<8x32xf32>
    %403 = tpu.matmul %401, %402, %cst_148 {dimension_numbers = #tpu.dot_dimension_numbers<[1], [0], [0], [1], [0, 0, 1, 1], [], []>} : vector<8x8xf32>, vector<8x32xf32>, vector<8x32xf32> -> vector<8x32xf32>
    %404 = arith.addf %382, %403 : vector<8x32xf32>
    %405 = vector.extract_strided_slice %250 {offsets = [8, 16], sizes = [8, 8], strides = [1, 1]} : vector<16x32xf32> to vector<8x8xf32>
    %406 = vector.extract_strided_slice %255 {offsets = [16, 16], sizes = [16, 8], strides = [1, 1]} : vector<32x64xf32> to vector<16x8xf32>
    %407 = vector.extract_strided_slice %255 {offsets = [16, 48], sizes = [16, 8], strides = [1, 1]} : vector<32x64xf32> to vector<16x8xf32>
    %408 = tpu.transpose %406, [1, 0] : vector<16x8xf32> -> vector<8x16xf32>
    %cst_149 = arith.constant dense<0.000000e+00> : vector<8x16xf32>
    %409 = tpu.matmul %405, %408, %cst_149 {dimension_numbers = #tpu.dot_dimension_numbers<[1], [0], [0], [1], [0, 0, 1, 1], [], []>} : vector<8x8xf32>, vector<8x16xf32>, vector<8x16xf32> -> vector<8x16xf32>
    %cst_150 = arith.constant 0.353553385 : f32
    %410 = vector.broadcast %cst_150 : f32 to vector<8x16xf32>
    %411 = arith.mulf %409, %410 : vector<8x16xf32>
    %412 = arith.addf %411, %359 : vector<8x16xf32>
    %cst_151 = arith.constant dense<0xFF800000> : vector<8xf32>
    %413 = vector.multi_reduction <maximumf>, %412, %cst_151 [1] : vector<8x16xf32> to vector<8xf32>
    %414 = vector.shape_cast %413 : vector<8xf32> to vector<8x1xf32>
    %415 = vector.broadcast %414 : vector<8x1xf32> to vector<8x16xf32>
    %416 = arith.subf %412, %415 : vector<8x16xf32>
    %417 = math.exp %416 : vector<8x16xf32>
    %cst_152 = arith.constant dense<0.000000e+00> : vector<8xf32>
    %418 = vector.multi_reduction <add>, %417, %cst_152 [1] : vector<8x16xf32> to vector<8xf32>
    %419 = vector.shape_cast %418 : vector<8xf32> to vector<8x1xf32>
    %420 = tpu.reciprocal %419 {approx = true} : vector<8x1xf32> -> vector<8x1xf32>
    %421 = vector.broadcast %420 : vector<8x1xf32> to vector<8x16xf32>
    %422 = arith.mulf %417, %421 : vector<8x16xf32>
    %cst_153 = arith.constant dense<0.000000e+00> : vector<8x8xf32>
    %423 = tpu.matmul %422, %407, %cst_153 {dimension_numbers = #tpu.dot_dimension_numbers<[1], [0], [0], [1], [0, 0, 1, 1], [], []>} : vector<8x16xf32>, vector<16x8xf32>, vector<8x8xf32> -> vector<8x8xf32>
    %424 = vector.extract_strided_slice %256 {offsets = [16, 0], sizes = [8, 32], strides = [1, 1]} : vector<32x32xf32> to vector<8x32xf32>
    %cst_154 = arith.constant dense<0.000000e+00> : vector<8x32xf32>
    %425 = tpu.matmul %423, %424, %cst_154 {dimension_numbers = #tpu.dot_dimension_numbers<[1], [0], [0], [1], [0, 0, 1, 1], [], []>} : vector<8x8xf32>, vector<8x32xf32>, vector<8x32xf32> -> vector<8x32xf32>
    %426 = arith.addf %404, %425 : vector<8x32xf32>
    %427 = vector.extract_strided_slice %250 {offsets = [8, 24], sizes = [8, 8], strides = [1, 1]} : vector<16x32xf32> to vector<8x8xf32>
    %428 = vector.extract_strided_slice %255 {offsets = [16, 24], sizes = [16, 8], strides = [1, 1]} : vector<32x64xf32> to vector<16x8xf32>
    %429 = vector.extract_strided_slice %255 {offsets = [16, 56], sizes = [16, 8], strides = [1, 1]} : vector<32x64xf32> to vector<16x8xf32>
    %430 = tpu.transpose %428, [1, 0] : vector<16x8xf32> -> vector<8x16xf32>
    %cst_155 = arith.constant dense<0.000000e+00> : vector<8x16xf32>
    %431 = tpu.matmul %427, %430, %cst_155 {dimension_numbers = #tpu.dot_dimension_numbers<[1], [0], [0], [1], [0, 0, 1, 1], [], []>} : vector<8x8xf32>, vector<8x16xf32>, vector<8x16xf32> -> vector<8x16xf32>
    %cst_156 = arith.constant 0.353553385 : f32
    %432 = vector.broadcast %cst_156 : f32 to vector<8x16xf32>
    %433 = arith.mulf %431, %432 : vector<8x16xf32>
    %434 = arith.addf %433, %359 : vector<8x16xf32>
    %cst_157 = arith.constant dense<0xFF800000> : vector<8xf32>
    %435 = vector.multi_reduction <maximumf>, %434, %cst_157 [1] : vector<8x16xf32> to vector<8xf32>
    %436 = vector.shape_cast %435 : vector<8xf32> to vector<8x1xf32>
    %437 = vector.broadcast %436 : vector<8x1xf32> to vector<8x16xf32>
    %438 = arith.subf %434, %437 : vector<8x16xf32>
    %439 = math.exp %438 : vector<8x16xf32>
    %cst_158 = arith.constant dense<0.000000e+00> : vector<8xf32>
    %440 = vector.multi_reduction <add>, %439, %cst_158 [1] : vector<8x16xf32> to vector<8xf32>
    %441 = vector.shape_cast %440 : vector<8xf32> to vector<8x1xf32>
    %442 = tpu.reciprocal %441 {approx = true} : vector<8x1xf32> -> vector<8x1xf32>
    %443 = vector.broadcast %442 : vector<8x1xf32> to vector<8x16xf32>
    %444 = arith.mulf %439, %443 : vector<8x16xf32>
    %cst_159 = arith.constant dense<0.000000e+00> : vector<8x8xf32>
    %445 = tpu.matmul %444, %429, %cst_159 {dimension_numbers = #tpu.dot_dimension_numbers<[1], [0], [0], [1], [0, 0, 1, 1], [], []>} : vector<8x16xf32>, vector<16x8xf32>, vector<8x8xf32> -> vector<8x8xf32>
    %446 = vector.extract_strided_slice %256 {offsets = [24, 0], sizes = [8, 32], strides = [1, 1]} : vector<32x32xf32> to vector<8x32xf32>
    %cst_160 = arith.constant dense<0.000000e+00> : vector<8x32xf32>
    %447 = tpu.matmul %445, %446, %cst_160 {dimension_numbers = #tpu.dot_dimension_numbers<[1], [0], [0], [1], [0, 0, 1, 1], [], []>} : vector<8x8xf32>, vector<8x32xf32>, vector<8x32xf32> -> vector<8x32xf32>
    %448 = arith.addf %426, %447 : vector<8x32xf32>
    %c8_161 = arith.constant 8 : index
    %c0_162 = arith.constant 0 : index
    %449 = vector.load %arg31[%c8_161, %c0_162] : memref<16x32xf32, #tpu.memory_space<vmem>>, vector<8x32xf32>
    tpu.vector_store %arg31[%c8_161, %c0_162], %448 {strides = array<i32>} : memref<16x32xf32, #tpu.memory_space<vmem>>, vector<8x32xf32>,
    %c0_163 = arith.constant 0 : index
    %c0_164 = arith.constant 0 : index
    %450 = vector.load %arg31[%c0_163, %c0_164] : memref<16x32xf32, #tpu.memory_space<vmem>>, vector<16x32xf32>
    %451 = arith.addf %245, %450 : vector<16x32xf32>
    %c0_165 = arith.constant 0 : index
    %c0_166 = arith.constant 0 : index
    %452 = vector.load %arg19[%c0_165, %c0_166] : memref<1x32xf32, #tpu.memory_space<vmem>>, vector<1x32xf32>
    %453 = vector.broadcast %452 : vector<1x32xf32> to vector<16x32xf32>
    %454 = arith.addf %451, %453 : vector<16x32xf32>
    %cst_167 = arith.constant dense<0.000000e+00> : vector<16xf32>
    %455 = vector.multi_reduction <add>, %454, %cst_167 [1] : vector<16x32xf32> to vector<16xf32>
    %456 = vector.shape_cast %455 : vector<16xf32> to vector<16x1xf32>
    %cst_168 = arith.constant 3.200000e+01 : f32
    %457 = vector.broadcast %cst_168 : f32 to vector<16x1xf32>
    %458 = arith.divf %456, %457 : vector<16x1xf32>
    %459 = vector.broadcast %458 : vector<16x1xf32> to vector<16x32xf32>
    %460 = arith.subf %454, %459 : vector<16x32xf32>
    %461 = arith.mulf %460, %460 : vector<16x32xf32>
    %cst_169 = arith.constant dense<0.000000e+00> : vector<16xf32>
    %462 = vector.multi_reduction <add>, %461, %cst_169 [1] : vector<16x32xf32> to vector<16xf32>
    %463 = vector.shape_cast %462 : vector<16xf32> to vector<16x1xf32>
    %cst_170 = arith.constant 3.200000e+01 : f32
    %464 = vector.broadcast %cst_170 : f32 to vector<16x1xf32>
    %465 = arith.divf %463, %464 : vector<16x1xf32>
    %466 = vector.broadcast %458 : vector<16x1xf32> to vector<16x32xf32>
    %467 = arith.subf %454, %466 : vector<16x32xf32>
    %cst_171 = arith.constant 9.99999974E-6 : f32
    %468 = vector.broadcast %cst_171 : f32 to vector<16x1xf32>
    %469 = arith.addf %465, %468 : vector<16x1xf32>
    %470 = math.rsqrt %469 : vector<16x1xf32>
    %471 = vector.broadcast %470 : vector<16x1xf32> to vector<16x32xf32>
    %472 = arith.mulf %467, %471 : vector<16x32xf32>
    %c0_172 = arith.constant 0 : index
    %c0_173 = arith.constant 0 : index
    %473 = vector.load %arg20[%c0_172, %c0_173] : memref<1x32xf32, #tpu.memory_space<vmem>>, vector<1x32xf32>
    %474 = vector.broadcast %473 : vector<1x32xf32> to vector<16x32xf32>
    %475 = arith.mulf %472, %474 : vector<16x32xf32>
    %c0_174 = arith.constant 0 : index
    %c0_175 = arith.constant 0 : index
    %476 = vector.load %arg21[%c0_174, %c0_175] : memref<1x32xf32, #tpu.memory_space<vmem>>, vector<1x32xf32>
    %477 = vector.broadcast %476 : vector<1x32xf32> to vector<16x32xf32>
    %478 = arith.addf %475, %477 : vector<16x32xf32>
    %c0_176 = arith.constant 0 : index
    %c0_177 = arith.constant 0 : index
    %479 = vector.load %arg22[%c0_176, %c0_177] : memref<32x64xf32, #tpu.memory_space<vmem>>, vector<32x64xf32>
    %cst_178 = arith.constant dense<0.000000e+00> : vector<16x64xf32>
    %480 = tpu.matmul %478, %479, %cst_178 {dimension_numbers = #tpu.dot_dimension_numbers<[1], [0], [0], [1], [0, 0, 1, 1], [], []>} : vector<16x32xf32>, vector<32x64xf32>, vector<16x64xf32> -> vector<16x64xf32>
    %c0_179 = arith.constant 0 : index
    %c0_180 = arith.constant 0 : index
    %481 = vector.load %arg23[%c0_179, %c0_180] : memref<1x64xf32, #tpu.memory_space<vmem>>, vector<1x64xf32>
    %482 = vector.broadcast %481 : vector<1x64xf32> to vector<16x64xf32>
    %483 = arith.addf %480, %482 : vector<16x64xf32>
    %cst_181 = arith.constant 0.000000e+00 : f32
    %484 = vector.broadcast %cst_181 : f32 to vector<16x64xf32>
    %485 = arith.maximumf %483, %484 : vector<16x64xf32>
    %c0_182 = arith.constant 0 : index
    %c0_183 = arith.constant 0 : index
    %486 = vector.load %arg24[%c0_182, %c0_183] : memref<64x32xf32, #tpu.memory_space<vmem>>, vector<64x32xf32>
    %cst_184 = arith.constant dense<0.000000e+00> : vector<16x32xf32>
    %487 = tpu.matmul %485, %486, %cst_184 {dimension_numbers = #tpu.dot_dimension_numbers<[1], [0], [0], [1], [0, 0, 1, 1], [], []>} : vector<16x64xf32>, vector<64x32xf32>, vector<16x32xf32> -> vector<16x32xf32>
    %488 = arith.addf %478, %487 : vector<16x32xf32>
    %c0_185 = arith.constant 0 : index
    %c0_186 = arith.constant 0 : index
    %489 = vector.load %arg25[%c0_185, %c0_186] : memref<1x32xf32, #tpu.memory_space<vmem>>, vector<1x32xf32>
    %490 = vector.broadcast %489 : vector<1x32xf32> to vector<16x32xf32>
    %491 = arith.addf %488, %490 : vector<16x32xf32>
    %cst_187 = arith.constant dense<0.000000e+00> : vector<16xf32>
    %492 = vector.multi_reduction <add>, %491, %cst_187 [1] : vector<16x32xf32> to vector<16xf32>
    %493 = vector.shape_cast %492 : vector<16xf32> to vector<16x1xf32>
    %cst_188 = arith.constant 3.200000e+01 : f32
    %494 = vector.broadcast %cst_188 : f32 to vector<16x1xf32>
    %495 = arith.divf %493, %494 : vector<16x1xf32>
    %496 = vector.broadcast %495 : vector<16x1xf32> to vector<16x32xf32>
    %497 = arith.subf %491, %496 : vector<16x32xf32>
    %498 = arith.mulf %497, %497 : vector<16x32xf32>
    %cst_189 = arith.constant dense<0.000000e+00> : vector<16xf32>
    %499 = vector.multi_reduction <add>, %498, %cst_189 [1] : vector<16x32xf32> to vector<16xf32>
    %500 = vector.shape_cast %499 : vector<16xf32> to vector<16x1xf32>
    %cst_190 = arith.constant 3.200000e+01 : f32
    %501 = vector.broadcast %cst_190 : f32 to vector<16x1xf32>
    %502 = arith.divf %500, %501 : vector<16x1xf32>
    %503 = vector.broadcast %495 : vector<16x1xf32> to vector<16x32xf32>
    %504 = arith.subf %491, %503 : vector<16x32xf32>
    %cst_191 = arith.constant 9.99999974E-6 : f32
    %505 = vector.broadcast %cst_191 : f32 to vector<16x1xf32>
    %506 = arith.addf %502, %505 : vector<16x1xf32>
    %507 = math.rsqrt %506 : vector<16x1xf32>
    %508 = vector.broadcast %507 : vector<16x1xf32> to vector<16x32xf32>
    %509 = arith.mulf %504, %508 : vector<16x32xf32>
    %c0_192 = arith.constant 0 : index
    %c0_193 = arith.constant 0 : index
    %510 = vector.load %arg26[%c0_192, %c0_193] : memref<1x32xf32, #tpu.memory_space<vmem>>, vector<1x32xf32>
    %511 = vector.broadcast %510 : vector<1x32xf32> to vector<16x32xf32>
    %512 = arith.mulf %509, %511 : vector<16x32xf32>
    %c0_194 = arith.constant 0 : index
    %c0_195 = arith.constant 0 : index
    %513 = vector.load %arg27[%c0_194, %c0_195] : memref<1x32xf32, #tpu.memory_space<vmem>>, vector<1x32xf32>
    %514 = vector.broadcast %513 : vector<1x32xf32> to vector<16x32xf32>
    %515 = arith.addf %512, %514 : vector<16x32xf32>
    %c0_196 = arith.constant 0 : index
    %c0_197 = arith.constant 0 : index
    %516 = vector.load %arg28[%c0_196, %c0_197] : memref<32x128xf32, #tpu.memory_space<vmem>>, vector<32x128xf32>
    %cst_198 = arith.constant dense<0.000000e+00> : vector<16x128xf32>
    %517 = tpu.matmul %515, %516, %cst_198 {dimension_numbers = #tpu.dot_dimension_numbers<[1], [0], [0], [1], [0, 0, 1, 1], [], []>} : vector<16x32xf32>, vector<32x128xf32>, vector<16x128xf32> -> vector<16x128xf32>
    %c0_199 = arith.constant 0 : index
    %c0_200 = arith.constant 0 : index
    %518 = vector.load %arg29[%c0_199, %c0_200] : memref<1x128xf32, #tpu.memory_space<vmem>>, vector<1x128xf32>
    %519 = vector.broadcast %518 : vector<1x128xf32> to vector<16x128xf32>
    %520 = arith.addf %517, %519 : vector<16x128xf32>
    %c0_201 = arith.constant 0 : index
    %c0_202 = arith.constant 0 : index
    %521 = vector.load %arg30[%c0_201, %c0_202] : memref<16x128xf32, #tpu.memory_space<vmem>>, vector<16x128xf32>
    tpu.vector_store %arg30[%c0_201, %c0_202], %520 {strides = array<i32>} : memref<16x128xf32, #tpu.memory_space<vmem>>, vector<16x128xf32>,
    return
  }
}

</mosaic_0001>

<llo_original>
// kernel: hmer_forward.1
$region0: #{hmer_forward.1}
  #allocation0 [shape = 'u32[]', space=smem, size = 0x4, offset = 0x4, fixed_abs, tag = 'smem constant byte address 0x4 - core index']
  #allocation1 [shape = 'u32[72,128]{1,0:T(1,128)}', space=vmem, size = 0x9000, scoped, tag = 'internal scratch']
  #allocation2 [shape = 'f32[16,32]{1,0:T(8,128)}', space=vmem, size = 0x2000, scoped, tag = 'scratch operand']
  %s0 = inlined_call_operand.smem [shape: u32[31], index: -1, kind: input, shape index: {}]
  %s1 = sld [smem:[%s0]]
  %s2 = scalar_lea.smem %s0, 1
  %s3 = sld [smem:[%s2]]
  %s4 = scalar_lea.smem %s0, 2
  %s5 = sld [smem:[%s4]]
  %s6 = scalar_lea.smem %s0, 3
  %s7 = sld [smem:[%s6]]
  %s8 = scalar_lea.smem %s0, 4
  %s9 = sld [smem:[%s8]]
  %s10 = scalar_lea.smem %s0, 5
  %s11 = sld [smem:[%s10]]
  %s12 = scalar_lea.smem %s0, 6
  %s13 = sld [smem:[%s12]]
  %s14 = scalar_lea.smem %s0, 7
  %s15 = sld [smem:[%s14]]
  %s16 = scalar_lea.smem %s0, 8
  %s17 = sld [smem:[%s16]]
  %s18 = scalar_lea.smem %s0, 9
  %s19 = sld [smem:[%s18]]
  %s20 = scalar_lea.smem %s0, 10
  %s21 = sld [smem:[%s20]]
  %s22 = scalar_lea.smem %s0, 11
  %s23 = sld [smem:[%s22]]
  %s24 = scalar_lea.smem %s0, 12
  %s25 = sld [smem:[%s24]]
  %s26 = scalar_lea.smem %s0, 13
  %s27 = sld [smem:[%s26]]
  %s28 = scalar_lea.smem %s0, 14
  %s29 = sld [smem:[%s28]]
  %s30 = scalar_lea.smem %s0, 15
  %s31 = sld [smem:[%s30]]
  %s32 = scalar_lea.smem %s0, 16
  %s33 = sld [smem:[%s32]]
  %s34 = scalar_lea.smem %s0, 17
  %s35 = sld [smem:[%s34]]
  %s36 = scalar_lea.smem %s0, 18
  %s37 = sld [smem:[%s36]]
  %s38 = scalar_lea.smem %s0, 19
  %s39 = sld [smem:[%s38]]
  %s40 = scalar_lea.smem %s0, 20
  %s41 = sld [smem:[%s40]]
  %s42 = scalar_lea.smem %s0, 21
  %s43 = sld [smem:[%s42]]
  %s44 = scalar_lea.smem %s0, 22
  %s45 = sld [smem:[%s44]]
  %s46 = scalar_lea.smem %s0, 23
  %s47 = sld [smem:[%s46]]
  %s48 = scalar_lea.smem %s0, 24
  %s49 = sld [smem:[%s48]]
  %s50 = scalar_lea.smem %s0, 25
  %s51 = sld [smem:[%s50]]
  %s52 = scalar_lea.smem %s0, 26
  %s53 = sld [smem:[%s52]]
  %s54 = scalar_lea.smem %s0, 27
  %s55 = sld [smem:[%s54]]
  %s56 = scalar_lea.smem %s0, 28
  %s57 = sld [smem:[%s56]]
  %s58 = scalar_lea.smem %s0, 29
  %s59 = sld [smem:[%s58]]
  %s60 = scalar_lea.smem %s0, 30
  %s61 = sld [smem:[%s60]]
  %s62 = sld [smem:[#allocation0]]
  $region138: #{hmer_forward.1} parent=0
    _
  %s64 = ssub.s32 1, %s62
  %s65 = scalar_select 0, %s64, %s62
  $region1: #{hmer_forward.1} parent=0
    #allocation3 [shape = 'u8[512]{0}', space=smem, size = 0x200, scoped, tag = 'input window, operand 0, single buffered']
    #allocation4 [shape = 's32[1]{0}', space=sflag, size = 0x4, scoped, tag = 'scoped memory for hmer_forward.1']
    #allocation5 [shape = 'u8[512]{0}', space=smem, size = 0x200, scoped, tag = 'input window, operand 1, single buffered']
    #allocation6 [shape = 's32[1]{0}', space=sflag, size = 0x4, scoped, tag = 'scoped memory for hmer_forward.1']
    %66 = vsyncpa [#allocation4], 0
    %67 = vsyncpa [#allocation6], 0
    // Predicated region
    $region2: #{hmer_forward.1} parent=1 // pred_check
      _
    $region3: #{hmer_forward.1} parent=1 // pred_check_branch
      %69 = sbr.rel (0) target = $region5
    $region4: #{hmer_forward.1} parent=1 // pred_region
      %71 = vsyncadd [#allocation4], 0
      %s73 = sshll.u32 %s1, 4
      %s74 = int_to_ptr.vmem [resolvable:$true] %s73
      %76 = dma.vmem_to_smem %s74, 16, [#allocation3], [#allocation4]
    $region5: #{hmer_forward.1} parent=1 // pred_fallthru
      _
    // Predicated region
    $region6: #{hmer_forward.1} parent=1 // pred_check
      _
    $region7: #{hmer_forward.1} parent=1 // pred_check_branch
      %78 = sbr.rel (0) target = $region9
    $region8: #{hmer_forward.1} parent=1 // pred_region
      %80 = vsyncadd [#allocation6], 0
      %s82 = sshll.u32 %s3, 4
      %s83 = int_to_ptr.vmem [resolvable:$true] %s82
      %85 = dma.vmem_to_smem %s83, 16, [#allocation5], [#allocation6]
    $region9: #{hmer_forward.1} parent=1 // pred_fallthru
      _
    // Predicated region
    $region10: #{hmer_forward.1} parent=1 // pred_check
      _
    $region11: #{hmer_forward.1} parent=1 // pred_check_branch
      %87 = sbr.rel (0) target = $region13
    $region12: #{hmer_forward.1} parent=1 // pred_region
      _
    $region13: #{hmer_forward.1} parent=1 // pred_fallthru
      _
    // Predicated region
    $region14: #{hmer_forward.1} parent=1 // pred_check
      _
    $region15: #{hmer_forward.1} parent=1 // pred_check_branch
      %89 = sbr.rel (0) target = $region17
    $region16: #{hmer_forward.1} parent=1 // pred_region
      _
    $region17: #{hmer_forward.1} parent=1 // pred_fallthru
      _
    // Predicated region
    $region18: #{hmer_forward.1} parent=1 // pred_check
      _
    $region19: #{hmer_forward.1} parent=1 // pred_check_branch
      %91 = sbr.rel (0) target = $region21
    $region20: #{hmer_forward.1} parent=1 // pred_region
      _
    $region21: #{hmer_forward.1} parent=1 // pred_fallthru
      _
    // Predicated region
    $region22: #{hmer_forward.1} parent=1 // pred_check
      _
    $region23: #{hmer_forward.1} parent=1 // pred_check_branch
      %93 = sbr.rel (0) target = $region25
    $region24: #{hmer_forward.1} parent=1 // pred_region
      _
    $region25: #{hmer_forward.1} parent=1 // pred_fallthru
      _
    // Predicated region
    $region26: #{hmer_forward.1} parent=1 // pred_check
      _
    $region27: #{hmer_forward.1} parent=1 // pred_check_branch
      %95 = sbr.rel (0) target = $region29
    $region28: #{hmer_forward.1} parent=1 // pred_region
      _
    $region29: #{hmer_forward.1} parent=1 // pred_fallthru
      _
    // Predicated region
    $region30: #{hmer_forward.1} parent=1 // pred_check
      _
    $region31: #{hmer_forward.1} parent=1 // pred_check_branch
      %97 = sbr.rel (0) target = $region33
    $region32: #{hmer_forward.1} parent=1 // pred_region
      _
    $region33: #{hmer_forward.1} parent=1 // pred_fallthru
      _
    // Predicated region
    $region34: #{hmer_forward.1} parent=1 // pred_check
      _
    $region35: #{hmer_forward.1} parent=1 // pred_check_branch
      %99 = sbr.rel (0) target = $region37
    $region36: #{hmer_forward.1} parent=1 // pred_region
      _
    $region37: #{hmer_forward.1} parent=1 // pred_fallthru
      _
    // Predicated region
    $region38: #{hmer_forward.1} parent=1 // pred_check
      _
    $region39: #{hmer_forward.1} parent=1 // pred_check_branch
      %101 = sbr.rel (0) target = $region41
    $region40: #{hmer_forward.1} parent=1 // pred_region
      _
    $region41: #{hmer_forward.1} parent=1 // pred_fallthru
      _
    // Predicated region
    $region42: #{hmer_forward.1} parent=1 // pred_check
      _
    $region43: #{hmer_forward.1} parent=1 // pred_check_branch
      %103 = sbr.rel (0) target = $region45
    $region44: #{hmer_forward.1} parent=1 // pred_region
      _
    $region45: #{hmer_forward.1} parent=1 // pred_fallthru
      _
    // Predicated region
    $region46: #{hmer_forward.1} parent=1 // pred_check
      _
    $region47: #{hmer_forward.1} parent=1 // pred_check_branch
      %105 = sbr.rel (0) target = $region49
    $region48: #{hmer_forward.1} parent=1 // pred_region
      _
    $region49: #{hmer_forward.1} parent=1 // pred_fallthru
      _
    // Predicated region
    $region50: #{hmer_forward.1} parent=1 // pred_check
      _
    $region51: #{hmer_forward.1} parent=1 // pred_check_branch
      %107 = sbr.rel (0) target = $region53
    $region52: #{hmer_forward.1} parent=1 // pred_region
      _
    $region53: #{hmer_forward.1} parent=1 // pred_fallthru
      _
    // Predicated region
    $region54: #{hmer_forward.1} parent=1 // pred_check
      _
    $region55: #{hmer_forward.1} parent=1 // pred_check_branch
      %109 = sbr.rel (0) target = $region57
    $region56: #{hmer_forward.1} parent=1 // pred_region
      _
    $region57: #{hmer_forward.1} parent=1 // pred_fallthru
      _
    // Predicated region
    $region58: #{hmer_forward.1} parent=1 // pred_check
      _
    $region59: #{hmer_forward.1} parent=1 // pred_check_branch
      %111 = sbr.rel (0) target = $region61
    $region60: #{hmer_forward.1} parent=1 // pred_region
      _
    $region61: #{hmer_forward.1} parent=1 // pred_fallthru
      _
    // Predicated region
    $region62: #{hmer_forward.1} parent=1 // pred_check
      _
    $region63: #{hmer_forward.1} parent=1 // pred_check_branch
      %113 = sbr.rel (0) target = $region65
    $region64: #{hmer_forward.1} parent=1 // pred_region
      _
    $region65: #{hmer_forward.1} parent=1 // pred_fallthru
      _
    // Predicated region
    $region66: #{hmer_forward.1} parent=1 // pred_check
      _
    $region67: #{hmer_forward.1} parent=1 // pred_check_branch
      %115 = sbr.rel (0) target = $region69
    $region68: #{hmer_forward.1} parent=1 // pred_region
      _
    $region69: #{hmer_forward.1} parent=1 // pred_fallthru
      _
    // Predicated region
    $region70: #{hmer_forward.1} parent=1 // pred_check
      _
    $region71: #{hmer_forward.1} parent=1 // pred_check_branch
      %117 = sbr.rel (0) target = $region73
    $region72: #{hmer_forward.1} parent=1 // pred_region
      _
    $region73: #{hmer_forward.1} parent=1 // pred_fallthru
      _
    // Predicated region
    $region74: #{hmer_forward.1} parent=1 // pred_check
      _
    $region75: #{hmer_forward.1} parent=1 // pred_check_branch
      %119 = sbr.rel (0) target = $region77
    $region76: #{hmer_forward.1} parent=1 // pred_region
      _
    $region77: #{hmer_forward.1} parent=1 // pred_fallthru
      _
    // Predicated region
    $region78: #{hmer_forward.1} parent=1 // pred_check
      _
    $region79: #{hmer_forward.1} parent=1 // pred_check_branch
      %121 = sbr.rel (0) target = $region81
    $region80: #{hmer_forward.1} parent=1 // pred_region
      _
    $region81: #{hmer_forward.1} parent=1 // pred_fallthru
      _
    // Predicated region
    $region82: #{hmer_forward.1} parent=1 // pred_check
      _
    $region83: #{hmer_forward.1} parent=1 // pred_check_branch
      %123 = sbr.rel (0) target = $region85
    $region84: #{hmer_forward.1} parent=1 // pred_region
      _
    $region85: #{hmer_forward.1} parent=1 // pred_fallthru
      _
    // Predicated region
    $region86: #{hmer_forward.1} parent=1 // pred_check
      _
    $region87: #{hmer_forward.1} parent=1 // pred_check_branch
      %125 = sbr.rel (0) target = $region89
    $region88: #{hmer_forward.1} parent=1 // pred_region
      _
    $region89: #{hmer_forward.1} parent=1 // pred_fallthru
      _
    // Predicated region
    $region90: #{hmer_forward.1} parent=1 // pred_check
      _
    $region91: #{hmer_forward.1} parent=1 // pred_check_branch
      %127 = sbr.rel (0) target = $region93
    $region92: #{hmer_forward.1} parent=1 // pred_region
      _
    $region93: #{hmer_forward.1} parent=1 // pred_fallthru
      _
    // Predicated region
    $region94: #{hmer_forward.1} parent=1 // pred_check
      _
    $region95: #{hmer_forward.1} parent=1 // pred_check_branch
      %129 = sbr.rel (0) target = $region97
    $region96: #{hmer_forward.1} parent=1 // pred_region
      _
    $region97: #{hmer_forward.1} parent=1 // pred_fallthru
      _
    // Predicated region
    $region98: #{hmer_forward.1} parent=1 // pred_check
      _
    $region99: #{hmer_forward.1} parent=1 // pred_check_branch
      %131 = sbr.rel (0) target = $region101
    $region100: #{hmer_forward.1} parent=1 // pred_region
      _
    $region101: #{hmer_forward.1} parent=1 // pred_fallthru
      _
    // Predicated region
    $region102: #{hmer_forward.1} parent=1 // pred_check
      _
    $region103: #{hmer_forward.1} parent=1 // pred_check_branch
      %133 = sbr.rel (0) target = $region105
    $region104: #{hmer_forward.1} parent=1 // pred_region
      _
    $region105: #{hmer_forward.1} parent=1 // pred_fallthru
      _
    // Predicated region
    $region106: #{hmer_forward.1} parent=1 // pred_check
      _
    $region107: #{hmer_forward.1} parent=1 // pred_check_branch
      %135 = sbr.rel (0) target = $region109
    $region108: #{hmer_forward.1} parent=1 // pred_region
      _
    $region109: #{hmer_forward.1} parent=1 // pred_fallthru
      _
    // Predicated region
    $region110: #{hmer_forward.1} parent=1 // pred_check
      _
    $region111: #{hmer_forward.1} parent=1 // pred_check_branch
      %137 = sbr.rel (0) target = $region113
    $region112: #{hmer_forward.1} parent=1 // pred_region
      _
    $region113: #{hmer_forward.1} parent=1 // pred_fallthru
      _
    // Predicated region
    $region114: #{hmer_forward.1} parent=1 // pred_check
      _
    $region115: #{hmer_forward.1} parent=1 // pred_check_branch
      %139 = sbr.rel (0) target = $region117
    $region116: #{hmer_forward.1} parent=1 // pred_region
      _
    $region117: #{hmer_forward.1} parent=1 // pred_fallthru
      _
    // Predicated region
    $region118: #{hmer_forward.1} parent=1 // pred_check
      _
    $region119: #{hmer_forward.1} parent=1 // pred_check_branch
      %141 = sbr.rel (0) target = $region121
    $region120: #{hmer_forward.1} parent=1 // pred_region
      _
    $region121: #{hmer_forward.1} parent=1 // pred_fallthru
      _
    // Predicated region
    $region122: #{hmer_forward.1} parent=1 // pred_check
      _
    $region123: #{hmer_forward.1} parent=1 // pred_check_branch
      %143 = sbr.rel (0) target = $region125
    $region124: #{hmer_forward.1} parent=1 // pred_region
      %145 = dma.done [#allocation4], 16
    $region125: #{hmer_forward.1} parent=1 // pred_fallthru
      _
    // Predicated region
    $region126: #{hmer_forward.1} parent=1 // pred_check
      _
    $region127: #{hmer_forward.1} parent=1 // pred_check_branch
      %147 = sbr.rel (0) target = $region129
    $region128: #{hmer_forward.1} parent=1 // pred_region
      %149 = dma.done [#allocation6], 16
    $region129: #{hmer_forward.1} parent=1 // pred_fallthru
      _
    %150 = sfence
    %v151 = vld [vmem:[%s7] sm:$0xff]
    %v152 = vld [vmem:[%s7 + $0x8] sm:$0xff]
    %v153 = vld [vmem:[%s7 + $0x10] sm:$0xff]
    %v154 = vld [vmem:[%s7 + $0x18] sm:$0xff]
    %v155 = vld [vmem:[%s9] sm:$0xff]
    %v156 = vld [vmem:[%s11] sm:$0x1]
    %v158 = vperm.slane %v156, 0
    %vm160 = vcmask 64512
    %v162 = vsel %vm160, %v151, 0
    %v165 = vsel %vm160, %v152, 0
    %v168 = vsel %vm160, %v153, 0
    %v171 = vsel %vm160, %v154, 0
    %173 = vmatpush.msra.mxu0 0.0
    %174 = vmatpush.msra.mxu0 0.0
    %175 = vmatpush.msra.mxu0 0.0
    %176 = vmatpush.msra.mxu0 0.0
    %177 = vmatpush.msra.mxu0 0.0
    %178 = vmatpush.msra.mxu0 0.0
    %179 = vmatpush.msra.mxu0 0.0
    %180 = vmatpush.msra.mxu0 0.0
    %181 = vmatpush.msra.mxu0 0.0
    %182 = vmatpush.msra.mxu0 0.0
    %183 = vmatpush.msra.mxu0 0.0
    %184 = vmatpush.msra.mxu0 0.0
    %185 = vmatpush.msra.mxu0 0.0
    %186 = vmatpush.msra.mxu0 0.0
    %187 = vmatpush.msra.mxu0 0.0
    %188 = vmatpush.msra.mxu0 %v155
    %189 = vmatmul.f32.gmra.mxu0 %v162
    %v190 = vpop.f32.mrf.mxu0
    %v191 = vadd.f32 %v158, %v190
    %192 = vmatmul.f32.gmra.mxu0 %v165
    %v193 = vpop.f32.mrf.mxu0
    %v194 = vadd.f32 %v158, %v193
    %195 = vmatmul.f32.gmra.mxu0 %v168
    %v196 = vpop.f32.mrf.mxu0
    %v197 = vadd.f32 %v158, %v196
    %198 = vmatmul.f32.gmra.mxu0 %v171
    %v199 = vpop.f32.mrf.mxu0
    %v200 = vadd.f32 %v158, %v199
    %201 = vdwg.mxu0
    %v202 = vmax.f32 %v191, 0.0
    %v203 = vmax.f32 %v194, 0.0
    %v204 = vmax.f32 %v197, 0.0
    %v205 = vmax.f32 %v200, 0.0
    %v206 = vld [vmem:[%s13] sm:$0xff]
    %v207 = vld [vmem:[%s13 + $0x8] sm:$0xff]
    %v208 = vld [vmem:[%s13 + $0x10] sm:$0xff]
    %v209 = vld [vmem:[%s13 + $0x18] sm:$0xff]
    %v210 = vld [vmem:[%s15] sm:$0x1]
    %v212 = vperm.slane %v210, 0
    %vm214 = vcmask 261120
    %v216 = vsel %vm214, %v202, 0
    %v219 = vsel %vm214, %v203, 0
    %v222 = vsel %vm214, %v204, 0
    %v225 = vsel %vm214, %v205, 0
    %227 = vmatpush.msra.mxu0 0.0
    %228 = vmatpush.msra.mxu0 0.0
    %229 = vmatpush.msra.mxu0 0.0
    %230 = vmatpush.msra.mxu0 0.0
    %231 = vmatpush.msra.mxu0 0.0
    %232 = vmatpush.msra.mxu0 0.0
    %233 = vmatpush.msra.mxu0 0.0
    %234 = vmatpush.msra.mxu0 0.0
    %235 = vmatpush.msra.mxu0 0.0
    %236 = vmatpush.msra.mxu0 0.0
    %237 = vmatpush.msra.mxu0 0.0
    %238 = vmatpush.msra.mxu0 0.0
    %239 = vmatpush.msra.mxu0 %v209
    %240 = vmatpush.msra.mxu0 %v208
    %241 = vmatpush.msra.mxu0 %v207
    %242 = vmatpush.msra.mxu0 %v206
    %243 = vmatmul.f32.gmra.mxu0 %v216
    %v244 = vpop.f32.mrf.mxu0
    %v245 = vadd.f32 %v212, %v244
    %246 = vmatmul.f32.gmra.mxu0 %v219
    %v247 = vpop.f32.mrf.mxu0
    %v248 = vadd.f32 %v212, %v247
    %249 = vmatmul.f32.gmra.mxu0 %v222
    %v250 = vpop.f32.mrf.mxu0
    %v251 = vadd.f32 %v212, %v250
    %252 = vmatmul.f32.gmra.mxu0 %v225
    %v253 = vpop.f32.mrf.mxu0
    %v254 = vadd.f32 %v212, %v253
    %255 = vdwg.mxu0
    %v256 = vld [vmem:[%s5] sm:$0xff]
    %v257 = vld [vmem:[%s5 + $0x8] sm:$0xff]
    %v258 = vld [vmem:[%s17] sm:$0xff]
    %v259 = vld [vmem:[%s17 + $0x8] sm:$0xff]
    %v260 = vld [vmem:[%s17 + $0x10] sm:$0xff]
    %v261 = vld [vmem:[%s17 + $0x18] sm:$0xff]
    %v262 = vld [vmem:[%s19] sm:$0x1]
    %v264 = vperm.slane %v262, 0
    %v267 = vsel %vm214, %v256, 0
    %v270 = vsel %vm214, %v257, 0
    %272 = vmatpush.msra.mxu0 0.0
    %273 = vmatpush.msra.mxu0 0.0
    %274 = vmatpush.msra.mxu0 0.0
    %275 = vmatpush.msra.mxu0 0.0
    %276 = vmatpush.msra.mxu0 0.0
    %277 = vmatpush.msra.mxu0 0.0
    %278 = vmatpush.msra.mxu0 0.0
    %279 = vmatpush.msra.mxu0 0.0
    %280 = vmatpush.msra.mxu0 0.0
    %281 = vmatpush.msra.mxu0 0.0
    %282 = vmatpush.msra.mxu0 0.0
    %283 = vmatpush.msra.mxu0 0.0
    %284 = vmatpush.msra.mxu0 %v261
    %285 = vmatpush.msra.mxu0 %v260
    %286 = vmatpush.msra.mxu0 %v259
    %287 = vmatpush.msra.mxu0 %v258
    %288 = vmatmul.f32.gmra.mxu0 %v267
    %v289 = vpop.f32.mrf.mxu0
    %v290 = vadd.f32 %v264, %v289
    %291 = vmatmul.f32.gmra.mxu0 %v270
    %v292 = vpop.f32.mrf.mxu0
    %v293 = vadd.f32 %v264, %v292
    %294 = vdwg.mxu0
    %v295 = vld [vmem:[%s21] sm:$0xff]
    %v296 = vld [vmem:[%s21 + $0x8] sm:$0xff]
    %v297 = vld [vmem:[%s21 + $0x10] sm:$0xff]
    %v298 = vld [vmem:[%s21 + $0x18] sm:$0xff]
    %v299 = vlaneseq
    %v300 = vshrl.u32 %v299, 7
    %v301 = vlaneseq
    %v302 = vand.u32 %v301, 127
    %vm303 = vcmp.gt.s32.totalorder %v302, %v300
    %s304 = sld [smem:[#allocation3]]
    %v305 = vstv %s304
    %vm306 = vcmp.ge.s32.totalorder %v302, %v305
    %vm307 = vmor %vm303, %vm306
    %v308 = vsel %vm307, -1e+09, 0.0
    %310 = vrot.lane.b32.xlu0 %v290, 96
    %v311 = vpop.permute.xlu0 %310
    %v312 = vsel %vm160, %v290, 0
    %v314 = vsel %vm160, %v311, 0
    %316 = vmatpush.xpose.msra.mxu0 0.0
    %317 = vmatpush.xpose.msra.mxu0 0.0
    %318 = vmatpush.xpose.msra.mxu0 0.0
    %319 = vmatpush.xpose.msra.mxu0 0.0
    %320 = vmatpush.xpose.msra.mxu0 0.0
    %321 = vmatpush.xpose.msra.mxu0 0.0
    %322 = vmatpush.xpose.msra.mxu0 0.0
    %323 = vmatpush.xpose.msra.mxu0 0.0
    %324 = vmatpush.xpose.msra.mxu0 0.0
    %325 = vmatpush.xpose.msra.mxu0 0.0
    %326 = vmatpush.xpose.msra.mxu0 0.0
    %327 = vmatpush.xpose.msra.mxu0 0.0
    %328 = vmatpush.xpose.msra.mxu0 0.0
    %329 = vmatpush.xpose.msra.mxu0 0.0
    %330 = vmatpush.xpose.msra.mxu0 0.0
    %331 = vmatpush.xpose.msra.mxu0 %v314
    %332 = vmatmul.f32.gmra.mxu0 %v312
    %v333 = vpop.f32.mrf.mxu0
    %v334 = vadd.f32 0.0, %v333
    %335 = vdwg.mxu0
    %v336 = vmul.f32 %v334, 0.35355338
    %v337 = vadd.f32 %v336, %v308
    %v338 = vsel %vm160, %v337, -inf
    %339 = vmax.xlane.f32.xlu0 %v338
    %v340 = vpop.xlane.xlu0 %339
    %v341 = vsub.f32 %v337, %v340
    %v342 = vmul.f32 %v341, 1.442695
    %v343 = vpow.pop %v342
    %v344 = vsel %vm160, %v343, 0.0
    %345 = vadd.xlane.f32.xlu0 %v344
    %v346 = vpop.xlane.xlu0 %345
    %v347 = vrcp.pop %v346
    %v348 = vmul.f32 %v343, %v347
    %349 = vrot.lane.b32.xlu0 %v290, 64
    %v350 = vpop.permute.xlu0 %349
    %v353 = vsel %vm160, %v348, 0
    %355 = vmatpush.msra.mxu0 0.0
    %356 = vmatpush.msra.mxu0 0.0
    %357 = vmatpush.msra.mxu0 0.0
    %358 = vmatpush.msra.mxu0 0.0
    %359 = vmatpush.msra.mxu0 0.0
    %360 = vmatpush.msra.mxu0 0.0
    %361 = vmatpush.msra.mxu0 0.0
    %362 = vmatpush.msra.mxu0 0.0
    %363 = vmatpush.msra.mxu0 0.0
    %364 = vmatpush.msra.mxu0 0.0
    %365 = vmatpush.msra.mxu0 0.0
    %366 = vmatpush.msra.mxu0 0.0
    %367 = vmatpush.msra.mxu0 0.0
    %368 = vmatpush.msra.mxu0 0.0
    %369 = vmatpush.msra.mxu0 0.0
    %370 = vmatpush.msra.mxu0 %v350
    %371 = vmatmul.f32.gmra.mxu0 %v353
    %v372 = vpop.f32.mrf.mxu0
    %v373 = vadd.f32 0.0, %v372
    %374 = vdwg.mxu0
    %375 = vrot.lane.b32.xlu0 %v290, 120
    %v376 = vpop.permute.xlu0 %375
    %377 = vrot.lane.b32.xlu0 %v290, 88
    %v378 = vpop.permute.xlu0 %377
    %v379 = vsel %vm160, %v376, 0
    %v381 = vsel %vm160, %v378, 0
    %383 = vmatpush.xpose.msra.mxu0 0.0
    %384 = vmatpush.xpose.msra.mxu0 0.0
    %385 = vmatpush.xpose.msra.mxu0 0.0
    %386 = vmatpush.xpose.msra.mxu0 0.0
    %387 = vmatpush.xpose.msra.mxu0 0.0
    %388 = vmatpush.xpose.msra.mxu0 0.0
    %389 = vmatpush.xpose.msra.mxu0 0.0
    %390 = vmatpush.xpose.msra.mxu0 0.0
    %391 = vmatpush.xpose.msra.mxu0 0.0
    %392 = vmatpush.xpose.msra.mxu0 0.0
    %393 = vmatpush.xpose.msra.mxu0 0.0
    %394 = vmatpush.xpose.msra.mxu0 0.0
    %395 = vmatpush.xpose.msra.mxu0 0.0
    %396 = vmatpush.xpose.msra.mxu0 0.0
    %397 = vmatpush.xpose.msra.mxu0 0.0
    %398 = vmatpush.xpose.msra.mxu0 %v381
    %399 = vmatmul.f32.gmra.mxu0 %v379
    %v400 = vpop.f32.mrf.mxu0
    %v401 = vadd.f32 0.0, %v400
    %402 = vdwg.mxu0
    %v403 = vmul.f32 %v401, 0.35355338
    %v404 = vadd.f32 %v403, %v308
    %v405 = vsel %vm160, %v404, -inf
    %406 = vmax.xlane.f32.xlu0 %v405
    %v407 = vpop.xlane.xlu0 %406
    %v408 = vsub.f32 %v404, %v407
    %v409 = vmul.f32 %v408, 1.442695
    %v410 = vpow.pop %v409
    %v411 = vsel %vm160, %v410, 0.0
    %412 = vadd.xlane.f32.xlu0 %v411
    %v413 = vpop.xlane.xlu0 %412
    %v414 = vrcp.pop %v413
    %v415 = vmul.f32 %v410, %v414
    %416 = vrot.lane.b32.xlu0 %v290, 56
    %v417 = vpop.permute.xlu0 %416
    %v420 = vsel %vm160, %v415, 0
    %422 = vmatpush.msra.mxu0 0.0
    %423 = vmatpush.msra.mxu0 0.0
    %424 = vmatpush.msra.mxu0 0.0
    %425 = vmatpush.msra.mxu0 0.0
    %426 = vmatpush.msra.mxu0 0.0
    %427 = vmatpush.msra.mxu0 0.0
    %428 = vmatpush.msra.mxu0 0.0
    %429 = vmatpush.msra.mxu0 0.0
    %430 = vmatpush.msra.mxu0 0.0
    %431 = vmatpush.msra.mxu0 0.0
    %432 = vmatpush.msra.mxu0 0.0
    %433 = vmatpush.msra.mxu0 0.0
    %434 = vmatpush.msra.mxu0 0.0
    %435 = vmatpush.msra.mxu0 0.0
    %436 = vmatpush.msra.mxu0 0.0
    %437 = vmatpush.msra.mxu0 %v417
    %438 = vmatmul.f32.gmra.mxu0 %v420
    %v439 = vpop.f32.mrf.mxu0
    %v440 = vadd.f32 0.0, %v439
    %441 = vdwg.mxu0
    %v443 = vsel %vm160, %v440, 0
    %445 = vmatpush.msra.mxu0 0.0
    %446 = vmatpush.msra.mxu0 0.0
    %447 = vmatpush.msra.mxu0 0.0
    %448 = vmatpush.msra.mxu0 0.0
    %449 = vmatpush.msra.mxu0 0.0
    %450 = vmatpush.msra.mxu0 0.0
    %451 = vmatpush.msra.mxu0 0.0
    %452 = vmatpush.msra.mxu0 0.0
    %453 = vmatpush.msra.mxu0 0.0
    %454 = vmatpush.msra.mxu0 0.0
    %455 = vmatpush.msra.mxu0 0.0
    %456 = vmatpush.msra.mxu0 0.0
    %457 = vmatpush.msra.mxu0 0.0
    %458 = vmatpush.msra.mxu0 0.0
    %459 = vmatpush.msra.mxu0 0.0
    %460 = vmatpush.msra.mxu0 %v296
    %461 = vmatmul.f32.gmra.mxu0 %v443
    %v462 = vpop.f32.mrf.mxu0
    %v463 = vadd.f32 0.0, %v462
    %464 = vdwg.mxu0
    %v466 = vsel %vm160, %v373, 0
    %468 = vmatpush.msra.mxu0 0.0
    %469 = vmatpush.msra.mxu0 0.0
    %470 = vmatpush.msra.mxu0 0.0
    %471 = vmatpush.msra.mxu0 0.0
    %472 = vmatpush.msra.mxu0 0.0
    %473 = vmatpush.msra.mxu0 0.0
    %474 = vmatpush.msra.mxu0 0.0
    %475 = vmatpush.msra.mxu0 0.0
    %476 = vmatpush.msra.mxu0 0.0
    %477 = vmatpush.msra.mxu0 0.0
    %478 = vmatpush.msra.mxu0 0.0
    %479 = vmatpush.msra.mxu0 0.0
    %480 = vmatpush.msra.mxu0 0.0
    %481 = vmatpush.msra.mxu0 0.0
    %482 = vmatpush.msra.mxu0 0.0
    %483 = vmatpush.msra.mxu0 %v295
    %484 = vmatmul.f32.gmra.mxu0 %v466
    %v485 = vpop.f32.mrf.mxu0
    %v486 = vadd.f32 %v463, %v485
    %487 = vdwg.mxu0
    %488 = vrot.lane.b32.xlu0 %v290, 112
    %v489 = vpop.permute.xlu0 %488
    %490 = vrot.lane.b32.xlu0 %v290, 80
    %v491 = vpop.permute.xlu0 %490
    %v492 = vsel %vm160, %v489, 0
    %v494 = vsel %vm160, %v491, 0
    %496 = vmatpush.xpose.msra.mxu0 0.0
    %497 = vmatpush.xpose.msra.mxu0 0.0
    %498 = vmatpush.xpose.msra.mxu0 0.0
    %499 = vmatpush.xpose.msra.mxu0 0.0
    %500 = vmatpush.xpose.msra.mxu0 0.0
    %501 = vmatpush.xpose.msra.mxu0 0.0
    %502 = vmatpush.xpose.msra.mxu0 0.0
    %503 = vmatpush.xpose.msra.mxu0 0.0
    %504 = vmatpush.xpose.msra.mxu0 0.0
    %505 = vmatpush.xpose.msra.mxu0 0.0
    %506 = vmatpush.xpose.msra.mxu0 0.0
    %507 = vmatpush.xpose.msra.mxu0 0.0
    %508 = vmatpush.xpose.msra.mxu0 0.0
    %509 = vmatpush.xpose.msra.mxu0 0.0
    %510 = vmatpush.xpose.msra.mxu0 0.0
    %511 = vmatpush.xpose.msra.mxu0 %v494
    %512 = vmatmul.f32.gmra.mxu0 %v492
    %v513 = vpop.f32.mrf.mxu0
    %v514 = vadd.f32 0.0, %v513
    %515 = vdwg.mxu0
    %v516 = vmul.f32 %v514, 0.35355338
    %v517 = vadd.f32 %v516, %v308
    %v518 = vsel %vm160, %v517, -inf
    %519 = vmax.xlane.f32.xlu0 %v518
    %v520 = vpop.xlane.xlu0 %519
    %v521 = vsub.f32 %v517, %v520
    %v522 = vmul.f32 %v521, 1.442695
    %v523 = vpow.pop %v522
    %v524 = vsel %vm160, %v523, 0.0
    %525 = vadd.xlane.f32.xlu0 %v524
    %v526 = vpop.xlane.xlu0 %525
    %v527 = vrcp.pop %v526
    %v528 = vmul.f32 %v523, %v527
    %529 = vrot.lane.b32.xlu0 %v290, 48
    %v530 = vpop.permute.xlu0 %529
    %v533 = vsel %vm160, %v528, 0
    %535 = vmatpush.msra.mxu0 0.0
    %536 = vmatpush.msra.mxu0 0.0
    %537 = vmatpush.msra.mxu0 0.0
    %538 = vmatpush.msra.mxu0 0.0
    %539 = vmatpush.msra.mxu0 0.0
    %540 = vmatpush.msra.mxu0 0.0
    %541 = vmatpush.msra.mxu0 0.0
    %542 = vmatpush.msra.mxu0 0.0
    %543 = vmatpush.msra.mxu0 0.0
    %544 = vmatpush.msra.mxu0 0.0
    %545 = vmatpush.msra.mxu0 0.0
    %546 = vmatpush.msra.mxu0 0.0
    %547 = vmatpush.msra.mxu0 0.0
    %548 = vmatpush.msra.mxu0 0.0
    %549 = vmatpush.msra.mxu0 0.0
    %550 = vmatpush.msra.mxu0 %v530
    %551 = vmatmul.f32.gmra.mxu0 %v533
    %v552 = vpop.f32.mrf.mxu0
    %v553 = vadd.f32 0.0, %v552
    %554 = vdwg.mxu0
    %v556 = vsel %vm160, %v553, 0
    %558 = vmatpush.msra.mxu0 0.0
    %559 = vmatpush.msra.mxu0 0.0
    %560 = vmatpush.msra.mxu0 0.0
    %561 = vmatpush.msra.mxu0 0.0
    %562 = vmatpush.msra.mxu0 0.0
    %563 = vmatpush.msra.mxu0 0.0
    %564 = vmatpush.msra.mxu0 0.0
    %565 = vmatpush.msra.mxu0 0.0
    %566 = vmatpush.msra.mxu0 0.0
    %567 = vmatpush.msra.mxu0 0.0
    %568 = vmatpush.msra.mxu0 0.0
    %569 = vmatpush.msra.mxu0 0.0
    %570 = vmatpush.msra.mxu0 0.0
    %571 = vmatpush.msra.mxu0 0.0
    %572 = vmatpush.msra.mxu0 0.0
    %573 = vmatpush.msra.mxu0 %v297
    %574 = vmatmul.f32.gmra.mxu0 %v556
    %v575 = vpop.f32.mrf.mxu0
    %v576 = vadd.f32 0.0, %v575
    %577 = vdwg.mxu0
    %v578 = vadd.f32 %v486, %v576
    %579 = vrot.lane.b32.xlu0 %v290, 104
    %v580 = vpop.permute.xlu0 %579
    %581 = vrot.lane.b32.xlu0 %v290, 72
    %v582 = vpop.permute.xlu0 %581
    %v583 = vsel %vm160, %v580, 0
    %v585 = vsel %vm160, %v582, 0
    %587 = vmatpush.xpose.msra.mxu0 0.0
    %588 = vmatpush.xpose.msra.mxu0 0.0
    %589 = vmatpush.xpose.msra.mxu0 0.0
    %590 = vmatpush.xpose.msra.mxu0 0.0
    %591 = vmatpush.xpose.msra.mxu0 0.0
    %592 = vmatpush.xpose.msra.mxu0 0.0
    %593 = vmatpush.xpose.msra.mxu0 0.0
    %594 = vmatpush.xpose.msra.mxu0 0.0
    %595 = vmatpush.xpose.msra.mxu0 0.0
    %596 = vmatpush.xpose.msra.mxu0 0.0
    %597 = vmatpush.xpose.msra.mxu0 0.0
    %598 = vmatpush.xpose.msra.mxu0 0.0
    %599 = vmatpush.xpose.msra.mxu0 0.0
    %600 = vmatpush.xpose.msra.mxu0 0.0
    %601 = vmatpush.xpose.msra.mxu0 0.0
    %602 = vmatpush.xpose.msra.mxu0 %v585
    %603 = vmatmul.f32.gmra.mxu0 %v583
    %v604 = vpop.f32.mrf.mxu0
    %v605 = vadd.f32 0.0, %v604
    %606 = vdwg.mxu0
    %v607 = vmul.f32 %v605, 0.35355338
    %v608 = vadd.f32 %v607, %v308
    %v609 = vsel %vm160, %v608, -inf
    %610 = vmax.xlane.f32.xlu0 %v609
    %v611 = vpop.xlane.xlu0 %610
    %v612 = vsub.f32 %v608, %v611
    %v613 = vmul.f32 %v612, 1.442695
    %v614 = vpow.pop %v613
    %v615 = vsel %vm160, %v614, 0.0
    %616 = vadd.xlane.f32.xlu0 %v615
    %v617 = vpop.xlane.xlu0 %616
    %v618 = vrcp.pop %v617
    %v619 = vmul.f32 %v614, %v618
    %620 = vrot.lane.b32.xlu0 %v290, 40
    %v621 = vpop.permute.xlu0 %620
    %v624 = vsel %vm160, %v619, 0
    %626 = vmatpush.msra.mxu0 0.0
    %627 = vmatpush.msra.mxu0 0.0
    %628 = vmatpush.msra.mxu0 0.0
    %629 = vmatpush.msra.mxu0 0.0
    %630 = vmatpush.msra.mxu0 0.0
    %631 = vmatpush.msra.mxu0 0.0
    %632 = vmatpush.msra.mxu0 0.0
    %633 = vmatpush.msra.mxu0 0.0
    %634 = vmatpush.msra.mxu0 0.0
    %635 = vmatpush.msra.mxu0 0.0
    %636 = vmatpush.msra.mxu0 0.0
    %637 = vmatpush.msra.mxu0 0.0
    %638 = vmatpush.msra.mxu0 0.0
    %639 = vmatpush.msra.mxu0 0.0
    %640 = vmatpush.msra.mxu0 0.0
    %641 = vmatpush.msra.mxu0 %v621
    %642 = vmatmul.f32.gmra.mxu0 %v624
    %v643 = vpop.f32.mrf.mxu0
    %v644 = vadd.f32 0.0, %v643
    %645 = vdwg.mxu0
    %v647 = vsel %vm160, %v644, 0
    %649 = vmatpush.msra.mxu0 0.0
    %650 = vmatpush.msra.mxu0 0.0
    %651 = vmatpush.msra.mxu0 0.0
    %652 = vmatpush.msra.mxu0 0.0
    %653 = vmatpush.msra.mxu0 0.0
    %654 = vmatpush.msra.mxu0 0.0
    %655 = vmatpush.msra.mxu0 0.0
    %656 = vmatpush.msra.mxu0 0.0
    %657 = vmatpush.msra.mxu0 0.0
    %658 = vmatpush.msra.mxu0 0.0
    %659 = vmatpush.msra.mxu0 0.0
    %660 = vmatpush.msra.mxu0 0.0
    %661 = vmatpush.msra.mxu0 0.0
    %662 = vmatpush.msra.mxu0 0.0
    %663 = vmatpush.msra.mxu0 0.0
    %664 = vmatpush.msra.mxu0 %v298
    %665 = vmatmul.f32.gmra.mxu0 %v647
    %v666 = vpop.f32.mrf.mxu0
    %v667 = vadd.f32 0.0, %v666
    %668 = vdwg.mxu0
    %v669 = vadd.f32 %v578, %v667
    %670 = vst.msk [vmem:[#allocation2] sm:$0xff] %vm214, %v669
    %s671 = sld [smem:[#allocation3 + $0x1]]
    %v672 = vstv %s671
    %vm673 = vcmp.ge.s32.totalorder %v302, %v672
    %vm674 = vmor %vm303, %vm673
    %v675 = vsel %vm674, -1e+09, 0.0
    %677 = vrot.lane.b32.xlu0 %v293, 96
    %v678 = vpop.permute.xlu0 %677
    %v679 = vsel %vm160, %v293, 0
    %v681 = vsel %vm160, %v678, 0
    %683 = vmatpush.xpose.msra.mxu0 0.0
    %684 = vmatpush.xpose.msra.mxu0 0.0
    %685 = vmatpush.xpose.msra.mxu0 0.0
    %686 = vmatpush.xpose.msra.mxu0 0.0
    %687 = vmatpush.xpose.msra.mxu0 0.0
    %688 = vmatpush.xpose.msra.mxu0 0.0
    %689 = vmatpush.xpose.msra.mxu0 0.0
    %690 = vmatpush.xpose.msra.mxu0 0.0
    %691 = vmatpush.xpose.msra.mxu0 0.0
    %692 = vmatpush.xpose.msra.mxu0 0.0
    %693 = vmatpush.xpose.msra.mxu0 0.0
    %694 = vmatpush.xpose.msra.mxu0 0.0
    %695 = vmatpush.xpose.msra.mxu0 0.0
    %696 = vmatpush.xpose.msra.mxu0 0.0
    %697 = vmatpush.xpose.msra.mxu0 0.0
    %698 = vmatpush.xpose.msra.mxu0 %v681
    %699 = vmatmul.f32.gmra.mxu0 %v679
    %v700 = vpop.f32.mrf.mxu0
    %v701 = vadd.f32 0.0, %v700
    %702 = vdwg.mxu0
    %v703 = vmul.f32 %v701, 0.35355338
    %v704 = vadd.f32 %v703, %v675
    %v705 = vsel %vm160, %v704, -inf
    %706 = vmax.xlane.f32.xlu0 %v705
    %v707 = vpop.xlane.xlu0 %706
    %v708 = vsub.f32 %v704, %v707
    %v709 = vmul.f32 %v708, 1.442695
    %v710 = vpow.pop %v709
    %v711 = vsel %vm160, %v710, 0.0
    %712 = vadd.xlane.f32.xlu0 %v711
    %v713 = vpop.xlane.xlu0 %712
    %v714 = vrcp.pop %v713
    %v715 = vmul.f32 %v710, %v714
    %716 = vrot.lane.b32.xlu0 %v293, 64
    %v717 = vpop.permute.xlu0 %716
    %v720 = vsel %vm160, %v715, 0
    %722 = vmatpush.msra.mxu0 0.0
    %723 = vmatpush.msra.mxu0 0.0
    %724 = vmatpush.msra.mxu0 0.0
    %725 = vmatpush.msra.mxu0 0.0
    %726 = vmatpush.msra.mxu0 0.0
    %727 = vmatpush.msra.mxu0 0.0
    %728 = vmatpush.msra.mxu0 0.0
    %729 = vmatpush.msra.mxu0 0.0
    %730 = vmatpush.msra.mxu0 0.0
    %731 = vmatpush.msra.mxu0 0.0
    %732 = vmatpush.msra.mxu0 0.0
    %733 = vmatpush.msra.mxu0 0.0
    %734 = vmatpush.msra.mxu0 0.0
    %735 = vmatpush.msra.mxu0 0.0
    %736 = vmatpush.msra.mxu0 0.0
    %737 = vmatpush.msra.mxu0 %v717
    %738 = vmatmul.f32.gmra.mxu0 %v720
    %v739 = vpop.f32.mrf.mxu0
    %v740 = vadd.f32 0.0, %v739
    %741 = vdwg.mxu0
    %742 = vrot.lane.b32.xlu0 %v293, 120
    %v743 = vpop.permute.xlu0 %742
    %744 = vrot.lane.b32.xlu0 %v293, 88
    %v745 = vpop.permute.xlu0 %744
    %v746 = vsel %vm160, %v743, 0
    %v748 = vsel %vm160, %v745, 0
    %750 = vmatpush.xpose.msra.mxu0 0.0
    %751 = vmatpush.xpose.msra.mxu0 0.0
    %752 = vmatpush.xpose.msra.mxu0 0.0
    %753 = vmatpush.xpose.msra.mxu0 0.0
    %754 = vmatpush.xpose.msra.mxu0 0.0
    %755 = vmatpush.xpose.msra.mxu0 0.0
    %756 = vmatpush.xpose.msra.mxu0 0.0
    %757 = vmatpush.xpose.msra.mxu0 0.0
    %758 = vmatpush.xpose.msra.mxu0 0.0
    %759 = vmatpush.xpose.msra.mxu0 0.0
    %760 = vmatpush.xpose.msra.mxu0 0.0
    %761 = vmatpush.xpose.msra.mxu0 0.0
    %762 = vmatpush.xpose.msra.mxu0 0.0
    %763 = vmatpush.xpose.msra.mxu0 0.0
    %764 = vmatpush.xpose.msra.mxu0 0.0
    %765 = vmatpush.xpose.msra.mxu0 %v748
    %766 = vmatmul.f32.gmra.mxu0 %v746
    %v767 = vpop.f32.mrf.mxu0
    %v768 = vadd.f32 0.0, %v767
    %769 = vdwg.mxu0
    %v770 = vmul.f32 %v768, 0.35355338
    %v771 = vadd.f32 %v770, %v675
    %v772 = vsel %vm160, %v771, -inf
    %773 = vmax.xlane.f32.xlu0 %v772
    %v774 = vpop.xlane.xlu0 %773
    %v775 = vsub.f32 %v771, %v774
    %v776 = vmul.f32 %v775, 1.442695
    %v777 = vpow.pop %v776
    %v778 = vsel %vm160, %v777, 0.0
    %779 = vadd.xlane.f32.xlu0 %v778
    %v780 = vpop.xlane.xlu0 %779
    %v781 = vrcp.pop %v780
    %v782 = vmul.f32 %v777, %v781
    %783 = vrot.lane.b32.xlu0 %v293, 56
    %v784 = vpop.permute.xlu0 %783
    %v787 = vsel %vm160, %v782, 0
    %789 = vmatpush.msra.mxu0 0.0
    %790 = vmatpush.msra.mxu0 0.0
    %791 = vmatpush.msra.mxu0 0.0
    %792 = vmatpush.msra.mxu0 0.0
    %793 = vmatpush.msra.mxu0 0.0
    %794 = vmatpush.msra.mxu0 0.0
    %795 = vmatpush.msra.mxu0 0.0
    %796 = vmatpush.msra.mxu0 0.0
    %797 = vmatpush.msra.mxu0 0.0
    %798 = vmatpush.msra.mxu0 0.0
    %799 = vmatpush.msra.mxu0 0.0
    %800 = vmatpush.msra.mxu0 0.0
    %801 = vmatpush.msra.mxu0 0.0
    %802 = vmatpush.msra.mxu0 0.0
    %803 = vmatpush.msra.mxu0 0.0
    %804 = vmatpush.msra.mxu0 %v784
    %805 = vmatmul.f32.gmra.mxu0 %v787
    %v806 = vpop.f32.mrf.mxu0
    %v807 = vadd.f32 0.0, %v806
    %808 = vdwg.mxu0
    %v810 = vsel %vm160, %v807, 0
    %812 = vmatpush.msra.mxu0 0.0
    %813 = vmatpush.msra.mxu0 0.0
    %814 = vmatpush.msra.mxu0 0.0
    %815 = vmatpush.msra.mxu0 0.0
    %816 = vmatpush.msra.mxu0 0.0
    %817 = vmatpush.msra.mxu0 0.0
    %818 = vmatpush.msra.mxu0 0.0
    %819 = vmatpush.msra.mxu0 0.0
    %820 = vmatpush.msra.mxu0 0.0
    %821 = vmatpush.msra.mxu0 0.0
    %822 = vmatpush.msra.mxu0 0.0
    %823 = vmatpush.msra.mxu0 0.0
    %824 = vmatpush.msra.mxu0 0.0
    %825 = vmatpush.msra.mxu0 0.0
    %826 = vmatpush.msra.mxu0 0.0
    %827 = vmatpush.msra.mxu0 %v296
    %828 = vmatmul.f32.gmra.mxu0 %v810
    %v829 = vpop.f32.mrf.mxu0
    %v830 = vadd.f32 0.0, %v829
    %831 = vdwg.mxu0
    %v833 = vsel %vm160, %v740, 0
    %835 = vmatpush.msra.mxu0 0.0
    %836 = vmatpush.msra.mxu0 0.0
    %837 = vmatpush.msra.mxu0 0.0
    %838 = vmatpush.msra.mxu0 0.0
    %839 = vmatpush.msra.mxu0 0.0
    %840 = vmatpush.msra.mxu0 0.0
    %841 = vmatpush.msra.mxu0 0.0
    %842 = vmatpush.msra.mxu0 0.0
    %843 = vmatpush.msra.mxu0 0.0
    %844 = vmatpush.msra.mxu0 0.0
    %845 = vmatpush.msra.mxu0 0.0
    %846 = vmatpush.msra.mxu0 0.0
    %847 = vmatpush.msra.mxu0 0.0
    %848 = vmatpush.msra.mxu0 0.0
    %849 = vmatpush.msra.mxu0 0.0
    %850 = vmatpush.msra.mxu0 %v295
    %851 = vmatmul.f32.gmra.mxu0 %v833
    %v852 = vpop.f32.mrf.mxu0
    %v853 = vadd.f32 %v830, %v852
    %854 = vdwg.mxu0
    %855 = vrot.lane.b32.xlu0 %v293, 112
    %v856 = vpop.permute.xlu0 %855
    %857 = vrot.lane.b32.xlu0 %v293, 80
    %v858 = vpop.permute.xlu0 %857
    %v859 = vsel %vm160, %v856, 0
    %v861 = vsel %vm160, %v858, 0
    %863 = vmatpush.xpose.msra.mxu0 0.0
    %864 = vmatpush.xpose.msra.mxu0 0.0
    %865 = vmatpush.xpose.msra.mxu0 0.0
    %866 = vmatpush.xpose.msra.mxu0 0.0
    %867 = vmatpush.xpose.msra.mxu0 0.0
    %868 = vmatpush.xpose.msra.mxu0 0.0
    %869 = vmatpush.xpose.msra.mxu0 0.0
    %870 = vmatpush.xpose.msra.mxu0 0.0
    %871 = vmatpush.xpose.msra.mxu0 0.0
    %872 = vmatpush.xpose.msra.mxu0 0.0
    %873 = vmatpush.xpose.msra.mxu0 0.0
    %874 = vmatpush.xpose.msra.mxu0 0.0
    %875 = vmatpush.xpose.msra.mxu0 0.0
    %876 = vmatpush.xpose.msra.mxu0 0.0
    %877 = vmatpush.xpose.msra.mxu0 0.0
    %878 = vmatpush.xpose.msra.mxu0 %v861
    %879 = vmatmul.f32.gmra.mxu0 %v859
    %v880 = vpop.f32.mrf.mxu0
    %v881 = vadd.f32 0.0, %v880
    %882 = vdwg.mxu0
    %v883 = vmul.f32 %v881, 0.35355338
    %v884 = vadd.f32 %v883, %v675
    %v885 = vsel %vm160, %v884, -inf
    %886 = vmax.xlane.f32.xlu0 %v885
    %v887 = vpop.xlane.xlu0 %886
    %v888 = vsub.f32 %v884, %v887
    %v889 = vmul.f32 %v888, 1.442695
    %v890 = vpow.pop %v889
    %v891 = vsel %vm160, %v890, 0.0
    %892 = vadd.xlane.f32.xlu0 %v891
    %v893 = vpop.xlane.xlu0 %892
    %v894 = vrcp.pop %v893
    %v895 = vmul.f32 %v890, %v894
    %896 = vrot.lane.b32.xlu0 %v293, 48
    %v897 = vpop.permute.xlu0 %896
    %v900 = vsel %vm160, %v895, 0
    %902 = vmatpush.msra.mxu0 0.0
    %903 = vmatpush.msra.mxu0 0.0
    %904 = vmatpush.msra.mxu0 0.0
    %905 = vmatpush.msra.mxu0 0.0
    %906 = vmatpush.msra.mxu0 0.0
    %907 = vmatpush.msra.mxu0 0.0
    %908 = vmatpush.msra.mxu0 0.0
    %909 = vmatpush.msra.mxu0 0.0
    %910 = vmatpush.msra.mxu0 0.0
    %911 = vmatpush.msra.mxu0 0.0
    %912 = vmatpush.msra.mxu0 0.0
    %913 = vmatpush.msra.mxu0 0.0
    %914 = vmatpush.msra.mxu0 0.0
    %915 = vmatpush.msra.mxu0 0.0
    %916 = vmatpush.msra.mxu0 0.0
    %917 = vmatpush.msra.mxu0 %v897
    %918 = vmatmul.f32.gmra.mxu0 %v900
    %v919 = vpop.f32.mrf.mxu0
    %v920 = vadd.f32 0.0, %v919
    %921 = vdwg.mxu0
    %v923 = vsel %vm160, %v920, 0
    %925 = vmatpush.msra.mxu0 0.0
    %926 = vmatpush.msra.mxu0 0.0
    %927 = vmatpush.msra.mxu0 0.0
    %928 = vmatpush.msra.mxu0 0.0
    %929 = vmatpush.msra.mxu0 0.0
    %930 = vmatpush.msra.mxu0 0.0
    %931 = vmatpush.msra.mxu0 0.0
    %932 = vmatpush.msra.mxu0 0.0
    %933 = vmatpush.msra.mxu0 0.0
    %934 = vmatpush.msra.mxu0 0.0
    %935 = vmatpush.msra.mxu0 0.0
    %936 = vmatpush.msra.mxu0 0.0
    %937 = vmatpush.msra.mxu0 0.0
    %938 = vmatpush.msra.mxu0 0.0
    %939 = vmatpush.msra.mxu0 0.0
    %940 = vmatpush.msra.mxu0 %v297
    %941 = vmatmul.f32.gmra.mxu0 %v923
    %v942 = vpop.f32.mrf.mxu0
    %v943 = vadd.f32 0.0, %v942
    %944 = vdwg.mxu0
    %v945 = vadd.f32 %v853, %v943
    %946 = vrot.lane.b32.xlu0 %v293, 104
    %v947 = vpop.permute.xlu0 %946
    %948 = vrot.lane.b32.xlu0 %v293, 72
    %v949 = vpop.permute.xlu0 %948
    %v950 = vsel %vm160, %v947, 0
    %v952 = vsel %vm160, %v949, 0
    %954 = vmatpush.xpose.msra.mxu0 0.0
    %955 = vmatpush.xpose.msra.mxu0 0.0
    %956 = vmatpush.xpose.msra.mxu0 0.0
    %957 = vmatpush.xpose.msra.mxu0 0.0
    %958 = vmatpush.xpose.msra.mxu0 0.0
    %959 = vmatpush.xpose.msra.mxu0 0.0
    %960 = vmatpush.xpose.msra.mxu0 0.0
    %961 = vmatpush.xpose.msra.mxu0 0.0
    %962 = vmatpush.xpose.msra.mxu0 0.0
    %963 = vmatpush.xpose.msra.mxu0 0.0
    %964 = vmatpush.xpose.msra.mxu0 0.0
    %965 = vmatpush.xpose.msra.mxu0 0.0
    %966 = vmatpush.xpose.msra.mxu0 0.0
    %967 = vmatpush.xpose.msra.mxu0 0.0
    %968 = vmatpush.xpose.msra.mxu0 0.0
    %969 = vmatpush.xpose.msra.mxu0 %v952
    %970 = vmatmul.f32.gmra.mxu0 %v950
    %v971 = vpop.f32.mrf.mxu0
    %v972 = vadd.f32 0.0, %v971
    %973 = vdwg.mxu0
    %v974 = vmul.f32 %v972, 0.35355338
    %v975 = vadd.f32 %v974, %v675
    %v976 = vsel %vm160, %v975, -inf
    %977 = vmax.xlane.f32.xlu0 %v976
    %v978 = vpop.xlane.xlu0 %977
    %v979 = vsub.f32 %v975, %v978
    %v980 = vmul.f32 %v979, 1.442695
    %v981 = vpow.pop %v980
    %v982 = vsel %vm160, %v981, 0.0
    %983 = vadd.xlane.f32.xlu0 %v982
    %v984 = vpop.xlane.xlu0 %983
    %v985 = vrcp.pop %v984
    %v986 = vmul.f32 %v981, %v985
    %987 = vrot.lane.b32.xlu0 %v293, 40
    %v988 = vpop.permute.xlu0 %987
    %v991 = vsel %vm160, %v986, 0
    %993 = vmatpush.msra.mxu0 0.0
    %994 = vmatpush.msra.mxu0 0.0
    %995 = vmatpush.msra.mxu0 0.0
    %996 = vmatpush.msra.mxu0 0.0
    %997 = vmatpush.msra.mxu0 0.0
    %998 = vmatpush.msra.mxu0 0.0
    %999 = vmatpush.msra.mxu0 0.0
    %1000 = vmatpush.msra.mxu0 0.0
    %1001 = vmatpush.msra.mxu0 0.0
    %1002 = vmatpush.msra.mxu0 0.0
    %1003 = vmatpush.msra.mxu0 0.0
    %1004 = vmatpush.msra.mxu0 0.0
    %1005 = vmatpush.msra.mxu0 0.0
    %1006 = vmatpush.msra.mxu0 0.0
    %1007 = vmatpush.msra.mxu0 0.0
    %1008 = vmatpush.msra.mxu0 %v988
    %1009 = vmatmul.f32.gmra.mxu0 %v991
    %v1010 = vpop.f32.mrf.mxu0
    %v1011 = vadd.f32 0.0, %v1010
    %1012 = vdwg.mxu0
    %v1014 = vsel %vm160, %v1011, 0
    %1016 = vmatpush.msra.mxu0 0.0
    %1017 = vmatpush.msra.mxu0 0.0
    %1018 = vmatpush.msra.mxu0 0.0
    %1019 = vmatpush.msra.mxu0 0.0
    %1020 = vmatpush.msra.mxu0 0.0
    %1021 = vmatpush.msra.mxu0 0.0
    %1022 = vmatpush.msra.mxu0 0.0
    %1023 = vmatpush.msra.mxu0 0.0
    %1024 = vmatpush.msra.mxu0 0.0
    %1025 = vmatpush.msra.mxu0 0.0
    %1026 = vmatpush.msra.mxu0 0.0
    %1027 = vmatpush.msra.mxu0 0.0
    %1028 = vmatpush.msra.mxu0 0.0
    %1029 = vmatpush.msra.mxu0 0.0
    %1030 = vmatpush.msra.mxu0 0.0
    %1031 = vmatpush.msra.mxu0 %v298
    %1032 = vmatmul.f32.gmra.mxu0 %v1014
    %v1033 = vpop.f32.mrf.mxu0
    %v1034 = vadd.f32 0.0, %v1033
    %1035 = vdwg.mxu0
    %v1036 = vadd.f32 %v945, %v1034
    %1037 = vst.msk [vmem:[#allocation2 + $0x8] sm:$0xff] %vm214, %v1036
    %v1038 = vld [vmem:[#allocation2] sm:$0xff]
    %v1039 = vld [vmem:[#allocation2 + $0x8] sm:$0xff]
    %v1040 = vadd.f32 %v256, %v1038
    %v1041 = vadd.f32 %v257, %v1039
    %v1042 = vld [vmem:[%s23] sm:$0x1]
    %v1044 = vperm.slane %v1042, 0
    %v1046 = vadd.f32 %v1040, %v1044
    %v1047 = vadd.f32 %v1041, %v1044
    %v1048 = vsel %vm214, %v1046, 0.0
    %1049 = vadd.xlane.f32.xlu0 %v1048
    %v1050 = vpop.xlane.xlu0 %1049
    %v1051 = vsel %vm214, %v1047, 0.0
    %1052 = vadd.xlane.f32.xlu0 %v1051
    %v1053 = vpop.xlane.xlu0 %1052
    %v1054 = vrcp.pop 32.0
    %v1055 = vmul.f32 32.0, %v1054
    %v1056 = vsub.f32 1.0, %v1055
    %v1057 = vmul.f32 %v1054, %v1056
    %v1058 = vadd.f32 %v1054, %v1057
    %vm1059 = vweird.f32 %v1054
    %v1060 = vsel %vm1059, %v1054, %v1058
    %v1061 = vmul.f32 %v1050, %v1060
    %v1062 = vmul.f32 %v1053, %v1060
    %v1063 = vsub.f32 %v1046, %v1061
    %v1064 = vsub.f32 %v1047, %v1062
    %v1065 = vmul.f32 %v1063, %v1063
    %v1066 = vmul.f32 %v1064, %v1064
    %v1067 = vsel %vm214, %v1065, 0.0
    %1068 = vadd.xlane.f32.xlu0 %v1067
    %v1069 = vpop.xlane.xlu0 %1068
    %v1070 = vsel %vm214, %v1066, 0.0
    %1071 = vadd.xlane.f32.xlu0 %v1070
    %v1072 = vpop.xlane.xlu0 %1071
    %v1073 = vmul.f32 %v1069, %v1060
    %v1074 = vmul.f32 %v1072, %v1060
    %v1075 = vadd.f32 %v1073, 1e-05
    %v1076 = vadd.f32 %v1074, 1e-05
    %v1077 = vrsqrt.pop %v1075
    %v1078 = vmul.f32 %v1077, %v1075
    %v1079 = vmul.f32 %v1078, %v1077
    %v1080 = vmul.f32 0.5, %v1079
    %v1081 = vsub.f32 1.5, %v1080
    %v1082 = vmul.f32 %v1077, %v1081
    %vm1083 = vweird.f32 %v1075
    %vm1084 = vweird.f32 %v1077
    %vm1085 = vmor %vm1083, %vm1084
    %v1086 = vsel %vm1085, %v1077, %v1082
    %v1087 = vrsqrt.pop %v1076
    %v1088 = vmul.f32 %v1087, %v1076
    %v1089 = vmul.f32 %v1088, %v1087
    %v1090 = vmul.f32 0.5, %v1089
    %v1091 = vsub.f32 1.5, %v1090
    %v1092 = vmul.f32 %v1087, %v1091
    %vm1093 = vweird.f32 %v1076
    %vm1094 = vweird.f32 %v1087
    %vm1095 = vmor %vm1093, %vm1094
    %v1096 = vsel %vm1095, %v1087, %v1092
    %v1097 = vmul.f32 %v1063, %v1086
    %v1098 = vmul.f32 %v1064, %v1096
    %v1099 = vld [vmem:[%s25] sm:$0x1]
    %v1101 = vperm.slane %v1099, 0
    %v1103 = vmul.f32 %v1097, %v1101
    %v1104 = vmul.f32 %v1098, %v1101
    %v1105 = vld [vmem:[%s27] sm:$0x1]
    %v1107 = vperm.slane %v1105, 0
    %v1109 = vadd.f32 %v1103, %v1107
    %v1110 = vadd.f32 %v1104, %v1107
    %v1111 = vld [vmem:[%s29] sm:$0xff]
    %v1112 = vld [vmem:[%s29 + $0x8] sm:$0xff]
    %v1113 = vld [vmem:[%s29 + $0x10] sm:$0xff]
    %v1114 = vld [vmem:[%s29 + $0x18] sm:$0xff]
    %v1115 = vld [vmem:[%s31] sm:$0x1]
    %v1117 = vperm.slane %v1115, 0
    %v1120 = vsel %vm214, %v1109, 0
    %v1123 = vsel %vm214, %v1110, 0
    %1125 = vmatpush.msra.mxu0 0.0
    %1126 = vmatpush.msra.mxu0 0.0
    %1127 = vmatpush.msra.mxu0 0.0
    %1128 = vmatpush.msra.mxu0 0.0
    %1129 = vmatpush.msra.mxu0 0.0
    %1130 = vmatpush.msra.mxu0 0.0
    %1131 = vmatpush.msra.mxu0 0.0
    %1132 = vmatpush.msra.mxu0 0.0
    %1133 = vmatpush.msra.mxu0 0.0
    %1134 = vmatpush.msra.mxu0 0.0
    %1135 = vmatpush.msra.mxu0 0.0
    %1136 = vmatpush.msra.mxu0 0.0
    %1137 = vmatpush.msra.mxu0 %v1114
    %1138 = vmatpush.msra.mxu0 %v1113
    %1139 = vmatpush.msra.mxu0 %v1112
    %1140 = vmatpush.msra.mxu0 %v1111
    %1141 = vmatmul.f32.gmra.mxu0 %v1120
    %v1142 = vpop.f32.mrf.mxu0
    %v1143 = vadd.f32 %v1117, %v1142
    %1144 = vmatmul.f32.gmra.mxu0 %v1123
    %v1145 = vpop.f32.mrf.mxu0
    %v1146 = vadd.f32 %v1117, %v1145
    %1147 = vdwg.mxu0
    %v1148 = vld [vmem:[%s33] sm:$0xff]
    %v1149 = vld [vmem:[%s33 + $0x8] sm:$0xff]
    %v1150 = vld [vmem:[%s33 + $0x10] sm:$0xff]
    %v1151 = vld [vmem:[%s33 + $0x18] sm:$0xff]
    %v1152 = vld [vmem:[%s35] sm:$0x1]
    %v1154 = vperm.slane %v1152, 0
    %v1157 = vsel %vm214, %v245, 0
    %v1160 = vsel %vm214, %v248, 0
    %v1163 = vsel %vm214, %v251, 0
    %v1166 = vsel %vm214, %v254, 0
    %1168 = vmatpush.msra.mxu0 0.0
    %1169 = vmatpush.msra.mxu0 0.0
    %1170 = vmatpush.msra.mxu0 0.0
    %1171 = vmatpush.msra.mxu0 0.0
    %1172 = vmatpush.msra.mxu0 0.0
    %1173 = vmatpush.msra.mxu0 0.0
    %1174 = vmatpush.msra.mxu0 0.0
    %1175 = vmatpush.msra.mxu0 0.0
    %1176 = vmatpush.msra.mxu0 0.0
    %1177 = vmatpush.msra.mxu0 0.0
    %1178 = vmatpush.msra.mxu0 0.0
    %1179 = vmatpush.msra.mxu0 0.0
    %1180 = vmatpush.msra.mxu0 %v1151
    %1181 = vmatpush.msra.mxu0 %v1150
    %1182 = vmatpush.msra.mxu0 %v1149
    %1183 = vmatpush.msra.mxu0 %v1148
    %1184 = vmatmul.f32.gmra.mxu0 %v1157
    %v1185 = vpop.f32.mrf.mxu0
    %v1186 = vadd.f32 %v1154, %v1185
    %1187 = vmatmul.f32.gmra.mxu0 %v1160
    %v1188 = vpop.f32.mrf.mxu0
    %v1189 = vadd.f32 %v1154, %v1188
    %1190 = vmatmul.f32.gmra.mxu0 %v1163
    %v1191 = vpop.f32.mrf.mxu0
    %v1192 = vadd.f32 %v1154, %v1191
    %1193 = vmatmul.f32.gmra.mxu0 %v1166
    %v1194 = vpop.f32.mrf.mxu0
    %v1195 = vadd.f32 %v1154, %v1194
    %1196 = vdwg.mxu0
    %v1197 = vld [vmem:[%s37] sm:$0xff]
    %v1198 = vld [vmem:[%s37 + $0x8] sm:$0xff]
    %v1199 = vld [vmem:[%s37 + $0x10] sm:$0xff]
    %v1200 = vld [vmem:[%s37 + $0x18] sm:$0xff]
    %s1201 = sld [smem:[#allocation5]]
    %v1202 = vstv %s1201
    %vm1203 = vcmp.ge.s32.totalorder %v302, %v1202
    %v1204 = vsel %vm1203, -1e+09, 0.0
    %v1206 = vsel %vm160, %v1143, 0
    %v1209 = vsel %vm160, %v1186, 0
    %v1212 = vsel %vm160, %v1189, 0
    %1214 = vmatpush.xpose.msra.mxu0 0.0
    %1215 = vmatpush.xpose.msra.mxu0 0.0
    %1216 = vmatpush.xpose.msra.mxu0 0.0
    %1217 = vmatpush.xpose.msra.mxu0 0.0
    %1218 = vmatpush.xpose.msra.mxu0 0.0
    %1219 = vmatpush.xpose.msra.mxu0 0.0
    %1220 = vmatpush.xpose.msra.mxu0 0.0
    %1221 = vmatpush.xpose.msra.mxu0 0.0
    %1222 = vmatpush.xpose.msra.mxu0 0.0
    %1223 = vmatpush.xpose.msra.mxu0 0.0
    %1224 = vmatpush.xpose.msra.mxu0 0.0
    %1225 = vmatpush.xpose.msra.mxu0 0.0
    %1226 = vmatpush.xpose.msra.mxu0 0.0
    %1227 = vmatpush.xpose.msra.mxu0 0.0
    %1228 = vmatpush.xpose.msra.mxu0 %v1212
    %1229 = vmatpush.xpose.msra.mxu0 %v1209
    %1230 = vmatmul.f32.gmra.mxu0 %v1206
    %v1231 = vpop.f32.mrf.mxu0
    %v1232 = vadd.f32 0.0, %v1231
    %1233 = vdwg.mxu0
    %v1234 = vmul.f32 %v1232, 0.35355338
    %v1235 = vadd.f32 %v1234, %v1204
    %vm1236 = vcmask 130048
    %v1237 = vsel %vm1236, %v1235, -inf
    %1238 = vmax.xlane.f32.xlu0 %v1237
    %v1239 = vpop.xlane.xlu0 %1238
    %v1240 = vsub.f32 %v1235, %v1239
    %v1241 = vmul.f32 %v1240, 1.442695
    %v1242 = vpow.pop %v1241
    %v1243 = vsel %vm1236, %v1242, 0.0
    %1244 = vadd.xlane.f32.xlu0 %v1243
    %v1245 = vpop.xlane.xlu0 %1244
    %v1246 = vrcp.pop %v1245
    %v1247 = vmul.f32 %v1242, %v1246
    %1248 = vrot.lane.b32.xlu0 %v1186, 96
    %v1249 = vpop.permute.xlu0 %1248
    %1250 = vrot.lane.b32.xlu0 %v1189, 96
    %v1251 = vpop.permute.xlu0 %1250
    %v1255 = vsel %vm1236, %v1247, 0
    %1257 = vmatpush.msra.mxu0 0.0
    %1258 = vmatpush.msra.mxu0 0.0
    %1259 = vmatpush.msra.mxu0 0.0
    %1260 = vmatpush.msra.mxu0 0.0
    %1261 = vmatpush.msra.mxu0 0.0
    %1262 = vmatpush.msra.mxu0 0.0
    %1263 = vmatpush.msra.mxu0 0.0
    %1264 = vmatpush.msra.mxu0 0.0
    %1265 = vmatpush.msra.mxu0 0.0
    %1266 = vmatpush.msra.mxu0 0.0
    %1267 = vmatpush.msra.mxu0 0.0
    %1268 = vmatpush.msra.mxu0 0.0
    %1269 = vmatpush.msra.mxu0 0.0
    %1270 = vmatpush.msra.mxu0 0.0
    %1271 = vmatpush.msra.mxu0 %v1251
    %1272 = vmatpush.msra.mxu0 %v1249
    %1273 = vmatmul.f32.gmra.mxu0 %v1255
    %v1274 = vpop.f32.mrf.mxu0
    %v1275 = vadd.f32 0.0, %v1274
    %1276 = vdwg.mxu0
    %1277 = vrot.lane.b32.xlu0 %v1143, 120
    %v1278 = vpop.permute.xlu0 %1277
    %1279 = vrot.lane.b32.xlu0 %v1186, 120
    %v1280 = vpop.permute.xlu0 %1279
    %1281 = vrot.lane.b32.xlu0 %v1189, 120
    %v1282 = vpop.permute.xlu0 %1281
    %v1283 = vsel %vm160, %v1278, 0
    %v1285 = vsel %vm160, %v1280, 0
    %v1287 = vsel %vm160, %v1282, 0
    %1289 = vmatpush.xpose.msra.mxu0 0.0
    %1290 = vmatpush.xpose.msra.mxu0 0.0
    %1291 = vmatpush.xpose.msra.mxu0 0.0
    %1292 = vmatpush.xpose.msra.mxu0 0.0
    %1293 = vmatpush.xpose.msra.mxu0 0.0
    %1294 = vmatpush.xpose.msra.mxu0 0.0
    %1295 = vmatpush.xpose.msra.mxu0 0.0
    %1296 = vmatpush.xpose.msra.mxu0 0.0
    %1297 = vmatpush.xpose.msra.mxu0 0.0
    %1298 = vmatpush.xpose.msra.mxu0 0.0
    %1299 = vmatpush.xpose.msra.mxu0 0.0
    %1300 = vmatpush.xpose.msra.mxu0 0.0
    %1301 = vmatpush.xpose.msra.mxu0 0.0
    %1302 = vmatpush.xpose.msra.mxu0 0.0
    %1303 = vmatpush.xpose.msra.mxu0 %v1287
    %1304 = vmatpush.xpose.msra.mxu0 %v1285
    %1305 = vmatmul.f32.gmra.mxu0 %v1283
    %v1306 = vpop.f32.mrf.mxu0
    %v1307 = vadd.f32 0.0, %v1306
    %1308 = vdwg.mxu0
    %v1309 = vmul.f32 %v1307, 0.35355338
    %v1310 = vadd.f32 %v1309, %v1204
    %v1311 = vsel %vm1236, %v1310, -inf
    %1312 = vmax.xlane.f32.xlu0 %v1311
    %v1313 = vpop.xlane.xlu0 %1312
    %v1314 = vsub.f32 %v1310, %v1313
    %v1315 = vmul.f32 %v1314, 1.442695
    %v1316 = vpow.pop %v1315
    %v1317 = vsel %vm1236, %v1316, 0.0
    %1318 = vadd.xlane.f32.xlu0 %v1317
    %v1319 = vpop.xlane.xlu0 %1318
    %v1320 = vrcp.pop %v1319
    %v1321 = vmul.f32 %v1316, %v1320
    %1322 = vrot.lane.b32.xlu0 %v1186, 88
    %v1323 = vpop.permute.xlu0 %1322
    %1324 = vrot.lane.b32.xlu0 %v1189, 88
    %v1325 = vpop.permute.xlu0 %1324
    %v1329 = vsel %vm1236, %v1321, 0
    %1331 = vmatpush.msra.mxu0 0.0
    %1332 = vmatpush.msra.mxu0 0.0
    %1333 = vmatpush.msra.mxu0 0.0
    %1334 = vmatpush.msra.mxu0 0.0
    %1335 = vmatpush.msra.mxu0 0.0
    %1336 = vmatpush.msra.mxu0 0.0
    %1337 = vmatpush.msra.mxu0 0.0
    %1338 = vmatpush.msra.mxu0 0.0
    %1339 = vmatpush.msra.mxu0 0.0
    %1340 = vmatpush.msra.mxu0 0.0
    %1341 = vmatpush.msra.mxu0 0.0
    %1342 = vmatpush.msra.mxu0 0.0
    %1343 = vmatpush.msra.mxu0 0.0
    %1344 = vmatpush.msra.mxu0 0.0
    %1345 = vmatpush.msra.mxu0 %v1325
    %1346 = vmatpush.msra.mxu0 %v1323
    %1347 = vmatmul.f32.gmra.mxu0 %v1329
    %v1348 = vpop.f32.mrf.mxu0
    %v1349 = vadd.f32 0.0, %v1348
    %1350 = vdwg.mxu0
    %v1352 = vsel %vm160, %v1349, 0
    %1354 = vmatpush.msra.mxu0 0.0
    %1355 = vmatpush.msra.mxu0 0.0
    %1356 = vmatpush.msra.mxu0 0.0
    %1357 = vmatpush.msra.mxu0 0.0
    %1358 = vmatpush.msra.mxu0 0.0
    %1359 = vmatpush.msra.mxu0 0.0
    %1360 = vmatpush.msra.mxu0 0.0
    %1361 = vmatpush.msra.mxu0 0.0
    %1362 = vmatpush.msra.mxu0 0.0
    %1363 = vmatpush.msra.mxu0 0.0
    %1364 = vmatpush.msra.mxu0 0.0
    %1365 = vmatpush.msra.mxu0 0.0
    %1366 = vmatpush.msra.mxu0 0.0
    %1367 = vmatpush.msra.mxu0 0.0
    %1368 = vmatpush.msra.mxu0 0.0
    %1369 = vmatpush.msra.mxu0 %v1198
    %1370 = vmatmul.f32.gmra.mxu0 %v1352
    %v1371 = vpop.f32.mrf.mxu0
    %v1372 = vadd.f32 0.0, %v1371
    %1373 = vdwg.mxu0
    %v1375 = vsel %vm160, %v1275, 0
    %1377 = vmatpush.msra.mxu0 0.0
    %1378 = vmatpush.msra.mxu0 0.0
    %1379 = vmatpush.msra.mxu0 0.0
    %1380 = vmatpush.msra.mxu0 0.0
    %1381 = vmatpush.msra.mxu0 0.0
    %1382 = vmatpush.msra.mxu0 0.0
    %1383 = vmatpush.msra.mxu0 0.0
    %1384 = vmatpush.msra.mxu0 0.0
    %1385 = vmatpush.msra.mxu0 0.0
    %1386 = vmatpush.msra.mxu0 0.0
    %1387 = vmatpush.msra.mxu0 0.0
    %1388 = vmatpush.msra.mxu0 0.0
    %1389 = vmatpush.msra.mxu0 0.0
    %1390 = vmatpush.msra.mxu0 0.0
    %1391 = vmatpush.msra.mxu0 0.0
    %1392 = vmatpush.msra.mxu0 %v1197
    %1393 = vmatmul.f32.gmra.mxu0 %v1375
    %v1394 = vpop.f32.mrf.mxu0
    %v1395 = vadd.f32 %v1372, %v1394
    %1396 = vdwg.mxu0
    %1397 = vrot.lane.b32.xlu0 %v1143, 112
    %v1398 = vpop.permute.xlu0 %1397
    %1399 = vrot.lane.b32.xlu0 %v1186, 112
    %v1400 = vpop.permute.xlu0 %1399
    %1401 = vrot.lane.b32.xlu0 %v1189, 112
    %v1402 = vpop.permute.xlu0 %1401
    %v1403 = vsel %vm160, %v1398, 0
    %v1405 = vsel %vm160, %v1400, 0
    %v1407 = vsel %vm160, %v1402, 0
    %1409 = vmatpush.xpose.msra.mxu0 0.0
    %1410 = vmatpush.xpose.msra.mxu0 0.0
    %1411 = vmatpush.xpose.msra.mxu0 0.0
    %1412 = vmatpush.xpose.msra.mxu0 0.0
    %1413 = vmatpush.xpose.msra.mxu0 0.0
    %1414 = vmatpush.xpose.msra.mxu0 0.0
    %1415 = vmatpush.xpose.msra.mxu0 0.0
    %1416 = vmatpush.xpose.msra.mxu0 0.0
    %1417 = vmatpush.xpose.msra.mxu0 0.0
    %1418 = vmatpush.xpose.msra.mxu0 0.0
    %1419 = vmatpush.xpose.msra.mxu0 0.0
    %1420 = vmatpush.xpose.msra.mxu0 0.0
    %1421 = vmatpush.xpose.msra.mxu0 0.0
    %1422 = vmatpush.xpose.msra.mxu0 0.0
    %1423 = vmatpush.xpose.msra.mxu0 %v1407
    %1424 = vmatpush.xpose.msra.mxu0 %v1405
    %1425 = vmatmul.f32.gmra.mxu0 %v1403
    %v1426 = vpop.f32.mrf.mxu0
    %v1427 = vadd.f32 0.0, %v1426
    %1428 = vdwg.mxu0
    %v1429 = vmul.f32 %v1427, 0.35355338
    %v1430 = vadd.f32 %v1429, %v1204
    %v1431 = vsel %vm1236, %v1430, -inf
    %1432 = vmax.xlane.f32.xlu0 %v1431
    %v1433 = vpop.xlane.xlu0 %1432
    %v1434 = vsub.f32 %v1430, %v1433
    %v1435 = vmul.f32 %v1434, 1.442695
    %v1436 = vpow.pop %v1435
    %v1437 = vsel %vm1236, %v1436, 0.0
    %1438 = vadd.xlane.f32.xlu0 %v1437
    %v1439 = vpop.xlane.xlu0 %1438
    %v1440 = vrcp.pop %v1439
    %v1441 = vmul.f32 %v1436, %v1440
    %1442 = vrot.lane.b32.xlu0 %v1186, 80
    %v1443 = vpop.permute.xlu0 %1442
    %1444 = vrot.lane.b32.xlu0 %v1189, 80
    %v1445 = vpop.permute.xlu0 %1444
    %v1449 = vsel %vm1236, %v1441, 0
    %1451 = vmatpush.msra.mxu0 0.0
    %1452 = vmatpush.msra.mxu0 0.0
    %1453 = vmatpush.msra.mxu0 0.0
    %1454 = vmatpush.msra.mxu0 0.0
    %1455 = vmatpush.msra.mxu0 0.0
    %1456 = vmatpush.msra.mxu0 0.0
    %1457 = vmatpush.msra.mxu0 0.0
    %1458 = vmatpush.msra.mxu0 0.0
    %1459 = vmatpush.msra.mxu0 0.0
    %1460 = vmatpush.msra.mxu0 0.0
    %1461 = vmatpush.msra.mxu0 0.0
    %1462 = vmatpush.msra.mxu0 0.0
    %1463 = vmatpush.msra.mxu0 0.0
    %1464 = vmatpush.msra.mxu0 0.0
    %1465 = vmatpush.msra.mxu0 %v1445
    %1466 = vmatpush.msra.mxu0 %v1443
    %1467 = vmatmul.f32.gmra.mxu0 %v1449
    %v1468 = vpop.f32.mrf.mxu0
    %v1469 = vadd.f32 0.0, %v1468
    %1470 = vdwg.mxu0
    %v1472 = vsel %vm160, %v1469, 0
    %1474 = vmatpush.msra.mxu0 0.0
    %1475 = vmatpush.msra.mxu0 0.0
    %1476 = vmatpush.msra.mxu0 0.0
    %1477 = vmatpush.msra.mxu0 0.0
    %1478 = vmatpush.msra.mxu0 0.0
    %1479 = vmatpush.msra.mxu0 0.0
    %1480 = vmatpush.msra.mxu0 0.0
    %1481 = vmatpush.msra.mxu0 0.0
    %1482 = vmatpush.msra.mxu0 0.0
    %1483 = vmatpush.msra.mxu0 0.0
    %1484 = vmatpush.msra.mxu0 0.0
    %1485 = vmatpush.msra.mxu0 0.0
    %1486 = vmatpush.msra.mxu0 0.0
    %1487 = vmatpush.msra.mxu0 0.0
    %1488 = vmatpush.msra.mxu0 0.0
    %1489 = vmatpush.msra.mxu0 %v1199
    %1490 = vmatmul.f32.gmra.mxu0 %v1472
    %v1491 = vpop.f32.mrf.mxu0
    %v1492 = vadd.f32 0.0, %v1491
    %1493 = vdwg.mxu0
    %v1494 = vadd.f32 %v1395, %v1492
    %1495 = vrot.lane.b32.xlu0 %v1143, 104
    %v1496 = vpop.permute.xlu0 %1495
    %1497 = vrot.lane.b32.xlu0 %v1186, 104
    %v1498 = vpop.permute.xlu0 %1497
    %1499 = vrot.lane.b32.xlu0 %v1189, 104
    %v1500 = vpop.permute.xlu0 %1499
    %v1501 = vsel %vm160, %v1496, 0
    %v1503 = vsel %vm160, %v1498, 0
    %v1505 = vsel %vm160, %v1500, 0
    %1507 = vmatpush.xpose.msra.mxu0 0.0
    %1508 = vmatpush.xpose.msra.mxu0 0.0
    %1509 = vmatpush.xpose.msra.mxu0 0.0
    %1510 = vmatpush.xpose.msra.mxu0 0.0
    %1511 = vmatpush.xpose.msra.mxu0 0.0
    %1512 = vmatpush.xpose.msra.mxu0 0.0
    %1513 = vmatpush.xpose.msra.mxu0 0.0
    %1514 = vmatpush.xpose.msra.mxu0 0.0
    %1515 = vmatpush.xpose.msra.mxu0 0.0
    %1516 = vmatpush.xpose.msra.mxu0 0.0
    %1517 = vmatpush.xpose.msra.mxu0 0.0
    %1518 = vmatpush.xpose.msra.mxu0 0.0
    %1519 = vmatpush.xpose.msra.mxu0 0.0
    %1520 = vmatpush.xpose.msra.mxu0 0.0
    %1521 = vmatpush.xpose.msra.mxu0 %v1505
    %1522 = vmatpush.xpose.msra.mxu0 %v1503
    %1523 = vmatmul.f32.gmra.mxu0 %v1501
    %v1524 = vpop.f32.mrf.mxu0
    %v1525 = vadd.f32 0.0, %v1524
    %1526 = vdwg.mxu0
    %v1527 = vmul.f32 %v1525, 0.35355338
    %v1528 = vadd.f32 %v1527, %v1204
    %v1529 = vsel %vm1236, %v1528, -inf
    %1530 = vmax.xlane.f32.xlu0 %v1529
    %v1531 = vpop.xlane.xlu0 %1530
    %v1532 = vsub.f32 %v1528, %v1531
    %v1533 = vmul.f32 %v1532, 1.442695
    %v1534 = vpow.pop %v1533
    %v1535 = vsel %vm1236, %v1534, 0.0
    %1536 = vadd.xlane.f32.xlu0 %v1535
    %v1537 = vpop.xlane.xlu0 %1536
    %v1538 = vrcp.pop %v1537
    %v1539 = vmul.f32 %v1534, %v1538
    %1540 = vrot.lane.b32.xlu0 %v1186, 72
    %v1541 = vpop.permute.xlu0 %1540
    %1542 = vrot.lane.b32.xlu0 %v1189, 72
    %v1543 = vpop.permute.xlu0 %1542
    %v1547 = vsel %vm1236, %v1539, 0
    %1549 = vmatpush.msra.mxu0 0.0
    %1550 = vmatpush.msra.mxu0 0.0
    %1551 = vmatpush.msra.mxu0 0.0
    %1552 = vmatpush.msra.mxu0 0.0
    %1553 = vmatpush.msra.mxu0 0.0
    %1554 = vmatpush.msra.mxu0 0.0
    %1555 = vmatpush.msra.mxu0 0.0
    %1556 = vmatpush.msra.mxu0 0.0
    %1557 = vmatpush.msra.mxu0 0.0
    %1558 = vmatpush.msra.mxu0 0.0
    %1559 = vmatpush.msra.mxu0 0.0
    %1560 = vmatpush.msra.mxu0 0.0
    %1561 = vmatpush.msra.mxu0 0.0
    %1562 = vmatpush.msra.mxu0 0.0
    %1563 = vmatpush.msra.mxu0 %v1543
    %1564 = vmatpush.msra.mxu0 %v1541
    %1565 = vmatmul.f32.gmra.mxu0 %v1547
    %v1566 = vpop.f32.mrf.mxu0
    %v1567 = vadd.f32 0.0, %v1566
    %1568 = vdwg.mxu0
    %v1570 = vsel %vm160, %v1567, 0
    %1572 = vmatpush.msra.mxu0 0.0
    %1573 = vmatpush.msra.mxu0 0.0
    %1574 = vmatpush.msra.mxu0 0.0
    %1575 = vmatpush.msra.mxu0 0.0
    %1576 = vmatpush.msra.mxu0 0.0
    %1577 = vmatpush.msra.mxu0 0.0
    %1578 = vmatpush.msra.mxu0 0.0
    %1579 = vmatpush.msra.mxu0 0.0
    %1580 = vmatpush.msra.mxu0 0.0
    %1581 = vmatpush.msra.mxu0 0.0
    %1582 = vmatpush.msra.mxu0 0.0
    %1583 = vmatpush.msra.mxu0 0.0
    %1584 = vmatpush.msra.mxu0 0.0
    %1585 = vmatpush.msra.mxu0 0.0
    %1586 = vmatpush.msra.mxu0 0.0
    %1587 = vmatpush.msra.mxu0 %v1200
    %1588 = vmatmul.f32.gmra.mxu0 %v1570
    %v1589 = vpop.f32.mrf.mxu0
    %v1590 = vadd.f32 0.0, %v1589
    %1591 = vdwg.mxu0
    %v1592 = vadd.f32 %v1494, %v1590
    %1593 = vst.msk [vmem:[#allocation2] sm:$0xff] %vm214, %v1592
    %s1594 = sld [smem:[#allocation5 + $0x1]]
    %v1595 = vstv %s1594
    %vm1596 = vcmp.ge.s32.totalorder %v302, %v1595
    %v1597 = vsel %vm1596, -1e+09, 0.0
    %v1599 = vsel %vm160, %v1146, 0
    %v1602 = vsel %vm160, %v1192, 0
    %v1605 = vsel %vm160, %v1195, 0
    %1607 = vmatpush.xpose.msra.mxu0 0.0
    %1608 = vmatpush.xpose.msra.mxu0 0.0
    %1609 = vmatpush.xpose.msra.mxu0 0.0
    %1610 = vmatpush.xpose.msra.mxu0 0.0
    %1611 = vmatpush.xpose.msra.mxu0 0.0
    %1612 = vmatpush.xpose.msra.mxu0 0.0
    %1613 = vmatpush.xpose.msra.mxu0 0.0
    %1614 = vmatpush.xpose.msra.mxu0 0.0
    %1615 = vmatpush.xpose.msra.mxu0 0.0
    %1616 = vmatpush.xpose.msra.mxu0 0.0
    %1617 = vmatpush.xpose.msra.mxu0 0.0
    %1618 = vmatpush.xpose.msra.mxu0 0.0
    %1619 = vmatpush.xpose.msra.mxu0 0.0
    %1620 = vmatpush.xpose.msra.mxu0 0.0
    %1621 = vmatpush.xpose.msra.mxu0 %v1605
    %1622 = vmatpush.xpose.msra.mxu0 %v1602
    %1623 = vmatmul.f32.gmra.mxu0 %v1599
    %v1624 = vpop.f32.mrf.mxu0
    %v1625 = vadd.f32 0.0, %v1624
    %1626 = vdwg.mxu0
    %v1627 = vmul.f32 %v1625, 0.35355338
    %v1628 = vadd.f32 %v1627, %v1597
    %v1629 = vsel %vm1236, %v1628, -inf
    %1630 = vmax.xlane.f32.xlu0 %v1629
    %v1631 = vpop.xlane.xlu0 %1630
    %v1632 = vsub.f32 %v1628, %v1631
    %v1633 = vmul.f32 %v1632, 1.442695
    %v1634 = vpow.pop %v1633
    %v1635 = vsel %vm1236, %v1634, 0.0
    %1636 = vadd.xlane.f32.xlu0 %v1635
    %v1637 = vpop.xlane.xlu0 %1636
    %v1638 = vrcp.pop %v1637
    %v1639 = vmul.f32 %v1634, %v1638
    %1640 = vrot.lane.b32.xlu0 %v1192, 96
    %v1641 = vpop.permute.xlu0 %1640
    %1642 = vrot.lane.b32.xlu0 %v1195, 96
    %v1643 = vpop.permute.xlu0 %1642
    %v1647 = vsel %vm1236, %v1639, 0
    %1649 = vmatpush.msra.mxu0 0.0
    %1650 = vmatpush.msra.mxu0 0.0
    %1651 = vmatpush.msra.mxu0 0.0
    %1652 = vmatpush.msra.mxu0 0.0
    %1653 = vmatpush.msra.mxu0 0.0
    %1654 = vmatpush.msra.mxu0 0.0
    %1655 = vmatpush.msra.mxu0 0.0
    %1656 = vmatpush.msra.mxu0 0.0
    %1657 = vmatpush.msra.mxu0 0.0
    %1658 = vmatpush.msra.mxu0 0.0
    %1659 = vmatpush.msra.mxu0 0.0
    %1660 = vmatpush.msra.mxu0 0.0
    %1661 = vmatpush.msra.mxu0 0.0
    %1662 = vmatpush.msra.mxu0 0.0
    %1663 = vmatpush.msra.mxu0 %v1643
    %1664 = vmatpush.msra.mxu0 %v1641
    %1665 = vmatmul.f32.gmra.mxu0 %v1647
    %v1666 = vpop.f32.mrf.mxu0
    %v1667 = vadd.f32 0.0, %v1666
    %1668 = vdwg.mxu0
    %1669 = vrot.lane.b32.xlu0 %v1146, 120
    %v1670 = vpop.permute.xlu0 %1669
    %1671 = vrot.lane.b32.xlu0 %v1192, 120
    %v1672 = vpop.permute.xlu0 %1671
    %1673 = vrot.lane.b32.xlu0 %v1195, 120
    %v1674 = vpop.permute.xlu0 %1673
    %v1675 = vsel %vm160, %v1670, 0
    %v1677 = vsel %vm160, %v1672, 0
    %v1679 = vsel %vm160, %v1674, 0
    %1681 = vmatpush.xpose.msra.mxu0 0.0
    %1682 = vmatpush.xpose.msra.mxu0 0.0
    %1683 = vmatpush.xpose.msra.mxu0 0.0
    %1684 = vmatpush.xpose.msra.mxu0 0.0
    %1685 = vmatpush.xpose.msra.mxu0 0.0
    %1686 = vmatpush.xpose.msra.mxu0 0.0
    %1687 = vmatpush.xpose.msra.mxu0 0.0
    %1688 = vmatpush.xpose.msra.mxu0 0.0
    %1689 = vmatpush.xpose.msra.mxu0 0.0
    %1690 = vmatpush.xpose.msra.mxu0 0.0
    %1691 = vmatpush.xpose.msra.mxu0 0.0
    %1692 = vmatpush.xpose.msra.mxu0 0.0
    %1693 = vmatpush.xpose.msra.mxu0 0.0
    %1694 = vmatpush.xpose.msra.mxu0 0.0
    %1695 = vmatpush.xpose.msra.mxu0 %v1679
    %1696 = vmatpush.xpose.msra.mxu0 %v1677
    %1697 = vmatmul.f32.gmra.mxu0 %v1675
    %v1698 = vpop.f32.mrf.mxu0
    %v1699 = vadd.f32 0.0, %v1698
    %1700 = vdwg.mxu0
    %v1701 = vmul.f32 %v1699, 0.35355338
    %v1702 = vadd.f32 %v1701, %v1597
    %v1703 = vsel %vm1236, %v1702, -inf
    %1704 = vmax.xlane.f32.xlu0 %v1703
    %v1705 = vpop.xlane.xlu0 %1704
    %v1706 = vsub.f32 %v1702, %v1705
    %v1707 = vmul.f32 %v1706, 1.442695
    %v1708 = vpow.pop %v1707
    %v1709 = vsel %vm1236, %v1708, 0.0
    %1710 = vadd.xlane.f32.xlu0 %v1709
    %v1711 = vpop.xlane.xlu0 %1710
    %v1712 = vrcp.pop %v1711
    %v1713 = vmul.f32 %v1708, %v1712
    %1714 = vrot.lane.b32.xlu0 %v1192, 88
    %v1715 = vpop.permute.xlu0 %1714
    %1716 = vrot.lane.b32.xlu0 %v1195, 88
    %v1717 = vpop.permute.xlu0 %1716
    %v1721 = vsel %vm1236, %v1713, 0
    %1723 = vmatpush.msra.mxu0 0.0
    %1724 = vmatpush.msra.mxu0 0.0
    %1725 = vmatpush.msra.mxu0 0.0
    %1726 = vmatpush.msra.mxu0 0.0
    %1727 = vmatpush.msra.mxu0 0.0
    %1728 = vmatpush.msra.mxu0 0.0
    %1729 = vmatpush.msra.mxu0 0.0
    %1730 = vmatpush.msra.mxu0 0.0
    %1731 = vmatpush.msra.mxu0 0.0
    %1732 = vmatpush.msra.mxu0 0.0
    %1733 = vmatpush.msra.mxu0 0.0
    %1734 = vmatpush.msra.mxu0 0.0
    %1735 = vmatpush.msra.mxu0 0.0
    %1736 = vmatpush.msra.mxu0 0.0
    %1737 = vmatpush.msra.mxu0 %v1717
    %1738 = vmatpush.msra.mxu0 %v1715
    %1739 = vmatmul.f32.gmra.mxu0 %v1721
    %v1740 = vpop.f32.mrf.mxu0
    %v1741 = vadd.f32 0.0, %v1740
    %1742 = vdwg.mxu0
    %v1744 = vsel %vm160, %v1741, 0
    %1746 = vmatpush.msra.mxu0 0.0
    %1747 = vmatpush.msra.mxu0 0.0
    %1748 = vmatpush.msra.mxu0 0.0
    %1749 = vmatpush.msra.mxu0 0.0
    %1750 = vmatpush.msra.mxu0 0.0
    %1751 = vmatpush.msra.mxu0 0.0
    %1752 = vmatpush.msra.mxu0 0.0
    %1753 = vmatpush.msra.mxu0 0.0
    %1754 = vmatpush.msra.mxu0 0.0
    %1755 = vmatpush.msra.mxu0 0.0
    %1756 = vmatpush.msra.mxu0 0.0
    %1757 = vmatpush.msra.mxu0 0.0
    %1758 = vmatpush.msra.mxu0 0.0
    %1759 = vmatpush.msra.mxu0 0.0
    %1760 = vmatpush.msra.mxu0 0.0
    %1761 = vmatpush.msra.mxu0 %v1198
    %1762 = vmatmul.f32.gmra.mxu0 %v1744
    %v1763 = vpop.f32.mrf.mxu0
    %v1764 = vadd.f32 0.0, %v1763
    %1765 = vdwg.mxu0
    %v1767 = vsel %vm160, %v1667, 0
    %1769 = vmatpush.msra.mxu0 0.0
    %1770 = vmatpush.msra.mxu0 0.0
    %1771 = vmatpush.msra.mxu0 0.0
    %1772 = vmatpush.msra.mxu0 0.0
    %1773 = vmatpush.msra.mxu0 0.0
    %1774 = vmatpush.msra.mxu0 0.0
    %1775 = vmatpush.msra.mxu0 0.0
    %1776 = vmatpush.msra.mxu0 0.0
    %1777 = vmatpush.msra.mxu0 0.0
    %1778 = vmatpush.msra.mxu0 0.0
    %1779 = vmatpush.msra.mxu0 0.0
    %1780 = vmatpush.msra.mxu0 0.0
    %1781 = vmatpush.msra.mxu0 0.0
    %1782 = vmatpush.msra.mxu0 0.0
    %1783 = vmatpush.msra.mxu0 0.0
    %1784 = vmatpush.msra.mxu0 %v1197
    %1785 = vmatmul.f32.gmra.mxu0 %v1767
    %v1786 = vpop.f32.mrf.mxu0
    %v1787 = vadd.f32 %v1764, %v1786
    %1788 = vdwg.mxu0
    %1789 = vrot.lane.b32.xlu0 %v1146, 112
    %v1790 = vpop.permute.xlu0 %1789
    %1791 = vrot.lane.b32.xlu0 %v1192, 112
    %v1792 = vpop.permute.xlu0 %1791
    %1793 = vrot.lane.b32.xlu0 %v1195, 112
    %v1794 = vpop.permute.xlu0 %1793
    %v1795 = vsel %vm160, %v1790, 0
    %v1797 = vsel %vm160, %v1792, 0
    %v1799 = vsel %vm160, %v1794, 0
    %1801 = vmatpush.xpose.msra.mxu0 0.0
    %1802 = vmatpush.xpose.msra.mxu0 0.0
    %1803 = vmatpush.xpose.msra.mxu0 0.0
    %1804 = vmatpush.xpose.msra.mxu0 0.0
    %1805 = vmatpush.xpose.msra.mxu0 0.0
    %1806 = vmatpush.xpose.msra.mxu0 0.0
    %1807 = vmatpush.xpose.msra.mxu0 0.0
    %1808 = vmatpush.xpose.msra.mxu0 0.0
    %1809 = vmatpush.xpose.msra.mxu0 0.0
    %1810 = vmatpush.xpose.msra.mxu0 0.0
    %1811 = vmatpush.xpose.msra.mxu0 0.0
    %1812 = vmatpush.xpose.msra.mxu0 0.0
    %1813 = vmatpush.xpose.msra.mxu0 0.0
    %1814 = vmatpush.xpose.msra.mxu0 0.0
    %1815 = vmatpush.xpose.msra.mxu0 %v1799
    %1816 = vmatpush.xpose.msra.mxu0 %v1797
    %1817 = vmatmul.f32.gmra.mxu0 %v1795
    %v1818 = vpop.f32.mrf.mxu0
    %v1819 = vadd.f32 0.0, %v1818
    %1820 = vdwg.mxu0
    %v1821 = vmul.f32 %v1819, 0.35355338
    %v1822 = vadd.f32 %v1821, %v1597
    %v1823 = vsel %vm1236, %v1822, -inf
    %1824 = vmax.xlane.f32.xlu0 %v1823
    %v1825 = vpop.xlane.xlu0 %1824
    %v1826 = vsub.f32 %v1822, %v1825
    %v1827 = vmul.f32 %v1826, 1.442695
    %v1828 = vpow.pop %v1827
    %v1829 = vsel %vm1236, %v1828, 0.0
    %1830 = vadd.xlane.f32.xlu0 %v1829
    %v1831 = vpop.xlane.xlu0 %1830
    %v1832 = vrcp.pop %v1831
    %v1833 = vmul.f32 %v1828, %v1832
    %1834 = vrot.lane.b32.xlu0 %v1192, 80
    %v1835 = vpop.permute.xlu0 %1834
    %1836 = vrot.lane.b32.xlu0 %v1195, 80
    %v1837 = vpop.permute.xlu0 %1836
    %v1841 = vsel %vm1236, %v1833, 0
    %1843 = vmatpush.msra.mxu0 0.0
    %1844 = vmatpush.msra.mxu0 0.0
    %1845 = vmatpush.msra.mxu0 0.0
    %1846 = vmatpush.msra.mxu0 0.0
    %1847 = vmatpush.msra.mxu0 0.0
    %1848 = vmatpush.msra.mxu0 0.0
    %1849 = vmatpush.msra.mxu0 0.0
    %1850 = vmatpush.msra.mxu0 0.0
    %1851 = vmatpush.msra.mxu0 0.0
    %1852 = vmatpush.msra.mxu0 0.0
    %1853 = vmatpush.msra.mxu0 0.0
    %1854 = vmatpush.msra.mxu0 0.0
    %1855 = vmatpush.msra.mxu0 0.0
    %1856 = vmatpush.msra.mxu0 0.0
    %1857 = vmatpush.msra.mxu0 %v1837
    %1858 = vmatpush.msra.mxu0 %v1835
    %1859 = vmatmul.f32.gmra.mxu0 %v1841
    %v1860 = vpop.f32.mrf.mxu0
    %v1861 = vadd.f32 0.0, %v1860
    %1862 = vdwg.mxu0
    %v1864 = vsel %vm160, %v1861, 0
    %1866 = vmatpush.msra.mxu0 0.0
    %1867 = vmatpush.msra.mxu0 0.0
    %1868 = vmatpush.msra.mxu0 0.0
    %1869 = vmatpush.msra.mxu0 0.0
    %1870 = vmatpush.msra.mxu0 0.0
    %1871 = vmatpush.msra.mxu0 0.0
    %1872 = vmatpush.msra.mxu0 0.0
    %1873 = vmatpush.msra.mxu0 0.0
    %1874 = vmatpush.msra.mxu0 0.0
    %1875 = vmatpush.msra.mxu0 0.0
    %1876 = vmatpush.msra.mxu0 0.0
    %1877 = vmatpush.msra.mxu0 0.0
    %1878 = vmatpush.msra.mxu0 0.0
    %1879 = vmatpush.msra.mxu0 0.0
    %1880 = vmatpush.msra.mxu0 0.0
    %1881 = vmatpush.msra.mxu0 %v1199
    %1882 = vmatmul.f32.gmra.mxu0 %v1864
    %v1883 = vpop.f32.mrf.mxu0
    %v1884 = vadd.f32 0.0, %v1883
    %1885 = vdwg.mxu0
    %v1886 = vadd.f32 %v1787, %v1884
    %1887 = vrot.lane.b32.xlu0 %v1146, 104
    %v1888 = vpop.permute.xlu0 %1887
    %1889 = vrot.lane.b32.xlu0 %v1192, 104
    %v1890 = vpop.permute.xlu0 %1889
    %1891 = vrot.lane.b32.xlu0 %v1195, 104
    %v1892 = vpop.permute.xlu0 %1891
    %v1893 = vsel %vm160, %v1888, 0
    %v1895 = vsel %vm160, %v1890, 0
    %v1897 = vsel %vm160, %v1892, 0
    %1899 = vmatpush.xpose.msra.mxu0 0.0
    %1900 = vmatpush.xpose.msra.mxu0 0.0
    %1901 = vmatpush.xpose.msra.mxu0 0.0
    %1902 = vmatpush.xpose.msra.mxu0 0.0
    %1903 = vmatpush.xpose.msra.mxu0 0.0
    %1904 = vmatpush.xpose.msra.mxu0 0.0
    %1905 = vmatpush.xpose.msra.mxu0 0.0
    %1906 = vmatpush.xpose.msra.mxu0 0.0
    %1907 = vmatpush.xpose.msra.mxu0 0.0
    %1908 = vmatpush.xpose.msra.mxu0 0.0
    %1909 = vmatpush.xpose.msra.mxu0 0.0
    %1910 = vmatpush.xpose.msra.mxu0 0.0
    %1911 = vmatpush.xpose.msra.mxu0 0.0
    %1912 = vmatpush.xpose.msra.mxu0 0.0
    %1913 = vmatpush.xpose.msra.mxu0 %v1897
    %1914 = vmatpush.xpose.msra.mxu0 %v1895
    %1915 = vmatmul.f32.gmra.mxu0 %v1893
    %v1916 = vpop.f32.mrf.mxu0
    %v1917 = vadd.f32 0.0, %v1916
    %1918 = vdwg.mxu0
    %v1919 = vmul.f32 %v1917, 0.35355338
    %v1920 = vadd.f32 %v1919, %v1597
    %v1921 = vsel %vm1236, %v1920, -inf
    %1922 = vmax.xlane.f32.xlu0 %v1921
    %v1923 = vpop.xlane.xlu0 %1922
    %v1924 = vsub.f32 %v1920, %v1923
    %v1925 = vmul.f32 %v1924, 1.442695
    %v1926 = vpow.pop %v1925
    %v1927 = vsel %vm1236, %v1926, 0.0
    %1928 = vadd.xlane.f32.xlu0 %v1927
    %v1929 = vpop.xlane.xlu0 %1928
    %v1930 = vrcp.pop %v1929
    %v1931 = vmul.f32 %v1926, %v1930
    %1932 = vrot.lane.b32.xlu0 %v1192, 72
    %v1933 = vpop.permute.xlu0 %1932
    %1934 = vrot.lane.b32.xlu0 %v1195, 72
    %v1935 = vpop.permute.xlu0 %1934
    %v1939 = vsel %vm1236, %v1931, 0
    %1941 = vmatpush.msra.mxu0 0.0
    %1942 = vmatpush.msra.mxu0 0.0
    %1943 = vmatpush.msra.mxu0 0.0
    %1944 = vmatpush.msra.mxu0 0.0
    %1945 = vmatpush.msra.mxu0 0.0
    %1946 = vmatpush.msra.mxu0 0.0
    %1947 = vmatpush.msra.mxu0 0.0
    %1948 = vmatpush.msra.mxu0 0.0
    %1949 = vmatpush.msra.mxu0 0.0
    %1950 = vmatpush.msra.mxu0 0.0
    %1951 = vmatpush.msra.mxu0 0.0
    %1952 = vmatpush.msra.mxu0 0.0
    %1953 = vmatpush.msra.mxu0 0.0
    %1954 = vmatpush.msra.mxu0 0.0
    %1955 = vmatpush.msra.mxu0 %v1935
    %1956 = vmatpush.msra.mxu0 %v1933
    %1957 = vmatmul.f32.gmra.mxu0 %v1939
    %v1958 = vpop.f32.mrf.mxu0
    %v1959 = vadd.f32 0.0, %v1958
    %1960 = vdwg.mxu0
    %v1962 = vsel %vm160, %v1959, 0
    %1964 = vmatpush.msra.mxu0 0.0
    %1965 = vmatpush.msra.mxu0 0.0
    %1966 = vmatpush.msra.mxu0 0.0
    %1967 = vmatpush.msra.mxu0 0.0
    %1968 = vmatpush.msra.mxu0 0.0
    %1969 = vmatpush.msra.mxu0 0.0
    %1970 = vmatpush.msra.mxu0 0.0
    %1971 = vmatpush.msra.mxu0 0.0
    %1972 = vmatpush.msra.mxu0 0.0
    %1973 = vmatpush.msra.mxu0 0.0
    %1974 = vmatpush.msra.mxu0 0.0
    %1975 = vmatpush.msra.mxu0 0.0
    %1976 = vmatpush.msra.mxu0 0.0
    %1977 = vmatpush.msra.mxu0 0.0
    %1978 = vmatpush.msra.mxu0 0.0
    %1979 = vmatpush.msra.mxu0 %v1200
    %1980 = vmatmul.f32.gmra.mxu0 %v1962
    %v1981 = vpop.f32.mrf.mxu0
    %v1982 = vadd.f32 0.0, %v1981
    %1983 = vdwg.mxu0
    %v1984 = vadd.f32 %v1886, %v1982
    %1985 = vst.msk [vmem:[#allocation2 + $0x8] sm:$0xff] %vm214, %v1984
    %v1986 = vld [vmem:[#allocation2] sm:$0xff]
    %v1987 = vld [vmem:[#allocation2 + $0x8] sm:$0xff]
    %v1988 = vadd.f32 %v1109, %v1986
    %v1989 = vadd.f32 %v1110, %v1987
    %v1990 = vld [vmem:[%s39] sm:$0x1]
    %v1992 = vperm.slane %v1990, 0
    %v1994 = vadd.f32 %v1988, %v1992
    %v1995 = vadd.f32 %v1989, %v1992
    %v1996 = vsel %vm214, %v1994, 0.0
    %1997 = vadd.xlane.f32.xlu0 %v1996
    %v1998 = vpop.xlane.xlu0 %1997
    %v1999 = vsel %vm214, %v1995, 0.0
    %2000 = vadd.xlane.f32.xlu0 %v1999
    %v2001 = vpop.xlane.xlu0 %2000
    %v2002 = vmul.f32 %v1998, %v1060
    %v2003 = vmul.f32 %v2001, %v1060
    %v2004 = vsub.f32 %v1994, %v2002
    %v2005 = vsub.f32 %v1995, %v2003
    %v2006 = vmul.f32 %v2004, %v2004
    %v2007 = vmul.f32 %v2005, %v2005
    %v2008 = vsel %vm214, %v2006, 0.0
    %2009 = vadd.xlane.f32.xlu0 %v2008
    %v2010 = vpop.xlane.xlu0 %2009
    %v2011 = vsel %vm214, %v2007, 0.0
    %2012 = vadd.xlane.f32.xlu0 %v2011
    %v2013 = vpop.xlane.xlu0 %2012
    %v2014 = vmul.f32 %v2010, %v1060
    %v2015 = vmul.f32 %v2013, %v1060
    %v2016 = vadd.f32 %v2014, 1e-05
    %v2017 = vadd.f32 %v2015, 1e-05
    %v2018 = vrsqrt.pop %v2016
    %v2019 = vmul.f32 %v2018, %v2016
    %v2020 = vmul.f32 %v2019, %v2018
    %v2021 = vmul.f32 0.5, %v2020
    %v2022 = vsub.f32 1.5, %v2021
    %v2023 = vmul.f32 %v2018, %v2022
    %vm2024 = vweird.f32 %v2016
    %vm2025 = vweird.f32 %v2018
    %vm2026 = vmor %vm2024, %vm2025
    %v2027 = vsel %vm2026, %v2018, %v2023
    %v2028 = vrsqrt.pop %v2017
    %v2029 = vmul.f32 %v2028, %v2017
    %v2030 = vmul.f32 %v2029, %v2028
    %v2031 = vmul.f32 0.5, %v2030
    %v2032 = vsub.f32 1.5, %v2031
    %v2033 = vmul.f32 %v2028, %v2032
    %vm2034 = vweird.f32 %v2017
    %vm2035 = vweird.f32 %v2028
    %vm2036 = vmor %vm2034, %vm2035
    %v2037 = vsel %vm2036, %v2028, %v2033
    %v2038 = vmul.f32 %v2004, %v2027
    %v2039 = vmul.f32 %v2005, %v2037
    %v2040 = vld [vmem:[%s41] sm:$0x1]
    %v2042 = vperm.slane %v2040, 0
    %v2044 = vmul.f32 %v2038, %v2042
    %v2045 = vmul.f32 %v2039, %v2042
    %v2046 = vld [vmem:[%s43] sm:$0x1]
    %v2048 = vperm.slane %v2046, 0
    %v2050 = vadd.f32 %v2044, %v2048
    %v2051 = vadd.f32 %v2045, %v2048
    %v2052 = vld [vmem:[%s45] sm:$0xff]
    %v2053 = vld [vmem:[%s45 + $0x8] sm:$0xff]
    %v2054 = vld [vmem:[%s45 + $0x10] sm:$0xff]
    %v2055 = vld [vmem:[%s45 + $0x18] sm:$0xff]
    %v2056 = vld [vmem:[%s47] sm:$0x1]
    %v2058 = vperm.slane %v2056, 0
    %v2061 = vsel %vm214, %v2050, 0
    %v2064 = vsel %vm214, %v2051, 0
    %2066 = vmatpush.msra.mxu0 0.0
    %2067 = vmatpush.msra.mxu0 0.0
    %2068 = vmatpush.msra.mxu0 0.0
    %2069 = vmatpush.msra.mxu0 0.0
    %2070 = vmatpush.msra.mxu0 0.0
    %2071 = vmatpush.msra.mxu0 0.0
    %2072 = vmatpush.msra.mxu0 0.0
    %2073 = vmatpush.msra.mxu0 0.0
    %2074 = vmatpush.msra.mxu0 0.0
    %2075 = vmatpush.msra.mxu0 0.0
    %2076 = vmatpush.msra.mxu0 0.0
    %2077 = vmatpush.msra.mxu0 0.0
    %2078 = vmatpush.msra.mxu0 %v2055
    %2079 = vmatpush.msra.mxu0 %v2054
    %2080 = vmatpush.msra.mxu0 %v2053
    %2081 = vmatpush.msra.mxu0 %v2052
    %2082 = vmatmul.f32.gmra.mxu0 %v2061
    %v2083 = vpop.f32.mrf.mxu0
    %v2084 = vadd.f32 %v2058, %v2083
    %2085 = vmatmul.f32.gmra.mxu0 %v2064
    %v2086 = vpop.f32.mrf.mxu0
    %v2087 = vadd.f32 %v2058, %v2086
    %2088 = vdwg.mxu0
    %v2089 = vmax.f32 %v2084, 0.0
    %v2090 = vmax.f32 %v2087, 0.0
    %v2091 = vld [vmem:[%s49] sm:$0xff]
    %v2092 = vld [vmem:[%s49 + $0x8] sm:$0xff]
    %v2093 = vld [vmem:[%s49 + $0x10] sm:$0xff]
    %v2094 = vld [vmem:[%s49 + $0x18] sm:$0xff]
    %v2095 = vld [vmem:[%s49 + $0x20] sm:$0xff]
    %v2096 = vld [vmem:[%s49 + $0x28] sm:$0xff]
    %v2097 = vld [vmem:[%s49 + $0x30] sm:$0xff]
    %v2098 = vld [vmem:[%s49 + $0x38] sm:$0xff]
    %vm2099 = vcmask 523264
    %v2101 = vsel %vm2099, %v2089, 0
    %v2104 = vsel %vm2099, %v2090, 0
    %2106 = vmatpush.msra.mxu0 0.0
    %2107 = vmatpush.msra.mxu0 0.0
    %2108 = vmatpush.msra.mxu0 0.0
    %2109 = vmatpush.msra.mxu0 0.0
    %2110 = vmatpush.msra.mxu0 0.0
    %2111 = vmatpush.msra.mxu0 0.0
    %2112 = vmatpush.msra.mxu0 0.0
    %2113 = vmatpush.msra.mxu0 0.0
    %2114 = vmatpush.msra.mxu0 %v2098
    %2115 = vmatpush.msra.mxu0 %v2097
    %2116 = vmatpush.msra.mxu0 %v2096
    %2117 = vmatpush.msra.mxu0 %v2095
    %2118 = vmatpush.msra.mxu0 %v2094
    %2119 = vmatpush.msra.mxu0 %v2093
    %2120 = vmatpush.msra.mxu0 %v2092
    %2121 = vmatpush.msra.mxu0 %v2091
    %2122 = vmatmul.f32.gmra.mxu0 %v2101
    %v2123 = vpop.f32.mrf.mxu0
    %v2124 = vadd.f32 0.0, %v2123
    %2125 = vmatmul.f32.gmra.mxu0 %v2104
    %v2126 = vpop.f32.mrf.mxu0
    %v2127 = vadd.f32 0.0, %v2126
    %2128 = vdwg.mxu0
    %v2129 = vadd.f32 %v2050, %v2124
    %v2130 = vadd.f32 %v2051, %v2127
    %v2131 = vld [vmem:[%s51] sm:$0x1]
    %v2133 = vperm.slane %v2131, 0
    %v2135 = vadd.f32 %v2129, %v2133
    %v2136 = vadd.f32 %v2130, %v2133
    %v2137 = vsel %vm214, %v2135, 0.0
    %2138 = vadd.xlane.f32.xlu0 %v2137
    %v2139 = vpop.xlane.xlu0 %2138
    %v2140 = vsel %vm214, %v2136, 0.0
    %2141 = vadd.xlane.f32.xlu0 %v2140
    %v2142 = vpop.xlane.xlu0 %2141
    %v2143 = vmul.f32 %v2139, %v1060
    %v2144 = vmul.f32 %v2142, %v1060
    %v2145 = vsub.f32 %v2135, %v2143
    %v2146 = vsub.f32 %v2136, %v2144
    %v2147 = vmul.f32 %v2145, %v2145
    %v2148 = vmul.f32 %v2146, %v2146
    %v2149 = vsel %vm214, %v2147, 0.0
    %2150 = vadd.xlane.f32.xlu0 %v2149
    %v2151 = vpop.xlane.xlu0 %2150
    %v2152 = vsel %vm214, %v2148, 0.0
    %2153 = vadd.xlane.f32.xlu0 %v2152
    %v2154 = vpop.xlane.xlu0 %2153
    %v2155 = vmul.f32 %v2151, %v1060
    %v2156 = vmul.f32 %v2154, %v1060
    %v2157 = vadd.f32 %v2155, 1e-05
    %v2158 = vadd.f32 %v2156, 1e-05
    %v2159 = vrsqrt.pop %v2157
    %v2160 = vmul.f32 %v2159, %v2157
    %v2161 = vmul.f32 %v2160, %v2159
    %v2162 = vmul.f32 0.5, %v2161
    %v2163 = vsub.f32 1.5, %v2162
    %v2164 = vmul.f32 %v2159, %v2163
    %vm2165 = vweird.f32 %v2157
    %vm2166 = vweird.f32 %v2159
    %vm2167 = vmor %vm2165, %vm2166
    %v2168 = vsel %vm2167, %v2159, %v2164
    %v2169 = vrsqrt.pop %v2158
    %v2170 = vmul.f32 %v2169, %v2158
    %v2171 = vmul.f32 %v2170, %v2169
    %v2172 = vmul.f32 0.5, %v2171
    %v2173 = vsub.f32 1.5, %v2172
    %v2174 = vmul.f32 %v2169, %v2173
    %vm2175 = vweird.f32 %v2158
    %vm2176 = vweird.f32 %v2169
    %vm2177 = vmor %vm2175, %vm2176
    %v2178 = vsel %vm2177, %v2169, %v2174
    %v2179 = vmul.f32 %v2145, %v2168
    %v2180 = vmul.f32 %v2146, %v2178
    %v2181 = vld [vmem:[%s53] sm:$0x1]
    %v2183 = vperm.slane %v2181, 0
    %v2185 = vmul.f32 %v2179, %v2183
    %v2186 = vmul.f32 %v2180, %v2183
    %v2187 = vld [vmem:[%s55] sm:$0x1]
    %v2189 = vperm.slane %v2187, 0
    %v2191 = vadd.f32 %v2185, %v2189
    %v2192 = vadd.f32 %v2186, %v2189
    %v2193 = vld [vmem:[%s57] sm:$0xff]
    %v2194 = vld [vmem:[%s57 + $0x8] sm:$0xff]
    %v2195 = vld [vmem:[%s57 + $0x10] sm:$0xff]
    %v2196 = vld [vmem:[%s57 + $0x18] sm:$0xff]
    %v2197 = vld [vmem:[%s59] sm:$0x1]
    %v2199 = vperm.slane %v2197, 0
    %v2202 = vsel %vm214, %v2191, 0
    %v2205 = vsel %vm214, %v2192, 0
    %2207 = vmatpush.msra.mxu0 0.0
    %2208 = vmatpush.msra.mxu0 0.0
    %2209 = vmatpush.msra.mxu0 0.0
    %2210 = vmatpush.msra.mxu0 0.0
    %2211 = vmatpush.msra.mxu0 0.0
    %2212 = vmatpush.msra.mxu0 0.0
    %2213 = vmatpush.msra.mxu0 0.0
    %2214 = vmatpush.msra.mxu0 0.0
    %2215 = vmatpush.msra.mxu0 0.0
    %2216 = vmatpush.msra.mxu0 0.0
    %2217 = vmatpush.msra.mxu0 0.0
    %2218 = vmatpush.msra.mxu0 0.0
    %2219 = vmatpush.msra.mxu0 %v2196
    %2220 = vmatpush.msra.mxu0 %v2195
    %2221 = vmatpush.msra.mxu0 %v2194
    %2222 = vmatpush.msra.mxu0 %v2193
    %2223 = vmatmul.f32.gmra.mxu0 %v2202
    %v2224 = vpop.f32.mrf.mxu0
    %v2225 = vadd.f32 %v2199, %v2224
    %2226 = vmatmul.f32.gmra.mxu0 %v2205
    %v2227 = vpop.f32.mrf.mxu0
    %v2228 = vadd.f32 %v2199, %v2227
    %2229 = vdwg.mxu0
    %2230 = vst [vmem:[%s61] sm:$0xff] %v2225
    %2231 = vst [vmem:[%s61 + $0x8] sm:$0xff] %v2228
    // Predicated region
    $region130: #{hmer_forward.1} parent=1 // pred_check
      _
    $region131: #{hmer_forward.1} parent=1 // pred_check_branch
      %2233 = sbr.rel (0) target = $region133
    $region132: #{hmer_forward.1} parent=1 // pred_region
      _
    $region133: #{hmer_forward.1} parent=1 // pred_fallthru
      _
    // Predicated region
    $region134: #{hmer_forward.1} parent=1 // pred_check
      _
    $region135: #{hmer_forward.1} parent=1 // pred_check_branch
      %2235 = sbr.rel (0) target = $region137
    $region136: #{hmer_forward.1} parent=1 // pred_region
      _
    $region137: #{hmer_forward.1} parent=1 // pred_fallthru
      _
    %2236 = vsyncpa [#allocation4], 1
    %2237 = vsyncpa [#allocation6], 1

</llo_original>
